<compile_context>
chip_gen: v5e
topology: v5e:2x2
jax: 0.10.0
libtpu: 0.0.40
codegen_flags: <defaults>
</compile_context>

<pallas_src>
import functools

import jax
import jax.numpy as jnp
import numpy as np
from jax.experimental import pallas as pl
from jax.experimental.pallas import tpu as pltpu


# -----------------------------------------------------------------------------
# In-kernel helper: one 3x3x3 "same" conv as 9 banded matmuls (one per (kd, kh)).
# -----------------------------------------------------------------------------
def _conv9(src, d_out, h, w_ref, b_ref, relu):
    """src: [d_out+2, h+2, (W+2)*Cin] zero-halo-padded activations (ref or value),
    with W and Cin folded onto the lane axis.
    w_ref: [9, (W+2)*Cin, N] bf16 banded weights (kw taps + channel mixing folded
    into a block-Toeplitz matrix, built in the wrapper); padded output columns (if
    any) carry explicit zero weights/bias so W-halos come out as exact zeros.
    b_ref: [1, N] f32.  Returns [d_out*h, N] f32."""
    m = d_out * h
    acc = None
    for kd in range(3):
        for kh in range(3):
            piece = src[kd:kd + d_out, kh:kh + h, :]          # [d_out, h, lanes]
            lhs = piece.reshape(m, piece.shape[-1]).astype(jnp.bfloat16)
            part = jnp.dot(lhs, w_ref[3 * kd + kh],
                           preferred_element_type=jnp.float32)
            acc = part if acc is None else acc + part
    acc = acc + b_ref[...]
    if relu:
        acc = jnp.maximum(acc, 0.0)
    return acc


# -----------------------------------------------------------------------------
# Fused DecoderLayer kernel: one grid step == one batch element, all in VMEM.
# -----------------------------------------------------------------------------
def _decoder_kernel(xc_ref, wu_ref, bu_ref, w1_ref, b1_ref, w2_ref, b2_ref,
                    o_ref, ypad, zpad, *, D, H, W, C2, Cout):
    D2 = 2 * D
    LIN = (W + 2) * C2
    LOUT = (W + 2) * Cout
    f32 = jnp.float32

    # ---- zero ONLY the halo faces of the intermediate scratch, every step.
    #      (Interiors are fully overwritten below; never gate this on program_id:
    #       under megacore 'parallel' each core owns its own scratch instance.)
    ypad[0:1, :, :] = jnp.zeros((1, H + 2, LIN), f32)
    ypad[D2 + 1:D2 + 2, :, :] = jnp.zeros((1, H + 2, LIN), f32)
    ypad[:, 0:1, :] = jnp.zeros((D2 + 2, 1, LIN), f32)
    ypad[:, H + 1:H + 2, :] = jnp.zeros((D2 + 2, 1, LIN), f32)
    zpad[0:1, :, :] = jnp.zeros((1, H + 2, LOUT), f32)
    zpad[D2 + 1:D2 + 2, :, :] = jnp.zeros((1, H + 2, LOUT), f32)
    zpad[:, 0:1, :] = jnp.zeros((D2 + 2, 1, LOUT), f32)
    zpad[:, H + 1:H + 2, :] = jnp.zeros((D2 + 2, 1, LOUT), f32)
    # (W-halo lanes need no zeroing: the banded weights emit explicit zero columns,
    #  so the interior plane stores below cover the full lane width.)

    # ---- up_sample: ConvTranspose3d(k=(4,3,3), s=(2,1,1), p=(1,1,1)) as a merged
    #      even/odd polyphase conv: ONE matmul per (kd, kh), N = 2*(W+2)*C2. ----
    x_src = xc_ref[0]                                   # [D+2, H+2, LIN] bf16, pre-padded
    y = _conv9(x_src, D, H, wu_ref, bu_ref, relu=False)  # [D*H, 2*LIN] f32
    y_even = y[:, :LIN].reshape(D, H, LIN)               # out depth 2j
    y_odd = y[:, LIN:].reshape(D, H, LIN)                # out depth 2j+1
    # stride-2 depth interleave into the padded f32 scratch (statically unrolled;
    # each store is one whole [H, (W+2)*C2] plane -- no full-volume shuffle).
    for j in range(D):
        ypad[1 + 2 * j, 1:H + 1, :] = y_even[j]
        ypad[2 + 2 * j, 1:H + 1, :] = y_odd[j]

    # ---- DoubleConv (decoder path): (Conv3d k3 p1 + ReLU) x 2, f32 intermediates ----
    z1 = _conv9(ypad, D2, H, w1_ref, b1_ref, relu=True)   # [D2*H, LOUT] f32
    zpad[1:D2 + 1, 1:H + 1, :] = z1.reshape(D2, H, LOUT)

    z2 = _conv9(zpad, D2, H, w2_ref, b2_ref, relu=True)   # [D2*H, W*Cout] f32
    o_ref[0] = z2                                         # lane-dense output store


# -----------------------------------------------------------------------------
# Wrapper: layout plumbing (NCDHW <-> folded lanes, banded weights) + pallas_call
# -----------------------------------------------------------------------------
def decoder_layer_forward(params, x, encoder_features):
    """x, encoder_features: NCDHW float32 (PyTorch convention).  Returns NCDHW f32."""
    B, C, D, H, W = x.shape
    C2 = 2 * C
    D2 = 2 * D
    Cout = params['c1_w'].shape[0]
    LIN = (W + 2) * C2
    LOUT = (W + 2) * Cout

    # concat channels, channels-last, fold (W, C) onto lanes, halo-pad D/H/W once here
    xc = jnp.concatenate([encoder_features, x], axis=1)            # [B, C2, D, H, W]
    xn = jnp.transpose(xc, (0, 2, 3, 4, 1))                        # [B, D, H, W, C2]
    xn = jnp.pad(xn, ((0, 0), (1, 1), (1, 1), (1, 1), (0, 0)))     # zero halos
    xn = xn.reshape(B, D + 2, H + 2, LIN).astype(jnp.bfloat16)

    def banded(w3, pad_out):
        # w3: [3(kw), Cin, Co] taps of one (kd, kh).  Returns [(W+2)*Cin, N] with
        # entry[(wp, ci), (wo, co)] = w3[wp - wo, ci, co] for 0 <= wp - wo < 3.
        wp = jnp.arange(W + 2)[:, None]
        wo = jnp.arange(W)[None, :]
        k = wp - wo
        valid = (k >= 0) & (k < 3)
        g = w3[jnp.clip(k, 0, 2)]                                  # [W+2, W, Cin, Co]
        g = jnp.where(valid[:, :, None, None], g, 0.0)
        g = jnp.transpose(g, (0, 2, 1, 3))                         # [W+2, Cin, W, Co]
        if pad_out:
            g = jnp.pad(g, ((0, 0), (0, 0), (1, 1), (0, 0)))       # zero W-halo cols
        cin, co = w3.shape[1], w3.shape[2]
        return g.reshape((W + 2) * cin, g.shape[2] * co)

    def conv_weight(wt, pad_out):
        # torch Conv3d weight [Co, Ci, 3, 3, 3] -> [9, (W+2)*Ci, N] (kd-major, kh-minor)
        wt_t = jnp.transpose(wt, (2, 3, 4, 1, 0))                  # [kd, kh, kw, Ci, Co]
        blocks = [banded(wt_t[kd, kh], pad_out)
                  for kd in range(3) for kh in range(3)]
        return jnp.stack(blocks, axis=0).astype(jnp.bfloat16)

    def bias_row(b, pad_out):
        row = jnp.tile(b.reshape(1, -1), (W, 1))                   # [W, Co]
        if pad_out:
            row = jnp.pad(row, ((1, 1), (0, 0)))                   # zero bias in halos
        return row.reshape(1, -1).astype(jnp.float32)

    # ConvTranspose3d -> two depth polyphases of a kd=3 conv; merged into one weight.
    wt = params['up_w']                                            # [Ci, Co, 4, 3, 3]
    w_eq = jnp.transpose(jnp.flip(wt, axis=(2, 3, 4)), (1, 0, 2, 3, 4))  # [Co,Ci,4,3,3]
    zk = jnp.zeros_like(w_eq[:, :, 0:1])
    # even out-depth 2j  : taps (x[j-1], x[j], x[j+1]) * (w_eq[0], w_eq[2], 0)
    # odd  out-depth 2j+1: taps (x[j-1], x[j], x[j+1]) * (0, w_eq[1], w_eq[3])
    w_even = jnp.concatenate([w_eq[:, :, 0:1], w_eq[:, :, 2:3], zk], axis=2)
    w_odd = jnp.concatenate([zk, w_eq[:, :, 1:2], w_eq[:, :, 3:4]], axis=2)
    wum = jnp.concatenate([conv_weight(w_even, True),
                           conv_weight(w_odd, True)], axis=2)      # [9, LIN, 2*LIN]
    bu = bias_row(params['up_b'], True)
    bum = jnp.concatenate([bu, bu], axis=1)                        # [1, 2*LIN]

    w1m = conv_weight(params['c1_w'], True)                        # [9, LIN, LOUT]
    b1 = bias_row(params['c1_b'], True)                            # [1, LOUT]
    w2m = conv_weight(params['c2_w'], False)                       # [9, LOUT, W*Cout]
    b2 = bias_row(params['c2_b'], False)                           # [1, W*Cout]

    kern = functools.partial(_decoder_kernel, D=D, H=H, W=W, C2=C2, Cout=Cout)

    m_up, m_c = D * H, D2 * H
    flops = 9 * 2 * B * (m_up * LIN * 2 * LIN + m_c * LIN * LOUT
                         + m_c * LOUT * W * Cout)
    bytes_accessed = (xn.size * 2 + B * D2 * H * W * Cout * 4
                      + 2 * (wum.size + w1m.size + w2m.size)
                      + 4 * (bum.size + b1.size + b2.size))

    out = pl.pallas_call(
        kern,
        out_shape=jax.ShapeDtypeStruct((B, D2 * H, W * Cout), jnp.float32),
        grid_spec=pltpu.PrefetchScalarGridSpec(
            num_scalar_prefetch=0,
            grid=(B,),
            in_specs=[
                pl.BlockSpec((1, D + 2, H + 2, LIN), lambda b: (b, 0, 0, 0)),
                pl.BlockSpec((9, LIN, 2 * LIN), lambda b: (0, 0, 0)),
                pl.BlockSpec((1, 2 * LIN), lambda b: (0, 0)),
                pl.BlockSpec((9, LIN, LOUT), lambda b: (0, 0, 0)),
                pl.BlockSpec((1, LOUT), lambda b: (0, 0)),
                pl.BlockSpec((9, LOUT, W * Cout), lambda b: (0, 0, 0)),
                pl.BlockSpec((1, W * Cout), lambda b: (0, 0)),
            ],
            out_specs=pl.BlockSpec((1, D2 * H, W * Cout), lambda b: (b, 0, 0)),
            scratch_shapes=[
                pltpu.VMEM((D2 + 2, H + 2, LIN), jnp.float32),     # padded up-conv out
                pltpu.VMEM((D2 + 2, H + 2, LOUT), jnp.float32),    # padded conv1 out
            ],
        ),
        compiler_params=pltpu.CompilerParams(
            dimension_semantics=("parallel",),                     # megacore over batch
            vmem_limit_bytes=32 * 1024 * 1024,
        ),
        cost_estimate=pl.CostEstimate(flops=int(flops), transcendentals=0,
                                      bytes_accessed=int(bytes_accessed)),
    )(xn, wum, bum, w1m, b1, w2m, b2)

    out = out.reshape(B, D2, H, W, Cout)
    return jnp.transpose(out, (0, 4, 1, 2, 3)).astype(jnp.float32)   # back to NCDHW


# -----------------------------------------------------------------------------
# Pure-JAX f32 reference (lax.conv_general_dilated) for correctness check
# -----------------------------------------------------------------------------
def reference_forward(params, x, encoder_features):
    dn = ('NCDHW', 'OIDHW', 'NCDHW')
    prec = jax.lax.Precision.HIGHEST
    xc = jnp.concatenate([encoder_features, x], axis=1)
    wt = params['up_w']
    w_eq = jnp.transpose(jnp.flip(wt, axis=(2, 3, 4)), (1, 0, 2, 3, 4))  # OIDHW
    y = jax.lax.conv_general_dilated(
        xc, w_eq, window_strides=(1, 1, 1),
        padding=[(2, 2), (1, 1), (1, 1)], lhs_dilation=(2, 1, 1),
        dimension_numbers=dn, precision=prec)
    y = y + params['up_b'].reshape(1, -1, 1, 1, 1)
    y = jax.lax.conv_general_dilated(y, params['c1_w'], (1, 1, 1),
                                     [(1, 1)] * 3, dimension_numbers=dn,
                                     precision=prec)
    y = jnp.maximum(y + params['c1_b'].reshape(1, -1, 1, 1, 1), 0.0)
    y = jax.lax.conv_general_dilated(y, params['c2_w'], (1, 1, 1),
                                     [(1, 1)] * 3, dimension_numbers=dn,
                                     precision=prec)
    y = jnp.maximum(y + params['c2_b'].reshape(1, -1, 1, 1, 1), 0.0)
    return y


if __name__ == "__main__":
    # Shapes consistent with the module: in_channels=4, out_channels=8,
    # batch=2, depth(time)=4, spatial 8x8.
    in_channels, out_channels = 4, 8
    B, D, H, W = 2, 4, 8, 8
    C2 = in_channels * 2

    key = jax.random.PRNGKey(0)
    keys = jax.random.split(key, 8)
    x = jax.random.normal(keys[0], (B, in_channels, D, H, W), jnp.float32)
    enc = jax.random.normal(keys[1], (B, in_channels, D, H, W), jnp.float32)

    params = {
        # ConvTranspose3d weight: [in_channels, out_channels, kD, kH, kW]
        'up_w': 0.05 * jax.random.normal(keys[2], (C2, C2, 4, 3, 3), jnp.float32),
        'up_b': 0.05 * jax.random.normal(keys[3], (C2,), jnp.float32),
        # Conv3d weights: [out_channels, in_channels, 3, 3, 3]
        'c1_w': 0.05 * jax.random.normal(keys[4], (out_channels, C2, 3, 3, 3), jnp.float32),
        'c1_b': 0.05 * jax.random.normal(keys[5], (out_channels,), jnp.float32),
        'c2_w': 0.05 * jax.random.normal(keys[6], (out_channels, out_channels, 3, 3, 3), jnp.float32),
        'c2_b': 0.05 * jax.random.normal(keys[7], (out_channels,), jnp.float32),
    }

    fwd = jax.jit(decoder_layer_forward)
    out = jax.block_until_ready(fwd(params, x, enc))
    assert out.shape == (B, out_channels, 2 * D, H, W), out.shape

    ref = jax.block_until_ready(reference_forward(params, x, enc))
    # bf16 matmul operands (f32 accumulation, f32 VMEM intermediates)
    np.testing.assert_allclose(np.asarray(out), np.asarray(ref), atol=3e-2, rtol=3e-2)

    print("KERNEL_OK")
</pallas_src>

<mosaic_0001>
module attributes {stable_mosaic.version = 11 : i64} {
  func.func @_decoder_kernel(%arg0: i32, %arg1: memref<1x6x10x80xbf16, #tpu.memory_space<vmem>>, %arg2: memref<9x80x160xbf16, #tpu.memory_space<vmem>>, %arg3: memref<1x160xf32, #tpu.memory_space<vmem>>, %arg4: memref<9x80x80xbf16, #tpu.memory_space<vmem>>, %arg5: memref<1x80xf32, #tpu.memory_space<vmem>>, %arg6: memref<9x80x64xbf16, #tpu.memory_space<vmem>>, %arg7: memref<1x64xf32, #tpu.memory_space<vmem>>, %arg8: memref<1x64x64xf32, #tpu.memory_space<vmem>>, %arg9: memref<10x10x80xf32, #tpu.memory_space<vmem>>, %arg10: memref<10x10x80xf32, #tpu.memory_space<vmem>>) attributes {dimension_semantics = [#tpu.dimension_semantics<parallel>], iteration_bounds = array<i64: 2>, scalar_prefetch = 0 : i64, scratch_operands = 2 : i64, tpu.core_type = #tpu.core_type<tc>, window_params = [{transform_indices = @transform_0, window_bounds = array<i64: 1, 6, 10, 80>}, {pipeline_mode = #tpu.pipeline_mode<synchronous>, transform_indices = @transform_1, window_bounds = array<i64: 9, 80, 160>}, {pipeline_mode = #tpu.pipeline_mode<synchronous>, transform_indices = @transform_2, window_bounds = array<i64: 1, 160>}, {pipeline_mode = #tpu.pipeline_mode<synchronous>, transform_indices = @transform_3, window_bounds = array<i64: 9, 80, 80>}, {pipeline_mode = #tpu.pipeline_mode<synchronous>, transform_indices = @transform_4, window_bounds = array<i64: 1, 80>}, {pipeline_mode = #tpu.pipeline_mode<synchronous>, transform_indices = @transform_5, window_bounds = array<i64: 9, 80, 64>}, {pipeline_mode = #tpu.pipeline_mode<synchronous>, transform_indices = @transform_6, window_bounds = array<i64: 1, 64>}, {transform_indices = @transform_7, window_bounds = array<i64: 1, 64, 64>}]} {
    %cst = arith.constant 0.000000e+00 : f32
    %0 = vector.broadcast %cst : f32 to vector<1x10x80xf32>
    %c0 = arith.constant 0 : index
    %c0_0 = arith.constant 0 : index
    %c0_1 = arith.constant 0 : index
    %1 = vector.load %arg9[%c0, %c0_0, %c0_1] : memref<10x10x80xf32, #tpu.memory_space<vmem>>, vector<1x10x80xf32>
    tpu.vector_store %arg9[%c0, %c0_0, %c0_1], %0 {strides = array<i32>} : memref<10x10x80xf32, #tpu.memory_space<vmem>>, vector<1x10x80xf32>,
    %cst_2 = arith.constant 0.000000e+00 : f32
    %2 = vector.broadcast %cst_2 : f32 to vector<1x10x80xf32>
    %c9 = arith.constant 9 : index
    %c0_3 = arith.constant 0 : index
    %c0_4 = arith.constant 0 : index
    %3 = vector.load %arg9[%c9, %c0_3, %c0_4] : memref<10x10x80xf32, #tpu.memory_space<vmem>>, vector<1x10x80xf32>
    tpu.vector_store %arg9[%c9, %c0_3, %c0_4], %2 {strides = array<i32>} : memref<10x10x80xf32, #tpu.memory_space<vmem>>, vector<1x10x80xf32>,
    %cst_5 = arith.constant 0.000000e+00 : f32
    %4 = vector.broadcast %cst_5 : f32 to vector<10x1x80xf32>
    %c0_6 = arith.constant 0 : index
    %c0_7 = arith.constant 0 : index
    %c0_8 = arith.constant 0 : index
    %5 = vector.load %arg9[%c0_6, %c0_7, %c0_8] : memref<10x10x80xf32, #tpu.memory_space<vmem>>, vector<10x1x80xf32>
    tpu.vector_store %arg9[%c0_6, %c0_7, %c0_8], %4 {strides = array<i32>} : memref<10x10x80xf32, #tpu.memory_space<vmem>>, vector<10x1x80xf32>,
    %cst_9 = arith.constant 0.000000e+00 : f32
    %6 = vector.broadcast %cst_9 : f32 to vector<10x1x80xf32>
    %c0_10 = arith.constant 0 : index
    %c9_11 = arith.constant 9 : index
    %c0_12 = arith.constant 0 : index
    %7 = vector.load %arg9[%c0_10, %c9_11, %c0_12] : memref<10x10x80xf32, #tpu.memory_space<vmem>>, vector<10x1x80xf32>
    tpu.vector_store %arg9[%c0_10, %c9_11, %c0_12], %6 {strides = array<i32>} : memref<10x10x80xf32, #tpu.memory_space<vmem>>, vector<10x1x80xf32>,
    %cst_13 = arith.constant 0.000000e+00 : f32
    %8 = vector.broadcast %cst_13 : f32 to vector<1x10x80xf32>
    %c0_14 = arith.constant 0 : index
    %c0_15 = arith.constant 0 : index
    %c0_16 = arith.constant 0 : index
    %9 = vector.load %arg10[%c0_14, %c0_15, %c0_16] : memref<10x10x80xf32, #tpu.memory_space<vmem>>, vector<1x10x80xf32>
    tpu.vector_store %arg10[%c0_14, %c0_15, %c0_16], %8 {strides = array<i32>} : memref<10x10x80xf32, #tpu.memory_space<vmem>>, vector<1x10x80xf32>,
    %cst_17 = arith.constant 0.000000e+00 : f32
    %10 = vector.broadcast %cst_17 : f32 to vector<1x10x80xf32>
    %c9_18 = arith.constant 9 : index
    %c0_19 = arith.constant 0 : index
    %c0_20 = arith.constant 0 : index
    %11 = vector.load %arg10[%c9_18, %c0_19, %c0_20] : memref<10x10x80xf32, #tpu.memory_space<vmem>>, vector<1x10x80xf32>
    tpu.vector_store %arg10[%c9_18, %c0_19, %c0_20], %10 {strides = array<i32>} : memref<10x10x80xf32, #tpu.memory_space<vmem>>, vector<1x10x80xf32>,
    %cst_21 = arith.constant 0.000000e+00 : f32
    %12 = vector.broadcast %cst_21 : f32 to vector<10x1x80xf32>
    %c0_22 = arith.constant 0 : index
    %c0_23 = arith.constant 0 : index
    %c0_24 = arith.constant 0 : index
    %13 = vector.load %arg10[%c0_22, %c0_23, %c0_24] : memref<10x10x80xf32, #tpu.memory_space<vmem>>, vector<10x1x80xf32>
    tpu.vector_store %arg10[%c0_22, %c0_23, %c0_24], %12 {strides = array<i32>} : memref<10x10x80xf32, #tpu.memory_space<vmem>>, vector<10x1x80xf32>,
    %cst_25 = arith.constant 0.000000e+00 : f32
    %14 = vector.broadcast %cst_25 : f32 to vector<10x1x80xf32>
    %c0_26 = arith.constant 0 : index
    %c9_27 = arith.constant 9 : index
    %c0_28 = arith.constant 0 : index
    %15 = vector.load %arg10[%c0_26, %c9_27, %c0_28] : memref<10x10x80xf32, #tpu.memory_space<vmem>>, vector<10x1x80xf32>
    tpu.vector_store %arg10[%c0_26, %c9_27, %c0_28], %14 {strides = array<i32>} : memref<10x10x80xf32, #tpu.memory_space<vmem>>, vector<10x1x80xf32>,
    %c0_29 = arith.constant 0 : index
    %c0_30 = arith.constant 0 : index
    %c0_31 = arith.constant 0 : index
    %c0_32 = arith.constant 0 : index
    %16 = vector.load %arg1[%c0_29, %c0_30, %c0_31, %c0_32] : memref<1x6x10x80xbf16, #tpu.memory_space<vmem>>, vector<1x6x10x80xbf16>
    %17 = vector.shape_cast %16 : vector<1x6x10x80xbf16> to vector<6x10x80xbf16>
    %18 = vector.extract_strided_slice %17 {offsets = [0, 0, 0], sizes = [4, 8, 80], strides = [1, 1, 1]} : vector<6x10x80xbf16> to vector<4x8x80xbf16>
    %19 = vector.shape_cast %18 : vector<4x8x80xbf16> to vector<32x80xbf16>
    %c0_33 = arith.constant 0 : index
    %c0_34 = arith.constant 0 : index
    %c0_35 = arith.constant 0 : index
    %20 = vector.load %arg2[%c0_33, %c0_34, %c0_35] : memref<9x80x160xbf16, #tpu.memory_space<vmem>>, vector<1x80x160xbf16>
    %21 = vector.shape_cast %20 : vector<1x80x160xbf16> to vector<80x160xbf16>
    %cst_36 = arith.constant dense<0.000000e+00> : vector<32x160xf32>
    %22 = tpu.matmul %19, %21, %cst_36 {dimension_numbers = #tpu.dot_dimension_numbers<[1], [0], [0], [1], [0, 0, 1, 1], [], []>} : vector<32x80xbf16>, vector<80x160xbf16>, vector<32x160xf32> -> vector<32x160xf32>
    %23 = vector.extract_strided_slice %17 {offsets = [0, 1, 0], sizes = [4, 8, 80], strides = [1, 1, 1]} : vector<6x10x80xbf16> to vector<4x8x80xbf16>
    %24 = vector.shape_cast %23 : vector<4x8x80xbf16> to vector<32x80xbf16>
    %c1 = arith.constant 1 : index
    %c0_37 = arith.constant 0 : index
    %c0_38 = arith.constant 0 : index
    %25 = vector.load %arg2[%c1, %c0_37, %c0_38] : memref<9x80x160xbf16, #tpu.memory_space<vmem>>, vector<1x80x160xbf16>
    %26 = vector.shape_cast %25 : vector<1x80x160xbf16> to vector<80x160xbf16>
    %cst_39 = arith.constant dense<0.000000e+00> : vector<32x160xf32>
    %27 = tpu.matmul %24, %26, %cst_39 {dimension_numbers = #tpu.dot_dimension_numbers<[1], [0], [0], [1], [0, 0, 1, 1], [], []>} : vector<32x80xbf16>, vector<80x160xbf16>, vector<32x160xf32> -> vector<32x160xf32>
    %28 = arith.addf %22, %27 : vector<32x160xf32>
    %29 = vector.extract_strided_slice %17 {offsets = [0, 2, 0], sizes = [4, 8, 80], strides = [1, 1, 1]} : vector<6x10x80xbf16> to vector<4x8x80xbf16>
    %30 = vector.shape_cast %29 : vector<4x8x80xbf16> to vector<32x80xbf16>
    %c2 = arith.constant 2 : index
    %c0_40 = arith.constant 0 : index
    %c0_41 = arith.constant 0 : index
    %31 = vector.load %arg2[%c2, %c0_40, %c0_41] : memref<9x80x160xbf16, #tpu.memory_space<vmem>>, vector<1x80x160xbf16>
    %32 = vector.shape_cast %31 : vector<1x80x160xbf16> to vector<80x160xbf16>
    %cst_42 = arith.constant dense<0.000000e+00> : vector<32x160xf32>
    %33 = tpu.matmul %30, %32, %cst_42 {dimension_numbers = #tpu.dot_dimension_numbers<[1], [0], [0], [1], [0, 0, 1, 1], [], []>} : vector<32x80xbf16>, vector<80x160xbf16>, vector<32x160xf32> -> vector<32x160xf32>
    %34 = arith.addf %28, %33 : vector<32x160xf32>
    %35 = vector.extract_strided_slice %17 {offsets = [1, 0, 0], sizes = [4, 8, 80], strides = [1, 1, 1]} : vector<6x10x80xbf16> to vector<4x8x80xbf16>
    %36 = vector.shape_cast %35 : vector<4x8x80xbf16> to vector<32x80xbf16>
    %c3 = arith.constant 3 : index
    %c0_43 = arith.constant 0 : index
    %c0_44 = arith.constant 0 : index
    %37 = vector.load %arg2[%c3, %c0_43, %c0_44] : memref<9x80x160xbf16, #tpu.memory_space<vmem>>, vector<1x80x160xbf16>
    %38 = vector.shape_cast %37 : vector<1x80x160xbf16> to vector<80x160xbf16>
    %cst_45 = arith.constant dense<0.000000e+00> : vector<32x160xf32>
    %39 = tpu.matmul %36, %38, %cst_45 {dimension_numbers = #tpu.dot_dimension_numbers<[1], [0], [0], [1], [0, 0, 1, 1], [], []>} : vector<32x80xbf16>, vector<80x160xbf16>, vector<32x160xf32> -> vector<32x160xf32>
    %40 = arith.addf %34, %39 : vector<32x160xf32>
    %41 = vector.extract_strided_slice %17 {offsets = [1, 1, 0], sizes = [4, 8, 80], strides = [1, 1, 1]} : vector<6x10x80xbf16> to vector<4x8x80xbf16>
    %42 = vector.shape_cast %41 : vector<4x8x80xbf16> to vector<32x80xbf16>
    %c4 = arith.constant 4 : index
    %c0_46 = arith.constant 0 : index
    %c0_47 = arith.constant 0 : index
    %43 = vector.load %arg2[%c4, %c0_46, %c0_47] : memref<9x80x160xbf16, #tpu.memory_space<vmem>>, vector<1x80x160xbf16>
    %44 = vector.shape_cast %43 : vector<1x80x160xbf16> to vector<80x160xbf16>
    %cst_48 = arith.constant dense<0.000000e+00> : vector<32x160xf32>
    %45 = tpu.matmul %42, %44, %cst_48 {dimension_numbers = #tpu.dot_dimension_numbers<[1], [0], [0], [1], [0, 0, 1, 1], [], []>} : vector<32x80xbf16>, vector<80x160xbf16>, vector<32x160xf32> -> vector<32x160xf32>
    %46 = arith.addf %40, %45 : vector<32x160xf32>
    %47 = vector.extract_strided_slice %17 {offsets = [1, 2, 0], sizes = [4, 8, 80], strides = [1, 1, 1]} : vector<6x10x80xbf16> to vector<4x8x80xbf16>
    %48 = vector.shape_cast %47 : vector<4x8x80xbf16> to vector<32x80xbf16>
    %c5 = arith.constant 5 : index
    %c0_49 = arith.constant 0 : index
    %c0_50 = arith.constant 0 : index
    %49 = vector.load %arg2[%c5, %c0_49, %c0_50] : memref<9x80x160xbf16, #tpu.memory_space<vmem>>, vector<1x80x160xbf16>
    %50 = vector.shape_cast %49 : vector<1x80x160xbf16> to vector<80x160xbf16>
    %cst_51 = arith.constant dense<0.000000e+00> : vector<32x160xf32>
    %51 = tpu.matmul %48, %50, %cst_51 {dimension_numbers = #tpu.dot_dimension_numbers<[1], [0], [0], [1], [0, 0, 1, 1], [], []>} : vector<32x80xbf16>, vector<80x160xbf16>, vector<32x160xf32> -> vector<32x160xf32>
    %52 = arith.addf %46, %51 : vector<32x160xf32>
    %53 = vector.extract_strided_slice %17 {offsets = [2, 0, 0], sizes = [4, 8, 80], strides = [1, 1, 1]} : vector<6x10x80xbf16> to vector<4x8x80xbf16>
    %54 = vector.shape_cast %53 : vector<4x8x80xbf16> to vector<32x80xbf16>
    %c6 = arith.constant 6 : index
    %c0_52 = arith.constant 0 : index
    %c0_53 = arith.constant 0 : index
    %55 = vector.load %arg2[%c6, %c0_52, %c0_53] : memref<9x80x160xbf16, #tpu.memory_space<vmem>>, vector<1x80x160xbf16>
    %56 = vector.shape_cast %55 : vector<1x80x160xbf16> to vector<80x160xbf16>
    %cst_54 = arith.constant dense<0.000000e+00> : vector<32x160xf32>
    %57 = tpu.matmul %54, %56, %cst_54 {dimension_numbers = #tpu.dot_dimension_numbers<[1], [0], [0], [1], [0, 0, 1, 1], [], []>} : vector<32x80xbf16>, vector<80x160xbf16>, vector<32x160xf32> -> vector<32x160xf32>
    %58 = arith.addf %52, %57 : vector<32x160xf32>
    %59 = vector.extract_strided_slice %17 {offsets = [2, 1, 0], sizes = [4, 8, 80], strides = [1, 1, 1]} : vector<6x10x80xbf16> to vector<4x8x80xbf16>
    %60 = vector.shape_cast %59 : vector<4x8x80xbf16> to vector<32x80xbf16>
    %c7 = arith.constant 7 : index
    %c0_55 = arith.constant 0 : index
    %c0_56 = arith.constant 0 : index
    %61 = vector.load %arg2[%c7, %c0_55, %c0_56] : memref<9x80x160xbf16, #tpu.memory_space<vmem>>, vector<1x80x160xbf16>
    %62 = vector.shape_cast %61 : vector<1x80x160xbf16> to vector<80x160xbf16>
    %cst_57 = arith.constant dense<0.000000e+00> : vector<32x160xf32>
    %63 = tpu.matmul %60, %62, %cst_57 {dimension_numbers = #tpu.dot_dimension_numbers<[1], [0], [0], [1], [0, 0, 1, 1], [], []>} : vector<32x80xbf16>, vector<80x160xbf16>, vector<32x160xf32> -> vector<32x160xf32>
    %64 = arith.addf %58, %63 : vector<32x160xf32>
    %65 = vector.extract_strided_slice %17 {offsets = [2, 2, 0], sizes = [4, 8, 80], strides = [1, 1, 1]} : vector<6x10x80xbf16> to vector<4x8x80xbf16>
    %66 = vector.shape_cast %65 : vector<4x8x80xbf16> to vector<32x80xbf16>
    %c8 = arith.constant 8 : index
    %c0_58 = arith.constant 0 : index
    %c0_59 = arith.constant 0 : index
    %67 = vector.load %arg2[%c8, %c0_58, %c0_59] : memref<9x80x160xbf16, #tpu.memory_space<vmem>>, vector<1x80x160xbf16>
    %68 = vector.shape_cast %67 : vector<1x80x160xbf16> to vector<80x160xbf16>
    %cst_60 = arith.constant dense<0.000000e+00> : vector<32x160xf32>
    %69 = tpu.matmul %66, %68, %cst_60 {dimension_numbers = #tpu.dot_dimension_numbers<[1], [0], [0], [1], [0, 0, 1, 1], [], []>} : vector<32x80xbf16>, vector<80x160xbf16>, vector<32x160xf32> -> vector<32x160xf32>
    %70 = arith.addf %64, %69 : vector<32x160xf32>
    %c0_61 = arith.constant 0 : index
    %c0_62 = arith.constant 0 : index
    %71 = vector.load %arg3[%c0_61, %c0_62] : memref<1x160xf32, #tpu.memory_space<vmem>>, vector<1x160xf32>
    %72 = vector.broadcast %71 : vector<1x160xf32> to vector<32x160xf32>
    %73 = arith.addf %70, %72 : vector<32x160xf32>
    %74 = vector.extract_strided_slice %73 {offsets = [0, 0], sizes = [32, 80], strides = [1, 1]} : vector<32x160xf32> to vector<32x80xf32>
    %75 = vector.shape_cast %74 : vector<32x80xf32> to vector<4x8x80xf32>
    %76 = vector.extract_strided_slice %73 {offsets = [0, 80], sizes = [32, 80], strides = [1, 1]} : vector<32x160xf32> to vector<32x80xf32>
    %77 = vector.shape_cast %76 : vector<32x80xf32> to vector<4x8x80xf32>
    %78 = vector.extract_strided_slice %75 {offsets = [0, 0, 0], sizes = [1, 8, 80], strides = [1, 1, 1]} : vector<4x8x80xf32> to vector<1x8x80xf32>
    %79 = vector.shape_cast %78 : vector<1x8x80xf32> to vector<8x80xf32>
    %c1_63 = arith.constant 1 : index
    %c1_64 = arith.constant 1 : index
    %c0_65 = arith.constant 0 : index
    %80 = vector.load %arg9[%c1_63, %c1_64, %c0_65] : memref<10x10x80xf32, #tpu.memory_space<vmem>>, vector<1x8x80xf32>
    %81 = vector.shape_cast %80 : vector<1x8x80xf32> to vector<8x80xf32>
    %82 = vector.shape_cast %79 : vector<8x80xf32> to vector<1x8x80xf32>
    tpu.vector_store %arg9[%c1_63, %c1_64, %c0_65], %82 {strides = array<i32>} : memref<10x10x80xf32, #tpu.memory_space<vmem>>, vector<1x8x80xf32>,
    %83 = vector.extract_strided_slice %77 {offsets = [0, 0, 0], sizes = [1, 8, 80], strides = [1, 1, 1]} : vector<4x8x80xf32> to vector<1x8x80xf32>
    %84 = vector.shape_cast %83 : vector<1x8x80xf32> to vector<8x80xf32>
    %c2_66 = arith.constant 2 : index
    %c1_67 = arith.constant 1 : index
    %c0_68 = arith.constant 0 : index
    %85 = vector.load %arg9[%c2_66, %c1_67, %c0_68] : memref<10x10x80xf32, #tpu.memory_space<vmem>>, vector<1x8x80xf32>
    %86 = vector.shape_cast %85 : vector<1x8x80xf32> to vector<8x80xf32>
    %87 = vector.shape_cast %84 : vector<8x80xf32> to vector<1x8x80xf32>
    tpu.vector_store %arg9[%c2_66, %c1_67, %c0_68], %87 {strides = array<i32>} : memref<10x10x80xf32, #tpu.memory_space<vmem>>, vector<1x8x80xf32>,
    %88 = vector.extract_strided_slice %75 {offsets = [1, 0, 0], sizes = [1, 8, 80], strides = [1, 1, 1]} : vector<4x8x80xf32> to vector<1x8x80xf32>
    %89 = vector.shape_cast %88 : vector<1x8x80xf32> to vector<8x80xf32>
    %c3_69 = arith.constant 3 : index
    %c1_70 = arith.constant 1 : index
    %c0_71 = arith.constant 0 : index
    %90 = vector.load %arg9[%c3_69, %c1_70, %c0_71] : memref<10x10x80xf32, #tpu.memory_space<vmem>>, vector<1x8x80xf32>
    %91 = vector.shape_cast %90 : vector<1x8x80xf32> to vector<8x80xf32>
    %92 = vector.shape_cast %89 : vector<8x80xf32> to vector<1x8x80xf32>
    tpu.vector_store %arg9[%c3_69, %c1_70, %c0_71], %92 {strides = array<i32>} : memref<10x10x80xf32, #tpu.memory_space<vmem>>, vector<1x8x80xf32>,
    %93 = vector.extract_strided_slice %77 {offsets = [1, 0, 0], sizes = [1, 8, 80], strides = [1, 1, 1]} : vector<4x8x80xf32> to vector<1x8x80xf32>
    %94 = vector.shape_cast %93 : vector<1x8x80xf32> to vector<8x80xf32>
    %c4_72 = arith.constant 4 : index
    %c1_73 = arith.constant 1 : index
    %c0_74 = arith.constant 0 : index
    %95 = vector.load %arg9[%c4_72, %c1_73, %c0_74] : memref<10x10x80xf32, #tpu.memory_space<vmem>>, vector<1x8x80xf32>
    %96 = vector.shape_cast %95 : vector<1x8x80xf32> to vector<8x80xf32>
    %97 = vector.shape_cast %94 : vector<8x80xf32> to vector<1x8x80xf32>
    tpu.vector_store %arg9[%c4_72, %c1_73, %c0_74], %97 {strides = array<i32>} : memref<10x10x80xf32, #tpu.memory_space<vmem>>, vector<1x8x80xf32>,
    %98 = vector.extract_strided_slice %75 {offsets = [2, 0, 0], sizes = [1, 8, 80], strides = [1, 1, 1]} : vector<4x8x80xf32> to vector<1x8x80xf32>
    %99 = vector.shape_cast %98 : vector<1x8x80xf32> to vector<8x80xf32>
    %c5_75 = arith.constant 5 : index
    %c1_76 = arith.constant 1 : index
    %c0_77 = arith.constant 0 : index
    %100 = vector.load %arg9[%c5_75, %c1_76, %c0_77] : memref<10x10x80xf32, #tpu.memory_space<vmem>>, vector<1x8x80xf32>
    %101 = vector.shape_cast %100 : vector<1x8x80xf32> to vector<8x80xf32>
    %102 = vector.shape_cast %99 : vector<8x80xf32> to vector<1x8x80xf32>
    tpu.vector_store %arg9[%c5_75, %c1_76, %c0_77], %102 {strides = array<i32>} : memref<10x10x80xf32, #tpu.memory_space<vmem>>, vector<1x8x80xf32>,
    %103 = vector.extract_strided_slice %77 {offsets = [2, 0, 0], sizes = [1, 8, 80], strides = [1, 1, 1]} : vector<4x8x80xf32> to vector<1x8x80xf32>
    %104 = vector.shape_cast %103 : vector<1x8x80xf32> to vector<8x80xf32>
    %c6_78 = arith.constant 6 : index
    %c1_79 = arith.constant 1 : index
    %c0_80 = arith.constant 0 : index
    %105 = vector.load %arg9[%c6_78, %c1_79, %c0_80] : memref<10x10x80xf32, #tpu.memory_space<vmem>>, vector<1x8x80xf32>
    %106 = vector.shape_cast %105 : vector<1x8x80xf32> to vector<8x80xf32>
    %107 = vector.shape_cast %104 : vector<8x80xf32> to vector<1x8x80xf32>
    tpu.vector_store %arg9[%c6_78, %c1_79, %c0_80], %107 {strides = array<i32>} : memref<10x10x80xf32, #tpu.memory_space<vmem>>, vector<1x8x80xf32>,
    %108 = vector.extract_strided_slice %75 {offsets = [3, 0, 0], sizes = [1, 8, 80], strides = [1, 1, 1]} : vector<4x8x80xf32> to vector<1x8x80xf32>
    %109 = vector.shape_cast %108 : vector<1x8x80xf32> to vector<8x80xf32>
    %c7_81 = arith.constant 7 : index
    %c1_82 = arith.constant 1 : index
    %c0_83 = arith.constant 0 : index
    %110 = vector.load %arg9[%c7_81, %c1_82, %c0_83] : memref<10x10x80xf32, #tpu.memory_space<vmem>>, vector<1x8x80xf32>
    %111 = vector.shape_cast %110 : vector<1x8x80xf32> to vector<8x80xf32>
    %112 = vector.shape_cast %109 : vector<8x80xf32> to vector<1x8x80xf32>
    tpu.vector_store %arg9[%c7_81, %c1_82, %c0_83], %112 {strides = array<i32>} : memref<10x10x80xf32, #tpu.memory_space<vmem>>, vector<1x8x80xf32>,
    %113 = vector.extract_strided_slice %77 {offsets = [3, 0, 0], sizes = [1, 8, 80], strides = [1, 1, 1]} : vector<4x8x80xf32> to vector<1x8x80xf32>
    %114 = vector.shape_cast %113 : vector<1x8x80xf32> to vector<8x80xf32>
    %c8_84 = arith.constant 8 : index
    %c1_85 = arith.constant 1 : index
    %c0_86 = arith.constant 0 : index
    %115 = vector.load %arg9[%c8_84, %c1_85, %c0_86] : memref<10x10x80xf32, #tpu.memory_space<vmem>>, vector<1x8x80xf32>
    %116 = vector.shape_cast %115 : vector<1x8x80xf32> to vector<8x80xf32>
    %117 = vector.shape_cast %114 : vector<8x80xf32> to vector<1x8x80xf32>
    tpu.vector_store %arg9[%c8_84, %c1_85, %c0_86], %117 {strides = array<i32>} : memref<10x10x80xf32, #tpu.memory_space<vmem>>, vector<1x8x80xf32>,
    %c0_87 = arith.constant 0 : index
    %c0_88 = arith.constant 0 : index
    %c0_89 = arith.constant 0 : index
    %118 = vector.load %arg9[%c0_87, %c0_88, %c0_89] : memref<10x10x80xf32, #tpu.memory_space<vmem>>, vector<8x8x80xf32>
    %119 = vector.shape_cast %118 : vector<8x8x80xf32> to vector<64x80xf32>
    %120 = arith.truncf %119 : vector<64x80xf32> to vector<64x80xbf16>
    %c0_90 = arith.constant 0 : index
    %c0_91 = arith.constant 0 : index
    %c0_92 = arith.constant 0 : index
    %121 = vector.load %arg4[%c0_90, %c0_91, %c0_92] : memref<9x80x80xbf16, #tpu.memory_space<vmem>>, vector<1x80x80xbf16>
    %122 = vector.shape_cast %121 : vector<1x80x80xbf16> to vector<80x80xbf16>
    %cst_93 = arith.constant dense<0.000000e+00> : vector<64x80xf32>
    %123 = tpu.matmul %120, %122, %cst_93 {dimension_numbers = #tpu.dot_dimension_numbers<[1], [0], [0], [1], [0, 0, 1, 1], [], []>} : vector<64x80xbf16>, vector<80x80xbf16>, vector<64x80xf32> -> vector<64x80xf32>
    %c0_94 = arith.constant 0 : index
    %c1_95 = arith.constant 1 : index
    %c0_96 = arith.constant 0 : index
    %124 = vector.load %arg9[%c0_94, %c1_95, %c0_96] : memref<10x10x80xf32, #tpu.memory_space<vmem>>, vector<8x8x80xf32>
    %125 = vector.shape_cast %124 : vector<8x8x80xf32> to vector<64x80xf32>
    %126 = arith.truncf %125 : vector<64x80xf32> to vector<64x80xbf16>
    %c1_97 = arith.constant 1 : index
    %c0_98 = arith.constant 0 : index
    %c0_99 = arith.constant 0 : index
    %127 = vector.load %arg4[%c1_97, %c0_98, %c0_99] : memref<9x80x80xbf16, #tpu.memory_space<vmem>>, vector<1x80x80xbf16>
    %128 = vector.shape_cast %127 : vector<1x80x80xbf16> to vector<80x80xbf16>
    %cst_100 = arith.constant dense<0.000000e+00> : vector<64x80xf32>
    %129 = tpu.matmul %126, %128, %cst_100 {dimension_numbers = #tpu.dot_dimension_numbers<[1], [0], [0], [1], [0, 0, 1, 1], [], []>} : vector<64x80xbf16>, vector<80x80xbf16>, vector<64x80xf32> -> vector<64x80xf32>
    %130 = arith.addf %123, %129 : vector<64x80xf32>
    %c0_101 = arith.constant 0 : index
    %c2_102 = arith.constant 2 : index
    %c0_103 = arith.constant 0 : index
    %131 = vector.load %arg9[%c0_101, %c2_102, %c0_103] : memref<10x10x80xf32, #tpu.memory_space<vmem>>, vector<8x8x80xf32>
    %132 = vector.shape_cast %131 : vector<8x8x80xf32> to vector<64x80xf32>
    %133 = arith.truncf %132 : vector<64x80xf32> to vector<64x80xbf16>
    %c2_104 = arith.constant 2 : index
    %c0_105 = arith.constant 0 : index
    %c0_106 = arith.constant 0 : index
    %134 = vector.load %arg4[%c2_104, %c0_105, %c0_106] : memref<9x80x80xbf16, #tpu.memory_space<vmem>>, vector<1x80x80xbf16>
    %135 = vector.shape_cast %134 : vector<1x80x80xbf16> to vector<80x80xbf16>
    %cst_107 = arith.constant dense<0.000000e+00> : vector<64x80xf32>
    %136 = tpu.matmul %133, %135, %cst_107 {dimension_numbers = #tpu.dot_dimension_numbers<[1], [0], [0], [1], [0, 0, 1, 1], [], []>} : vector<64x80xbf16>, vector<80x80xbf16>, vector<64x80xf32> -> vector<64x80xf32>
    %137 = arith.addf %130, %136 : vector<64x80xf32>
    %c1_108 = arith.constant 1 : index
    %c0_109 = arith.constant 0 : index
    %c0_110 = arith.constant 0 : index
    %138 = vector.load %arg9[%c1_108, %c0_109, %c0_110] : memref<10x10x80xf32, #tpu.memory_space<vmem>>, vector<8x8x80xf32>
    %139 = vector.shape_cast %138 : vector<8x8x80xf32> to vector<64x80xf32>
    %140 = arith.truncf %139 : vector<64x80xf32> to vector<64x80xbf16>
    %c3_111 = arith.constant 3 : index
    %c0_112 = arith.constant 0 : index
    %c0_113 = arith.constant 0 : index
    %141 = vector.load %arg4[%c3_111, %c0_112, %c0_113] : memref<9x80x80xbf16, #tpu.memory_space<vmem>>, vector<1x80x80xbf16>
    %142 = vector.shape_cast %141 : vector<1x80x80xbf16> to vector<80x80xbf16>
    %cst_114 = arith.constant dense<0.000000e+00> : vector<64x80xf32>
    %143 = tpu.matmul %140, %142, %cst_114 {dimension_numbers = #tpu.dot_dimension_numbers<[1], [0], [0], [1], [0, 0, 1, 1], [], []>} : vector<64x80xbf16>, vector<80x80xbf16>, vector<64x80xf32> -> vector<64x80xf32>
    %144 = arith.addf %137, %143 : vector<64x80xf32>
    %c1_115 = arith.constant 1 : index
    %c1_116 = arith.constant 1 : index
    %c0_117 = arith.constant 0 : index
    %145 = vector.load %arg9[%c1_115, %c1_116, %c0_117] : memref<10x10x80xf32, #tpu.memory_space<vmem>>, vector<8x8x80xf32>
    %146 = vector.shape_cast %145 : vector<8x8x80xf32> to vector<64x80xf32>
    %147 = arith.truncf %146 : vector<64x80xf32> to vector<64x80xbf16>
    %c4_118 = arith.constant 4 : index
    %c0_119 = arith.constant 0 : index
    %c0_120 = arith.constant 0 : index
    %148 = vector.load %arg4[%c4_118, %c0_119, %c0_120] : memref<9x80x80xbf16, #tpu.memory_space<vmem>>, vector<1x80x80xbf16>
    %149 = vector.shape_cast %148 : vector<1x80x80xbf16> to vector<80x80xbf16>
    %cst_121 = arith.constant dense<0.000000e+00> : vector<64x80xf32>
    %150 = tpu.matmul %147, %149, %cst_121 {dimension_numbers = #tpu.dot_dimension_numbers<[1], [0], [0], [1], [0, 0, 1, 1], [], []>} : vector<64x80xbf16>, vector<80x80xbf16>, vector<64x80xf32> -> vector<64x80xf32>
    %151 = arith.addf %144, %150 : vector<64x80xf32>
    %c1_122 = arith.constant 1 : index
    %c2_123 = arith.constant 2 : index
    %c0_124 = arith.constant 0 : index
    %152 = vector.load %arg9[%c1_122, %c2_123, %c0_124] : memref<10x10x80xf32, #tpu.memory_space<vmem>>, vector<8x8x80xf32>
    %153 = vector.shape_cast %152 : vector<8x8x80xf32> to vector<64x80xf32>
    %154 = arith.truncf %153 : vector<64x80xf32> to vector<64x80xbf16>
    %c5_125 = arith.constant 5 : index
    %c0_126 = arith.constant 0 : index
    %c0_127 = arith.constant 0 : index
    %155 = vector.load %arg4[%c5_125, %c0_126, %c0_127] : memref<9x80x80xbf16, #tpu.memory_space<vmem>>, vector<1x80x80xbf16>
    %156 = vector.shape_cast %155 : vector<1x80x80xbf16> to vector<80x80xbf16>
    %cst_128 = arith.constant dense<0.000000e+00> : vector<64x80xf32>
    %157 = tpu.matmul %154, %156, %cst_128 {dimension_numbers = #tpu.dot_dimension_numbers<[1], [0], [0], [1], [0, 0, 1, 1], [], []>} : vector<64x80xbf16>, vector<80x80xbf16>, vector<64x80xf32> -> vector<64x80xf32>
    %158 = arith.addf %151, %157 : vector<64x80xf32>
    %c2_129 = arith.constant 2 : index
    %c0_130 = arith.constant 0 : index
    %c0_131 = arith.constant 0 : index
    %159 = vector.load %arg9[%c2_129, %c0_130, %c0_131] : memref<10x10x80xf32, #tpu.memory_space<vmem>>, vector<8x8x80xf32>
    %160 = vector.shape_cast %159 : vector<8x8x80xf32> to vector<64x80xf32>
    %161 = arith.truncf %160 : vector<64x80xf32> to vector<64x80xbf16>
    %c6_132 = arith.constant 6 : index
    %c0_133 = arith.constant 0 : index
    %c0_134 = arith.constant 0 : index
    %162 = vector.load %arg4[%c6_132, %c0_133, %c0_134] : memref<9x80x80xbf16, #tpu.memory_space<vmem>>, vector<1x80x80xbf16>
    %163 = vector.shape_cast %162 : vector<1x80x80xbf16> to vector<80x80xbf16>
    %cst_135 = arith.constant dense<0.000000e+00> : vector<64x80xf32>
    %164 = tpu.matmul %161, %163, %cst_135 {dimension_numbers = #tpu.dot_dimension_numbers<[1], [0], [0], [1], [0, 0, 1, 1], [], []>} : vector<64x80xbf16>, vector<80x80xbf16>, vector<64x80xf32> -> vector<64x80xf32>
    %165 = arith.addf %158, %164 : vector<64x80xf32>
    %c2_136 = arith.constant 2 : index
    %c1_137 = arith.constant 1 : index
    %c0_138 = arith.constant 0 : index
    %166 = vector.load %arg9[%c2_136, %c1_137, %c0_138] : memref<10x10x80xf32, #tpu.memory_space<vmem>>, vector<8x8x80xf32>
    %167 = vector.shape_cast %166 : vector<8x8x80xf32> to vector<64x80xf32>
    %168 = arith.truncf %167 : vector<64x80xf32> to vector<64x80xbf16>
    %c7_139 = arith.constant 7 : index
    %c0_140 = arith.constant 0 : index
    %c0_141 = arith.constant 0 : index
    %169 = vector.load %arg4[%c7_139, %c0_140, %c0_141] : memref<9x80x80xbf16, #tpu.memory_space<vmem>>, vector<1x80x80xbf16>
    %170 = vector.shape_cast %169 : vector<1x80x80xbf16> to vector<80x80xbf16>
    %cst_142 = arith.constant dense<0.000000e+00> : vector<64x80xf32>
    %171 = tpu.matmul %168, %170, %cst_142 {dimension_numbers = #tpu.dot_dimension_numbers<[1], [0], [0], [1], [0, 0, 1, 1], [], []>} : vector<64x80xbf16>, vector<80x80xbf16>, vector<64x80xf32> -> vector<64x80xf32>
    %172 = arith.addf %165, %171 : vector<64x80xf32>
    %c2_143 = arith.constant 2 : index
    %c2_144 = arith.constant 2 : index
    %c0_145 = arith.constant 0 : index
    %173 = vector.load %arg9[%c2_143, %c2_144, %c0_145] : memref<10x10x80xf32, #tpu.memory_space<vmem>>, vector<8x8x80xf32>
    %174 = vector.shape_cast %173 : vector<8x8x80xf32> to vector<64x80xf32>
    %175 = arith.truncf %174 : vector<64x80xf32> to vector<64x80xbf16>
    %c8_146 = arith.constant 8 : index
    %c0_147 = arith.constant 0 : index
    %c0_148 = arith.constant 0 : index
    %176 = vector.load %arg4[%c8_146, %c0_147, %c0_148] : memref<9x80x80xbf16, #tpu.memory_space<vmem>>, vector<1x80x80xbf16>
    %177 = vector.shape_cast %176 : vector<1x80x80xbf16> to vector<80x80xbf16>
    %cst_149 = arith.constant dense<0.000000e+00> : vector<64x80xf32>
    %178 = tpu.matmul %175, %177, %cst_149 {dimension_numbers = #tpu.dot_dimension_numbers<[1], [0], [0], [1], [0, 0, 1, 1], [], []>} : vector<64x80xbf16>, vector<80x80xbf16>, vector<64x80xf32> -> vector<64x80xf32>
    %179 = arith.addf %172, %178 : vector<64x80xf32>
    %c0_150 = arith.constant 0 : index
    %c0_151 = arith.constant 0 : index
    %180 = vector.load %arg5[%c0_150, %c0_151] : memref<1x80xf32, #tpu.memory_space<vmem>>, vector<1x80xf32>
    %181 = vector.broadcast %180 : vector<1x80xf32> to vector<64x80xf32>
    %182 = arith.addf %179, %181 : vector<64x80xf32>
    %cst_152 = arith.constant 0.000000e+00 : f32
    %183 = vector.broadcast %cst_152 : f32 to vector<64x80xf32>
    %184 = arith.maximumf %182, %183 : vector<64x80xf32>
    %185 = vector.shape_cast %184 : vector<64x80xf32> to vector<8x8x80xf32>
    %c1_153 = arith.constant 1 : index
    %c1_154 = arith.constant 1 : index
    %c0_155 = arith.constant 0 : index
    %186 = vector.load %arg10[%c1_153, %c1_154, %c0_155] : memref<10x10x80xf32, #tpu.memory_space<vmem>>, vector<8x8x80xf32>
    tpu.vector_store %arg10[%c1_153, %c1_154, %c0_155], %185 {strides = array<i32>} : memref<10x10x80xf32, #tpu.memory_space<vmem>>, vector<8x8x80xf32>,
    %c0_156 = arith.constant 0 : index
    %c0_157 = arith.constant 0 : index
    %c0_158 = arith.constant 0 : index
    %187 = vector.load %arg10[%c0_156, %c0_157, %c0_158] : memref<10x10x80xf32, #tpu.memory_space<vmem>>, vector<8x8x80xf32>
    %188 = vector.shape_cast %187 : vector<8x8x80xf32> to vector<64x80xf32>
    %189 = arith.truncf %188 : vector<64x80xf32> to vector<64x80xbf16>
    %c0_159 = arith.constant 0 : index
    %c0_160 = arith.constant 0 : index
    %c0_161 = arith.constant 0 : index
    %190 = vector.load %arg6[%c0_159, %c0_160, %c0_161] : memref<9x80x64xbf16, #tpu.memory_space<vmem>>, vector<1x80x64xbf16>
    %191 = vector.shape_cast %190 : vector<1x80x64xbf16> to vector<80x64xbf16>
    %cst_162 = arith.constant dense<0.000000e+00> : vector<64x64xf32>
    %192 = tpu.matmul %189, %191, %cst_162 {dimension_numbers = #tpu.dot_dimension_numbers<[1], [0], [0], [1], [0, 0, 1, 1], [], []>} : vector<64x80xbf16>, vector<80x64xbf16>, vector<64x64xf32> -> vector<64x64xf32>
    %c0_163 = arith.constant 0 : index
    %c1_164 = arith.constant 1 : index
    %c0_165 = arith.constant 0 : index
    %193 = vector.load %arg10[%c0_163, %c1_164, %c0_165] : memref<10x10x80xf32, #tpu.memory_space<vmem>>, vector<8x8x80xf32>
    %194 = vector.shape_cast %193 : vector<8x8x80xf32> to vector<64x80xf32>
    %195 = arith.truncf %194 : vector<64x80xf32> to vector<64x80xbf16>
    %c1_166 = arith.constant 1 : index
    %c0_167 = arith.constant 0 : index
    %c0_168 = arith.constant 0 : index
    %196 = vector.load %arg6[%c1_166, %c0_167, %c0_168] : memref<9x80x64xbf16, #tpu.memory_space<vmem>>, vector<1x80x64xbf16>
    %197 = vector.shape_cast %196 : vector<1x80x64xbf16> to vector<80x64xbf16>
    %cst_169 = arith.constant dense<0.000000e+00> : vector<64x64xf32>
    %198 = tpu.matmul %195, %197, %cst_169 {dimension_numbers = #tpu.dot_dimension_numbers<[1], [0], [0], [1], [0, 0, 1, 1], [], []>} : vector<64x80xbf16>, vector<80x64xbf16>, vector<64x64xf32> -> vector<64x64xf32>
    %199 = arith.addf %192, %198 : vector<64x64xf32>
    %c0_170 = arith.constant 0 : index
    %c2_171 = arith.constant 2 : index
    %c0_172 = arith.constant 0 : index
    %200 = vector.load %arg10[%c0_170, %c2_171, %c0_172] : memref<10x10x80xf32, #tpu.memory_space<vmem>>, vector<8x8x80xf32>
    %201 = vector.shape_cast %200 : vector<8x8x80xf32> to vector<64x80xf32>
    %202 = arith.truncf %201 : vector<64x80xf32> to vector<64x80xbf16>
    %c2_173 = arith.constant 2 : index
    %c0_174 = arith.constant 0 : index
    %c0_175 = arith.constant 0 : index
    %203 = vector.load %arg6[%c2_173, %c0_174, %c0_175] : memref<9x80x64xbf16, #tpu.memory_space<vmem>>, vector<1x80x64xbf16>
    %204 = vector.shape_cast %203 : vector<1x80x64xbf16> to vector<80x64xbf16>
    %cst_176 = arith.constant dense<0.000000e+00> : vector<64x64xf32>
    %205 = tpu.matmul %202, %204, %cst_176 {dimension_numbers = #tpu.dot_dimension_numbers<[1], [0], [0], [1], [0, 0, 1, 1], [], []>} : vector<64x80xbf16>, vector<80x64xbf16>, vector<64x64xf32> -> vector<64x64xf32>
    %206 = arith.addf %199, %205 : vector<64x64xf32>
    %c1_177 = arith.constant 1 : index
    %c0_178 = arith.constant 0 : index
    %c0_179 = arith.constant 0 : index
    %207 = vector.load %arg10[%c1_177, %c0_178, %c0_179] : memref<10x10x80xf32, #tpu.memory_space<vmem>>, vector<8x8x80xf32>
    %208 = vector.shape_cast %207 : vector<8x8x80xf32> to vector<64x80xf32>
    %209 = arith.truncf %208 : vector<64x80xf32> to vector<64x80xbf16>
    %c3_180 = arith.constant 3 : index
    %c0_181 = arith.constant 0 : index
    %c0_182 = arith.constant 0 : index
    %210 = vector.load %arg6[%c3_180, %c0_181, %c0_182] : memref<9x80x64xbf16, #tpu.memory_space<vmem>>, vector<1x80x64xbf16>
    %211 = vector.shape_cast %210 : vector<1x80x64xbf16> to vector<80x64xbf16>
    %cst_183 = arith.constant dense<0.000000e+00> : vector<64x64xf32>
    %212 = tpu.matmul %209, %211, %cst_183 {dimension_numbers = #tpu.dot_dimension_numbers<[1], [0], [0], [1], [0, 0, 1, 1], [], []>} : vector<64x80xbf16>, vector<80x64xbf16>, vector<64x64xf32> -> vector<64x64xf32>
    %213 = arith.addf %206, %212 : vector<64x64xf32>
    %c1_184 = arith.constant 1 : index
    %c1_185 = arith.constant 1 : index
    %c0_186 = arith.constant 0 : index
    %214 = vector.load %arg10[%c1_184, %c1_185, %c0_186] : memref<10x10x80xf32, #tpu.memory_space<vmem>>, vector<8x8x80xf32>
    %215 = vector.shape_cast %214 : vector<8x8x80xf32> to vector<64x80xf32>
    %216 = arith.truncf %215 : vector<64x80xf32> to vector<64x80xbf16>
    %c4_187 = arith.constant 4 : index
    %c0_188 = arith.constant 0 : index
    %c0_189 = arith.constant 0 : index
    %217 = vector.load %arg6[%c4_187, %c0_188, %c0_189] : memref<9x80x64xbf16, #tpu.memory_space<vmem>>, vector<1x80x64xbf16>
    %218 = vector.shape_cast %217 : vector<1x80x64xbf16> to vector<80x64xbf16>
    %cst_190 = arith.constant dense<0.000000e+00> : vector<64x64xf32>
    %219 = tpu.matmul %216, %218, %cst_190 {dimension_numbers = #tpu.dot_dimension_numbers<[1], [0], [0], [1], [0, 0, 1, 1], [], []>} : vector<64x80xbf16>, vector<80x64xbf16>, vector<64x64xf32> -> vector<64x64xf32>
    %220 = arith.addf %213, %219 : vector<64x64xf32>
    %c1_191 = arith.constant 1 : index
    %c2_192 = arith.constant 2 : index
    %c0_193 = arith.constant 0 : index
    %221 = vector.load %arg10[%c1_191, %c2_192, %c0_193] : memref<10x10x80xf32, #tpu.memory_space<vmem>>, vector<8x8x80xf32>
    %222 = vector.shape_cast %221 : vector<8x8x80xf32> to vector<64x80xf32>
    %223 = arith.truncf %222 : vector<64x80xf32> to vector<64x80xbf16>
    %c5_194 = arith.constant 5 : index
    %c0_195 = arith.constant 0 : index
    %c0_196 = arith.constant 0 : index
    %224 = vector.load %arg6[%c5_194, %c0_195, %c0_196] : memref<9x80x64xbf16, #tpu.memory_space<vmem>>, vector<1x80x64xbf16>
    %225 = vector.shape_cast %224 : vector<1x80x64xbf16> to vector<80x64xbf16>
    %cst_197 = arith.constant dense<0.000000e+00> : vector<64x64xf32>
    %226 = tpu.matmul %223, %225, %cst_197 {dimension_numbers = #tpu.dot_dimension_numbers<[1], [0], [0], [1], [0, 0, 1, 1], [], []>} : vector<64x80xbf16>, vector<80x64xbf16>, vector<64x64xf32> -> vector<64x64xf32>
    %227 = arith.addf %220, %226 : vector<64x64xf32>
    %c2_198 = arith.constant 2 : index
    %c0_199 = arith.constant 0 : index
    %c0_200 = arith.constant 0 : index
    %228 = vector.load %arg10[%c2_198, %c0_199, %c0_200] : memref<10x10x80xf32, #tpu.memory_space<vmem>>, vector<8x8x80xf32>
    %229 = vector.shape_cast %228 : vector<8x8x80xf32> to vector<64x80xf32>
    %230 = arith.truncf %229 : vector<64x80xf32> to vector<64x80xbf16>
    %c6_201 = arith.constant 6 : index
    %c0_202 = arith.constant 0 : index
    %c0_203 = arith.constant 0 : index
    %231 = vector.load %arg6[%c6_201, %c0_202, %c0_203] : memref<9x80x64xbf16, #tpu.memory_space<vmem>>, vector<1x80x64xbf16>
    %232 = vector.shape_cast %231 : vector<1x80x64xbf16> to vector<80x64xbf16>
    %cst_204 = arith.constant dense<0.000000e+00> : vector<64x64xf32>
    %233 = tpu.matmul %230, %232, %cst_204 {dimension_numbers = #tpu.dot_dimension_numbers<[1], [0], [0], [1], [0, 0, 1, 1], [], []>} : vector<64x80xbf16>, vector<80x64xbf16>, vector<64x64xf32> -> vector<64x64xf32>
    %234 = arith.addf %227, %233 : vector<64x64xf32>
    %c2_205 = arith.constant 2 : index
    %c1_206 = arith.constant 1 : index
    %c0_207 = arith.constant 0 : index
    %235 = vector.load %arg10[%c2_205, %c1_206, %c0_207] : memref<10x10x80xf32, #tpu.memory_space<vmem>>, vector<8x8x80xf32>
    %236 = vector.shape_cast %235 : vector<8x8x80xf32> to vector<64x80xf32>
    %237 = arith.truncf %236 : vector<64x80xf32> to vector<64x80xbf16>
    %c7_208 = arith.constant 7 : index
    %c0_209 = arith.constant 0 : index
    %c0_210 = arith.constant 0 : index
    %238 = vector.load %arg6[%c7_208, %c0_209, %c0_210] : memref<9x80x64xbf16, #tpu.memory_space<vmem>>, vector<1x80x64xbf16>
    %239 = vector.shape_cast %238 : vector<1x80x64xbf16> to vector<80x64xbf16>
    %cst_211 = arith.constant dense<0.000000e+00> : vector<64x64xf32>
    %240 = tpu.matmul %237, %239, %cst_211 {dimension_numbers = #tpu.dot_dimension_numbers<[1], [0], [0], [1], [0, 0, 1, 1], [], []>} : vector<64x80xbf16>, vector<80x64xbf16>, vector<64x64xf32> -> vector<64x64xf32>
    %241 = arith.addf %234, %240 : vector<64x64xf32>
    %c2_212 = arith.constant 2 : index
    %c2_213 = arith.constant 2 : index
    %c0_214 = arith.constant 0 : index
    %242 = vector.load %arg10[%c2_212, %c2_213, %c0_214] : memref<10x10x80xf32, #tpu.memory_space<vmem>>, vector<8x8x80xf32>
    %243 = vector.shape_cast %242 : vector<8x8x80xf32> to vector<64x80xf32>
    %244 = arith.truncf %243 : vector<64x80xf32> to vector<64x80xbf16>
    %c8_215 = arith.constant 8 : index
    %c0_216 = arith.constant 0 : index
    %c0_217 = arith.constant 0 : index
    %245 = vector.load %arg6[%c8_215, %c0_216, %c0_217] : memref<9x80x64xbf16, #tpu.memory_space<vmem>>, vector<1x80x64xbf16>
    %246 = vector.shape_cast %245 : vector<1x80x64xbf16> to vector<80x64xbf16>
    %cst_218 = arith.constant dense<0.000000e+00> : vector<64x64xf32>
    %247 = tpu.matmul %244, %246, %cst_218 {dimension_numbers = #tpu.dot_dimension_numbers<[1], [0], [0], [1], [0, 0, 1, 1], [], []>} : vector<64x80xbf16>, vector<80x64xbf16>, vector<64x64xf32> -> vector<64x64xf32>
    %248 = arith.addf %241, %247 : vector<64x64xf32>
    %c0_219 = arith.constant 0 : index
    %c0_220 = arith.constant 0 : index
    %249 = vector.load %arg7[%c0_219, %c0_220] : memref<1x64xf32, #tpu.memory_space<vmem>>, vector<1x64xf32>
    %250 = vector.broadcast %249 : vector<1x64xf32> to vector<64x64xf32>
    %251 = arith.addf %248, %250 : vector<64x64xf32>
    %cst_221 = arith.constant 0.000000e+00 : f32
    %252 = vector.broadcast %cst_221 : f32 to vector<64x64xf32>
    %253 = arith.maximumf %251, %252 : vector<64x64xf32>
    %c0_222 = arith.constant 0 : index
    %c0_223 = arith.constant 0 : index
    %c0_224 = arith.constant 0 : index
    %254 = vector.load %arg8[%c0_222, %c0_223, %c0_224] : memref<1x64x64xf32, #tpu.memory_space<vmem>>, vector<1x64x64xf32>
    %255 = vector.shape_cast %254 : vector<1x64x64xf32> to vector<64x64xf32>
    %256 = vector.shape_cast %253 : vector<64x64xf32> to vector<1x64x64xf32>
    tpu.vector_store %arg8[%c0_222, %c0_223, %c0_224], %256 {strides = array<i32>} : memref<1x64x64xf32, #tpu.memory_space<vmem>>, vector<1x64x64xf32>,
    return
  }
  func.func @transform_0(%arg0: i32) -> (i32, i32, i32, i32) {
    %c0_i32 = arith.constant 0 : i32
    %c0_i32_0 = arith.constant 0 : i32
    %c0_i32_1 = arith.constant 0 : i32
    %c0_i32_2 = arith.constant 0 : i32
    return %arg0, %c0_i32, %c0_i32_0, %c0_i32_1 : i32, i32, i32, i32
  }
  func.func @transform_1(%arg0: i32) -> (i32, i32, i32) {
    %c0_i32 = arith.constant 0 : i32
    %c0_i32_0 = arith.constant 0 : i32
    %c0_i32_1 = arith.constant 0 : i32
    %c0_i32_2 = arith.constant 0 : i32
    return %c0_i32, %c0_i32_0, %c0_i32_1 : i32, i32, i32
  }
  func.func @transform_2(%arg0: i32) -> (i32, i32) {
    %c0_i32 = arith.constant 0 : i32
    %c0_i32_0 = arith.constant 0 : i32
    %c0_i32_1 = arith.constant 0 : i32
    return %c0_i32, %c0_i32_0 : i32, i32
  }
  func.func @transform_3(%arg0: i32) -> (i32, i32, i32) {
    %c0_i32 = arith.constant 0 : i32
    %c0_i32_0 = arith.constant 0 : i32
    %c0_i32_1 = arith.constant 0 : i32
    %c0_i32_2 = arith.constant 0 : i32
    return %c0_i32, %c0_i32_0, %c0_i32_1 : i32, i32, i32
  }
  func.func @transform_4(%arg0: i32) -> (i32, i32) {
    %c0_i32 = arith.constant 0 : i32
    %c0_i32_0 = arith.constant 0 : i32
    %c0_i32_1 = arith.constant 0 : i32
    return %c0_i32, %c0_i32_0 : i32, i32
  }
  func.func @transform_5(%arg0: i32) -> (i32, i32, i32) {
    %c0_i32 = arith.constant 0 : i32
    %c0_i32_0 = arith.constant 0 : i32
    %c0_i32_1 = arith.constant 0 : i32
    %c0_i32_2 = arith.constant 0 : i32
    return %c0_i32, %c0_i32_0, %c0_i32_1 : i32, i32, i32
  }
  func.func @transform_6(%arg0: i32) -> (i32, i32) {
    %c0_i32 = arith.constant 0 : i32
    %c0_i32_0 = arith.constant 0 : i32
    %c0_i32_1 = arith.constant 0 : i32
    return %c0_i32, %c0_i32_0 : i32, i32
  }
  func.func @transform_7(%arg0: i32) -> (i32, i32, i32) {
    %c0_i32 = arith.constant 0 : i32
    %c0_i32_0 = arith.constant 0 : i32
    %c0_i32_1 = arith.constant 0 : i32
    return %arg0, %c0_i32, %c0_i32_0 : i32, i32, i32
  }
}

</mosaic_0001>

<llo_original>
// kernel: tile.22
$region0: #{tile.22}
  #allocation0 [shape = 's32[1]{0}', space=sflag, size = 0x4, scoped, tag = 'scoped memory for tile.22']
  %s0 = inlined_call_operand.vmem [shape: f32[8], index: 0, kind: input, shape index: {}]
  %s1 = inlined_call_operand.vmem [shape: f32[8,1,1,8], index: 1, kind: output, shape index: {}]
  // Predicated region
  $region2: #{tile.22} parent=0 // pred_check
    _
  $region3: #{tile.22} parent=0 // pred_check_branch
    %3 = sbr.rel (0) target = $region5
  $region4: #{tile.22} parent=0 // pred_region
    _
  $region5: #{tile.22} parent=0 // pred_fallthru
    _
  %v4 = vld [vmem:[%s0] ss:$0 sm:$0xff]
  %5 = vst [vmem:[%s1] sm:$0xff] %v4

// kernel: tile.23
$region0: #{tile.23}
  %s0 = inlined_call_operand.vmem [shape: f32[8,1,1,8], index: 0, kind: input, shape index: {}]
  %s1 = inlined_call_operand.vmem [shape: f32[1,64], index: 1, kind: output, shape index: {}]
  $region1: #{tile.23} parent=0
    #allocation0 [shape = 'u8[4096]{0}', space=vmem, size = 0x1000, scoped, tag = 'scoped mem for output reshape']
    %v2 = vld [vmem:[%s0] sm:$0x1]
    %vm3 = vcmask 64512
    %4 = vst.msk [vmem:[#allocation0] sm:$0x1] %vm3, %v2
    %s5 = scalar_lea.vmem %s0, 7
    %v6 = vld [vmem:[%s5] sm:$0x1]
    %7 = vrot.lane.b32.xlu0 %v6, 56
    %v8 = vpop.permute.xlu0 %7
    %vm9 = vcmask 523712
    %10 = vst.msk [vmem:[#allocation0] sm:$0x1] %vm9, %v8
    %s11 = scalar_lea.vmem %s0, 6
    %v12 = vld [vmem:[%s11] sm:$0x1]
    %13 = vrot.lane.b32.xlu0 %v12, 48
    %v14 = vpop.permute.xlu0 %13
    %vm15 = vcmask 458112
    %16 = vst.msk [vmem:[#allocation0] sm:$0x1] %vm15, %v14
    %s17 = scalar_lea.vmem %s0, 5
    %v18 = vld [vmem:[%s17] sm:$0x1]
    %19 = vrot.lane.b32.xlu0 %v18, 40
    %v20 = vpop.permute.xlu0 %19
    %vm21 = vcmask 392512
    %22 = vst.msk [vmem:[#allocation0] sm:$0x1] %vm21, %v20
    %s23 = scalar_lea.vmem %s0, 4
    %v24 = vld [vmem:[%s23] sm:$0x1]
    %25 = vrot.lane.b32.xlu0 %v24, 32
    %v26 = vpop.permute.xlu0 %25
    %vm27 = vcmask 326912
    %28 = vst.msk [vmem:[#allocation0] sm:$0x1] %vm27, %v26
    %s29 = scalar_lea.vmem %s0, 3
    %v30 = vld [vmem:[%s29] sm:$0x1]
    %31 = vrot.lane.b32.xlu0 %v30, 24
    %v32 = vpop.permute.xlu0 %31
    %vm33 = vcmask 261312
    %34 = vst.msk [vmem:[#allocation0] sm:$0x1] %vm33, %v32
    %s35 = scalar_lea.vmem %s0, 2
    %v36 = vld [vmem:[%s35] sm:$0x1]
    %37 = vrot.lane.b32.xlu0 %v36, 16
    %v38 = vpop.permute.xlu0 %37
    %vm39 = vcmask 195712
    %40 = vst.msk [vmem:[#allocation0] sm:$0x1] %vm39, %v38
    %s41 = scalar_lea.vmem %s0, 1
    %v42 = vld [vmem:[%s41] sm:$0x1]
    %43 = vrot.lane.b32.xlu0 %v42, 8
    %v44 = vpop.permute.xlu0 %43
    %vm45 = vcmask 130112
    %46 = vst.msk [vmem:[#allocation0] sm:$0x1] %vm45, %v44
    %s48 = ssub.s32 2, 1
    %v49 = vld [vmem:[#allocation0] sm:%s48]
    %s51 = ssub.s32 2, 1
    %52 = vst [vmem:[%s1] sm:%s51] %v49

// kernel: decoder_layer_forward.1
$region0: #{decoder_layer_forward.1}
  #allocation0 [shape = 'u32[]', space=smem, size = 0x4, offset = 0x4, fixed_abs, tag = 'smem constant byte address 0x4 - core index']
  #allocation1 [shape = 'u32[72,128]{1,0:T(1,128)}', space=vmem, size = 0x9000, scoped, tag = 'internal scratch']
  #allocation2 [shape = 'f32[10,10,80]{2,1,0:T(8,128)}', space=vmem, size = 0x14000, scoped, tag = 'scratch operand']
  #allocation3 [shape = 'f32[10,10,80]{2,1,0:T(8,128)}', space=vmem, size = 0x14000, scoped, tag = 'scratch operand']
  %s0 = inlined_call_operand.vmem [shape: bf16[2,6,10,80], index: 0, kind: input, shape index: {}]
  %s1 = inlined_call_operand.vmem [shape: bf16[9,80,160], index: 1, kind: input, shape index: {}]
  %s2 = inlined_call_operand.vmem [shape: f32[1,160], index: 2, kind: input, shape index: {}]
  %s3 = inlined_call_operand.vmem [shape: bf16[9,80,80], index: 3, kind: input, shape index: {}]
  %s4 = inlined_call_operand.vmem [shape: f32[1,80], index: 4, kind: input, shape index: {}]
  %s5 = inlined_call_operand.vmem [shape: bf16[9,80,64], index: 5, kind: input, shape index: {}]
  %s6 = inlined_call_operand.vmem [shape: f32[1,64], index: 6, kind: input, shape index: {}]
  %s7 = inlined_call_operand.vmem [shape: f32[2,64,64], index: 7, kind: output, shape index: {}]
  %s8 = sld [smem:[#allocation0]]
  $region61: #{decoder_layer_forward.1} parent=0
    _
  %s10 = ssub.s32 1, %s8
  %s11 = scalar_select 0, %s10, %s8
  loop: start=0, step=1, limit=4
  $region2: #{decoder_layer_forward.1} parent=0 // loop_pre_header
    _
  $region3: #{decoder_layer_forward.1} parent=0 // loop_header
    %s13 = sphi 0, %s17
    %p14 = scmp.ge.s32.totalorder %s13, 4
    %s23 = sphi 0, %s25
    %s26 = sphi 0, %s23
    %s27 = sphi 0, %s26
    %s43 = sphi 0, %s27
    %s47 = sphi 0, %s47
    %s49 = sphi 0, %s47
    %s50 = sphi 0, %s49
    %s64 = sphi 0, %s50
    %s68 = sphi 0, %s68
    %s70 = sphi 0, %s68
    %s71 = sphi 0, %s70
    %s85 = sphi 0, %s71
    %s89 = sphi 0, %s89
    %s91 = sphi 0, %s89
    %s92 = sphi 0, %s91
    %s106 = sphi 0, %s92
    %s110 = sphi 0, %s110
    %s112 = sphi 0, %s110
    %s113 = sphi 0, %s112
    %s127 = sphi 0, %s113
    %s131 = sphi 0, %s131
    %s133 = sphi 0, %s131
    %s134 = sphi 0, %s133
    %s148 = sphi 0, %s134
    %s152 = sphi 0, %s152
    %s154 = sphi 0, %s152
    %s155 = sphi 0, %s154
    %s169 = sphi 0, %s155
    %s175 = sphi 0, %s177
    %s178 = sphi 0, %s175
    %s179 = sphi 0, %s178
    %s195 = sphi 0, %s179
  $region4: #{decoder_layer_forward.1} parent=0 // loop_header_branch
    %16 = sbr.rel (%p14) target = $region8
  $region5: #{decoder_layer_forward.1} parent=0 // loop_body
    %s18 = ssub.s32 %s13, 1
    %s19 = ssub.s32 %s13, 2
    %s20 = sadd.s32 %s13, 1
    %s21 = ssub.s32 %s13, %s20
    %p22 = scmp.eq.s32.totalorder %s21, 0
    %s24 = sadd.s32 %s23, 1
    %s25 = scalar_select %p22, %s23, %s24
    %p28 = pneg %p22
    %p29 = scmp.eq.s32.totalorder %s13, 1
    %p30 = por %p28, %p29
    %p31 = scmp.ne.s32.totalorder %s23, %s26
    %p32 = scmp.eq.s32.totalorder %s13, 0
    %p33 = por %p31, %p32
    %p34 = scmp.ne.s32.totalorder %s23, %s26
    %p35 = scmp.eq.s32.totalorder %s18, 1
    %p36 = por %p34, %p35
    %p37 = scmp.ne.s32.totalorder %s26, %s27
    %p38 = scmp.eq.s32.totalorder %s18, 0
    %p39 = por %p37, %p38
    %p40 = scmp.ne.s32.totalorder %s26, %s27
    %p41 = scmp.eq.s32.totalorder %s19, 1
    %p42 = por %p40, %p41
    %p44 = scmp.ne.s32.totalorder %s27, %s43
    %p45 = scmp.eq.s32.totalorder %s19, 0
    %p46 = por %p44, %p45
    %s48 = sadd.s32 %s47, 1
    %p51 = scmp.eq.s32.totalorder %s13, 1
    %p52 = scmp.ne.s32.totalorder %s47, %s49
    %p53 = scmp.eq.s32.totalorder %s13, 0
    %p54 = por %p52, %p53
    %p55 = scmp.ne.s32.totalorder %s47, %s49
    %p56 = scmp.eq.s32.totalorder %s18, 1
    %p57 = por %p55, %p56
    %p58 = scmp.ne.s32.totalorder %s49, %s50
    %p59 = scmp.eq.s32.totalorder %s18, 0
    %p60 = por %p58, %p59
    %p61 = scmp.ne.s32.totalorder %s49, %s50
    %p62 = scmp.eq.s32.totalorder %s19, 1
    %p63 = por %p61, %p62
    %p65 = scmp.ne.s32.totalorder %s50, %s64
    %p66 = scmp.eq.s32.totalorder %s19, 0
    %p67 = por %p65, %p66
    %s69 = sadd.s32 %s68, 1
    %p72 = scmp.eq.s32.totalorder %s13, 1
    %p73 = scmp.ne.s32.totalorder %s68, %s70
    %p74 = scmp.eq.s32.totalorder %s13, 0
    %p75 = por %p73, %p74
    %p76 = scmp.ne.s32.totalorder %s68, %s70
    %p77 = scmp.eq.s32.totalorder %s18, 1
    %p78 = por %p76, %p77
    %p79 = scmp.ne.s32.totalorder %s70, %s71
    %p80 = scmp.eq.s32.totalorder %s18, 0
    %p81 = por %p79, %p80
    %p82 = scmp.ne.s32.totalorder %s70, %s71
    %p83 = scmp.eq.s32.totalorder %s19, 1
    %p84 = por %p82, %p83
    %p86 = scmp.ne.s32.totalorder %s71, %s85
    %p87 = scmp.eq.s32.totalorder %s19, 0
    %p88 = por %p86, %p87
    %s90 = sadd.s32 %s89, 1
    %p93 = scmp.eq.s32.totalorder %s13, 1
    %p94 = scmp.ne.s32.totalorder %s89, %s91
    %p95 = scmp.eq.s32.totalorder %s13, 0
    %p96 = por %p94, %p95
    %p97 = scmp.ne.s32.totalorder %s89, %s91
    %p98 = scmp.eq.s32.totalorder %s18, 1
    %p99 = por %p97, %p98
    %p100 = scmp.ne.s32.totalorder %s91, %s92
    %p101 = scmp.eq.s32.totalorder %s18, 0
    %p102 = por %p100, %p101
    %p103 = scmp.ne.s32.totalorder %s91, %s92
    %p104 = scmp.eq.s32.totalorder %s19, 1
    %p105 = por %p103, %p104
    %p107 = scmp.ne.s32.totalorder %s92, %s106
    %p108 = scmp.eq.s32.totalorder %s19, 0
    %p109 = por %p107, %p108
    %s111 = sadd.s32 %s110, 1
    %p114 = scmp.eq.s32.totalorder %s13, 1
    %p115 = scmp.ne.s32.totalorder %s110, %s112
    %p116 = scmp.eq.s32.totalorder %s13, 0
    %p117 = por %p115, %p116
    %p118 = scmp.ne.s32.totalorder %s110, %s112
    %p119 = scmp.eq.s32.totalorder %s18, 1
    %p120 = por %p118, %p119
    %p121 = scmp.ne.s32.totalorder %s112, %s113
    %p122 = scmp.eq.s32.totalorder %s18, 0
    %p123 = por %p121, %p122
    %p124 = scmp.ne.s32.totalorder %s112, %s113
    %p125 = scmp.eq.s32.totalorder %s19, 1
    %p126 = por %p124, %p125
    %p128 = scmp.ne.s32.totalorder %s113, %s127
    %p129 = scmp.eq.s32.totalorder %s19, 0
    %p130 = por %p128, %p129
    %s132 = sadd.s32 %s131, 1
    %p135 = scmp.eq.s32.totalorder %s13, 1
    %p136 = scmp.ne.s32.totalorder %s131, %s133
    %p137 = scmp.eq.s32.totalorder %s13, 0
    %p138 = por %p136, %p137
    %p139 = scmp.ne.s32.totalorder %s131, %s133
    %p140 = scmp.eq.s32.totalorder %s18, 1
    %p141 = por %p139, %p140
    %p142 = scmp.ne.s32.totalorder %s133, %s134
    %p143 = scmp.eq.s32.totalorder %s18, 0
    %p144 = por %p142, %p143
    %p145 = scmp.ne.s32.totalorder %s133, %s134
    %p146 = scmp.eq.s32.totalorder %s19, 1
    %p147 = por %p145, %p146
    %p149 = scmp.ne.s32.totalorder %s134, %s148
    %p150 = scmp.eq.s32.totalorder %s19, 0
    %p151 = por %p149, %p150
    %s153 = sadd.s32 %s152, 1
    %p156 = scmp.eq.s32.totalorder %s13, 1
    %p157 = scmp.ne.s32.totalorder %s152, %s154
    %p158 = scmp.eq.s32.totalorder %s13, 0
    %p159 = por %p157, %p158
    %p160 = scmp.ne.s32.totalorder %s152, %s154
    %p161 = scmp.eq.s32.totalorder %s18, 1
    %p162 = por %p160, %p161
    %p163 = scmp.ne.s32.totalorder %s154, %s155
    %p164 = scmp.eq.s32.totalorder %s18, 0
    %p165 = por %p163, %p164
    %p166 = scmp.ne.s32.totalorder %s154, %s155
    %p167 = scmp.eq.s32.totalorder %s19, 1
    %p168 = por %p166, %p167
    %p170 = scmp.ne.s32.totalorder %s155, %s169
    %p171 = scmp.eq.s32.totalorder %s19, 0
    %p172 = por %p170, %p171
    %s173 = ssub.s32 %s13, %s20
    %p174 = scmp.eq.s32.totalorder %s173, 0
    %s176 = sadd.s32 %s175, 1
    %s177 = scalar_select %p174, %s175, %s176
    %p180 = pneg %p174
    %p181 = scmp.eq.s32.totalorder %s13, 1
    %p182 = por %p180, %p181
    %p183 = scmp.ne.s32.totalorder %s175, %s178
    %p184 = scmp.eq.s32.totalorder %s13, 0
    %p185 = por %p183, %p184
    %p186 = scmp.ne.s32.totalorder %s175, %s178
    %p187 = scmp.eq.s32.totalorder %s18, 1
    %p188 = por %p186, %p187
    %p189 = scmp.ne.s32.totalorder %s178, %s179
    %p190 = scmp.eq.s32.totalorder %s18, 0
    %p191 = por %p189, %p190
    %p192 = scmp.ne.s32.totalorder %s178, %s179
    %p193 = scmp.eq.s32.totalorder %s19, 1
    %p194 = por %p192, %p193
    %p196 = scmp.ne.s32.totalorder %s179, %s195
    %p197 = scmp.eq.s32.totalorder %s19, 0
    %p198 = por %p196, %p197
    %p199 = scmp.le.s32.totalorder 1, %s13
    %p200 = scmp.lt.s32.totalorder %s13, 3
    %p201 = pnand %p199, %p200
    %p202 = pneg %p201
    // Predicated region
    $region9: #{decoder_layer_forward.1} parent=5 // pred_check
      _
    $region10: #{decoder_layer_forward.1} parent=5 // pred_check_branch
      %204 = sbr.rel (%p201) target = $region12
    $region11: #{decoder_layer_forward.1} parent=5 // pred_region
      %s205 = ssub.s32 %s13, 1
      // Predicated region
      $region13: #{decoder_layer_forward.1} parent=11 // pred_check
        %p206 = pneg %p60
      $region14: #{decoder_layer_forward.1} parent=11 // pred_check_branch
        %208 = sbr.rel (%p206) target = $region16
      $region15: #{decoder_layer_forward.1} parent=11 // pred_region
        _
      $region16: #{decoder_layer_forward.1} parent=11 // pred_fallthru
        _
      // Predicated region
      $region17: #{decoder_layer_forward.1} parent=11 // pred_check
        %p209 = pneg %p81
      $region18: #{decoder_layer_forward.1} parent=11 // pred_check_branch
        %211 = sbr.rel (%p209) target = $region20
      $region19: #{decoder_layer_forward.1} parent=11 // pred_region
        _
      $region20: #{decoder_layer_forward.1} parent=11 // pred_fallthru
        _
      // Predicated region
      $region21: #{decoder_layer_forward.1} parent=11 // pred_check
        %p212 = pneg %p102
      $region22: #{decoder_layer_forward.1} parent=11 // pred_check_branch
        %214 = sbr.rel (%p212) target = $region24
      $region23: #{decoder_layer_forward.1} parent=11 // pred_region
        _
      $region24: #{decoder_layer_forward.1} parent=11 // pred_fallthru
        _
      // Predicated region
      $region25: #{decoder_layer_forward.1} parent=11 // pred_check
        %p215 = pneg %p123
      $region26: #{decoder_layer_forward.1} parent=11 // pred_check_branch
        %217 = sbr.rel (%p215) target = $region28
      $region27: #{decoder_layer_forward.1} parent=11 // pred_region
        _
      $region28: #{decoder_layer_forward.1} parent=11 // pred_fallthru
        _
      // Predicated region
      $region29: #{decoder_layer_forward.1} parent=11 // pred_check
        %p218 = pneg %p144
      $region30: #{decoder_layer_forward.1} parent=11 // pred_check_branch
        %220 = sbr.rel (%p218) target = $region32
      $region31: #{decoder_layer_forward.1} parent=11 // pred_region
        _
      $region32: #{decoder_layer_forward.1} parent=11 // pred_fallthru
        _
      // Predicated region
      $region33: #{decoder_layer_forward.1} parent=11 // pred_check
        %p221 = pneg %p165
      $region34: #{decoder_layer_forward.1} parent=11 // pred_check_branch
        %223 = sbr.rel (%p221) target = $region36
      $region35: #{decoder_layer_forward.1} parent=11 // pred_region
        _
      $region36: #{decoder_layer_forward.1} parent=11 // pred_fallthru
        _
    $region12: #{decoder_layer_forward.1} parent=5 // pred_fallthru
      _
    %p224 = scmp.lt.s32.totalorder %s13, 2
    // Predicated region
    $region37: #{decoder_layer_forward.1} parent=5 // pred_check
      %p225 = pneg %p224
    $region38: #{decoder_layer_forward.1} parent=5 // pred_check_branch
      %227 = sbr.rel (%p225) target = $region40
    $region39: #{decoder_layer_forward.1} parent=5 // pred_region
      // Predicated region
      $region41: #{decoder_layer_forward.1} parent=39 // pred_check
        %p228 = pneg %p33
      $region42: #{decoder_layer_forward.1} parent=39 // pred_check_branch
        %230 = sbr.rel (%p228) target = $region44
      $region43: #{decoder_layer_forward.1} parent=39 // pred_region
        %p231 = scmp.lt.s32.totalorder %s13, 1
        %s232 = scalar_select %p231, %s13, 1
        %s233 = smul.addr %s232, 12
        %s234 = smul.addr %s233, 4
        %s235 = scalar_lea.vmem %s0, %s234
      $region44: #{decoder_layer_forward.1} parent=39 // pred_fallthru
        _
    $region40: #{decoder_layer_forward.1} parent=5 // pred_fallthru
      _
    %p236 = scmp.le.s32.totalorder 1, %s13
    %p237 = scmp.lt.s32.totalorder %s13, 3
    %p238 = pnand %p236, %p237
    %p239 = pneg %p238
    // Predicated region
    $region45: #{decoder_layer_forward.1} parent=5 // pred_check
      _
    $region46: #{decoder_layer_forward.1} parent=5 // pred_check_branch
      %241 = sbr.rel (%p238) target = $region48
    $region47: #{decoder_layer_forward.1} parent=5 // pred_region
      %s242 = ssub.s32 %s13, 1
      %p243 = scmp.lt.s32.totalorder %s18, 1
      %s244 = scalar_select %p243, %s18, 1
      %s245 = smul.addr %s244, 12
      %s246 = smul.addr %s245, 4
      %s247 = scalar_lea.vmem %s0, %s246
      %p248 = pneg %p39
      %p249 = pneg %p36
      %p250 = pneg %p60
      %p251 = pneg %p57
      %p252 = pneg %p81
      %p253 = pneg %p78
      %p254 = pneg %p102
      %p255 = pneg %p99
      %p256 = pneg %p123
      %p257 = pneg %p120
      %p258 = pneg %p144
      %p259 = pneg %p141
      %p260 = pneg %p165
      %p261 = pneg %p162
      %p262 = pneg %p191
      %p263 = pneg %p188
      %p264 = scmp.lt.s32.totalorder %s18, 1
      %s265 = scalar_select %p264, %s18, 1
      %s266 = smul.addr %s265, 8
      %s267 = smul.addr %s266, 8
      %s268 = scalar_lea.vmem %s7, %s267
      %p269 = scmp.lt.s32.totalorder %s18, 1
      %s270 = scalar_select %p269, %s18, 1
      %s271 = smul.addr %s270, 12
      %s272 = smul.addr %s271, 4
      %s273 = scalar_lea.vmem %s0, %s272
      %p274 = scmp.lt.s32.totalorder %s18, 1
      %s275 = scalar_select %p274, %s18, 1
      %s276 = smul.addr %s275, 8
      %s277 = smul.addr %s276, 8
      %s278 = scalar_lea.vmem %s7, %s277
      %vm280 = vcmask 654336
      %281 = vst.msk [vmem:[#allocation2] sm:$0xff] %vm280, 0.0
      %vm282 = vcmask 648192
      %283 = vst.msk [vmem:[#allocation2 + $0x8] sm:$0x3] %vm282, 0.0
      %s284 = scalar_lea.vmem [#allocation2], 144
      %285 = vst.msk [vmem:[%s284] sm:$0xff] %vm280, 0.0
      %286 = vst.msk [vmem:[%s284 + $0x8] sm:$0x3] %vm282, 0.0
      %vm287 = vcmask 647168
      %288 = vst.msk [vmem:[#allocation2] sm:$0x1] %vm287, 0.0
      %289 = vst.msk [vmem:[#allocation2 + $0x10] sm:$0x1] %vm287, 0.0
      %290 = vst.msk [vmem:[#allocation2 + $0x20] sm:$0x1] %vm287, 0.0
      %291 = vst.msk [vmem:[#allocation2 + $0x30] sm:$0x1] %vm287, 0.0
      %292 = vst.msk [vmem:[#allocation2 + $0x40] sm:$0x1] %vm287, 0.0
      %293 = vst.msk [vmem:[#allocation2 + $0x50] sm:$0x1] %vm287, 0.0
      %294 = vst.msk [vmem:[#allocation2 + $0x60] sm:$0x1] %vm287, 0.0
      %295 = vst.msk [vmem:[#allocation2 + $0x70] sm:$0x1] %vm287, 0.0
      %296 = vst.msk [vmem:[#allocation2 + $0x80] sm:$0x1] %vm287, 0.0
      %297 = vst.msk [vmem:[#allocation2 + $0x90] sm:$0x1] %vm287, 0.0
      %298 = vst.msk [vmem:[#allocation2 + $0x9] sm:$0x1] %vm287, 0.0
      %299 = vst.msk [vmem:[#allocation2 + $0x19] sm:$0x1] %vm287, 0.0
      %300 = vst.msk [vmem:[#allocation2 + $0x29] sm:$0x1] %vm287, 0.0
      %301 = vst.msk [vmem:[#allocation2 + $0x39] sm:$0x1] %vm287, 0.0
      %302 = vst.msk [vmem:[#allocation2 + $0x49] sm:$0x1] %vm287, 0.0
      %303 = vst.msk [vmem:[#allocation2 + $0x59] sm:$0x1] %vm287, 0.0
      %304 = vst.msk [vmem:[#allocation2 + $0x69] sm:$0x1] %vm287, 0.0
      %305 = vst.msk [vmem:[#allocation2 + $0x79] sm:$0x1] %vm287, 0.0
      %306 = vst.msk [vmem:[#allocation2 + $0x89] sm:$0x1] %vm287, 0.0
      %307 = vst.msk [vmem:[#allocation2 + $0x99] sm:$0x1] %vm287, 0.0
      %308 = vst.msk [vmem:[#allocation3] sm:$0xff] %vm280, 0.0
      %309 = vst.msk [vmem:[#allocation3 + $0x8] sm:$0x3] %vm282, 0.0
      %s310 = scalar_lea.vmem [#allocation3], 144
      %311 = vst.msk [vmem:[%s310] sm:$0xff] %vm280, 0.0
      %312 = vst.msk [vmem:[%s310 + $0x8] sm:$0x3] %vm282, 0.0
      %313 = vst.msk [vmem:[#allocation3] sm:$0x1] %vm287, 0.0
      %314 = vst.msk [vmem:[#allocation3 + $0x10] sm:$0x1] %vm287, 0.0
      %315 = vst.msk [vmem:[#allocation3 + $0x20] sm:$0x1] %vm287, 0.0
      %316 = vst.msk [vmem:[#allocation3 + $0x30] sm:$0x1] %vm287, 0.0
      %317 = vst.msk [vmem:[#allocation3 + $0x40] sm:$0x1] %vm287, 0.0
      %318 = vst.msk [vmem:[#allocation3 + $0x50] sm:$0x1] %vm287, 0.0
      %319 = vst.msk [vmem:[#allocation3 + $0x60] sm:$0x1] %vm287, 0.0
      %320 = vst.msk [vmem:[#allocation3 + $0x70] sm:$0x1] %vm287, 0.0
      %321 = vst.msk [vmem:[#allocation3 + $0x80] sm:$0x1] %vm287, 0.0
      %322 = vst.msk [vmem:[#allocation3 + $0x90] sm:$0x1] %vm287, 0.0
      %323 = vst.msk [vmem:[#allocation3 + $0x9] sm:$0x1] %vm287, 0.0
      %324 = vst.msk [vmem:[#allocation3 + $0x19] sm:$0x1] %vm287, 0.0
      %325 = vst.msk [vmem:[#allocation3 + $0x29] sm:$0x1] %vm287, 0.0
      %326 = vst.msk [vmem:[#allocation3 + $0x39] sm:$0x1] %vm287, 0.0
      %327 = vst.msk [vmem:[#allocation3 + $0x49] sm:$0x1] %vm287, 0.0
      %328 = vst.msk [vmem:[#allocation3 + $0x59] sm:$0x1] %vm287, 0.0
      %329 = vst.msk [vmem:[#allocation3 + $0x69] sm:$0x1] %vm287, 0.0
      %330 = vst.msk [vmem:[#allocation3 + $0x79] sm:$0x1] %vm287, 0.0
      %331 = vst.msk [vmem:[#allocation3 + $0x89] sm:$0x1] %vm287, 0.0
      %332 = vst.msk [vmem:[#allocation3 + $0x99] sm:$0x1] %vm287, 0.0
      %v333 = vld [vmem:[%s273] sm:$0xf]
      %v334 = vld [vmem:[%s273 + $0x4] sm:$0x1]
      %v335 = vld [vmem:[%s273 + $0x8] sm:$0xf]
      %v336 = vld [vmem:[%s273 + $0xc] sm:$0x1]
      %v337 = vld [vmem:[%s273 + $0x10] sm:$0xf]
      %v338 = vld [vmem:[%s273 + $0x14] sm:$0x1]
      %v339 = vld [vmem:[%s273 + $0x18] sm:$0xf]
      %v340 = vld [vmem:[%s273 + $0x1c] sm:$0x1]
      %v341 = vld [vmem:[%s273 + $0x20] sm:$0xf]
      %v342 = vld [vmem:[%s273 + $0x24] sm:$0x1]
      %v343 = vld [vmem:[%s273 + $0x28] sm:$0xf]
      %v344 = vld [vmem:[%s273 + $0x2c] sm:$0x1]
      %v345 = vld [vmem:[%s1] sm:$0xff]
      %v346 = vld [vmem:[%s1 + $0x8] sm:$0xff]
      %v347 = vld [vmem:[%s1 + $0x10] sm:$0xff]
      %v348 = vld [vmem:[%s1 + $0x18] sm:$0xff]
      %v349 = vld [vmem:[%s1 + $0x20] sm:$0xff]
      %v350 = vld [vmem:[%s1 + $0x28] sm:$0xff]
      %v351 = vld [vmem:[%s1 + $0x30] sm:$0xff]
      %v352 = vld [vmem:[%s1 + $0x38] sm:$0xff]
      %v353 = vld [vmem:[%s1 + $0x40] sm:$0xff]
      %v354 = vld [vmem:[%s1 + $0x48] sm:$0xff]
      %vm355 = vsmask.f32 3328
      %vm356 = vsmask.f32 7440
      %vm357 = vmor %vm355, %vm356
      %v359 = vshrl.u32 %v333, 16
      %v361 = vrot.slane %v359, 4
      %v362 = vshll.u32 %v333, 16
      %v364 = vrot.slane %v362, 5
      %v365 = vor.u32 %v361, %v364
      %v366 = vrot.slane %v365, 4
      %v368 = vshll.u32 %v334, 16
      %v370 = vrot.slane %v368, 5
      %v371 = vsel %vm357, %v366, %v370
      %v373 = vshrl.u32 %v335, 16
      %v375 = vrot.slane %v373, 4
      %v376 = vshll.u32 %v335, 16
      %v378 = vrot.slane %v376, 5
      %v379 = vor.u32 %v375, %v378
      %v380 = vrot.slane %v379, 4
      %v382 = vshll.u32 %v336, 16
      %v384 = vrot.slane %v382, 5
      %v385 = vsel %vm357, %v380, %v384
      %v387 = vshrl.u32 %v337, 16
      %v389 = vrot.slane %v387, 4
      %v390 = vshll.u32 %v337, 16
      %v392 = vrot.slane %v390, 5
      %v393 = vor.u32 %v389, %v392
      %v394 = vrot.slane %v393, 4
      %v396 = vshll.u32 %v338, 16
      %v398 = vrot.slane %v396, 5
      %v399 = vsel %vm357, %v394, %v398
      %v401 = vshrl.u32 %v339, 16
      %v403 = vrot.slane %v401, 4
      %v404 = vshll.u32 %v339, 16
      %v406 = vrot.slane %v404, 5
      %v407 = vor.u32 %v403, %v406
      %v408 = vrot.slane %v407, 4
      %v410 = vshll.u32 %v340, 16
      %v412 = vrot.slane %v410, 5
      %v413 = vsel %vm357, %v408, %v412
      %s414 = scalar_lea.vmem %s1, 80
      %v415 = vld [vmem:[%s414] sm:$0xff]
      %v416 = vld [vmem:[%s414 + $0x8] sm:$0xff]
      %v417 = vld [vmem:[%s414 + $0x10] sm:$0xff]
      %v418 = vld [vmem:[%s414 + $0x18] sm:$0xff]
      %v419 = vld [vmem:[%s414 + $0x20] sm:$0xff]
      %v420 = vld [vmem:[%s414 + $0x28] sm:$0xff]
      %v421 = vld [vmem:[%s414 + $0x30] sm:$0xff]
      %v422 = vld [vmem:[%s414 + $0x38] sm:$0xff]
      %v423 = vld [vmem:[%s414 + $0x40] sm:$0xff]
      %v424 = vld [vmem:[%s414 + $0x48] sm:$0xff]
      %v425 = vunpack.c.l.b16 %v371
      %v426 = vunpack.c.l.b16 %v385
      %v427 = vunpack.c.l.b16 %v399
      %v428 = vunpack.c.l.b16 %v413
      %v429 = vpack.c.b16 %v426, %v425
      %v430 = vpack.c.b16 %v428, %v427
      %v441 = vunpack.c.l.b16 %v415
      %v442 = vunpack.c.h.b16 %v415
      %v443 = vunpack.c.l.b16 %v416
      %v444 = vunpack.c.h.b16 %v416
      %v445 = vunpack.c.l.b16 %v417
      %v446 = vunpack.c.h.b16 %v417
      %v447 = vunpack.c.l.b16 %v418
      %v448 = vunpack.c.h.b16 %v418
      %v449 = vunpack.c.l.b16 %v419
      %v450 = vunpack.c.h.b16 %v419
      %v451 = vunpack.c.l.b16 %v420
      %v452 = vunpack.c.h.b16 %v420
      %v453 = vunpack.c.l.b16 %v421
      %v454 = vunpack.c.h.b16 %v421
      %v455 = vunpack.c.l.b16 %v422
      %v456 = vunpack.c.h.b16 %v422
      %v457 = vunpack.c.l.b16 %v423
      %v458 = vunpack.c.h.b16 %v423
      %v459 = vunpack.c.l.b16 %v424
      %v460 = vunpack.c.h.b16 %v424
      %v461 = vpack.c.b16 %v443, %v441
      %v462 = vpack.c.b16 %v444, %v442
      %v463 = vpack.c.b16 %v447, %v445
      %v464 = vpack.c.b16 %v448, %v446
      %v465 = vpack.c.b16 %v451, %v449
      %v466 = vpack.c.b16 %v452, %v450
      %v467 = vpack.c.b16 %v455, %v453
      %v468 = vpack.c.b16 %v456, %v454
      %v469 = vpack.c.b16 %v459, %v457
      %v470 = vpack.c.b16 %v460, %v458
      %v482 = vsel %vm280, %v429, 0
      %v485 = vsel %vm280, %v430, 0
      %487 = vmatpush.bf16.msra.mxu0 0
      %488 = vmatpush.bf16.msra.mxu0 0
      %489 = vmatpush.bf16.msra.mxu0 0
      %490 = vmatpush.bf16.msra.mxu0 %v469
      %491 = vmatpush.bf16.msra.mxu0 %v467
      %492 = vmatpush.bf16.msra.mxu0 %v465
      %493 = vmatpush.bf16.msra.mxu0 %v463
      %494 = vmatpush.bf16.msra.mxu0 %v461
      %495 = vmatmul.bf16.gmra.mxu0 %v482
      %v496 = vpop.f32.mrf.mxu0
      %v497 = vadd.f32 0.0, %v496
      %v498 = vpop.f32.mrf.mxu0
      %v499 = vadd.f32 0.0, %v498
      %500 = vmatmul.bf16.gmra.mxu0 %v485
      %v501 = vpop.f32.mrf.mxu0
      %v502 = vadd.f32 0.0, %v501
      %v503 = vpop.f32.mrf.mxu0
      %v504 = vadd.f32 0.0, %v503
      %505 = vdwg.mxu0
      %506 = vmatpush.bf16.msra.mxu0 0
      %507 = vmatpush.bf16.msra.mxu0 0
      %508 = vmatpush.bf16.msra.mxu0 0
      %509 = vmatpush.bf16.msra.mxu0 %v470
      %510 = vmatpush.bf16.msra.mxu0 %v468
      %511 = vmatpush.bf16.msra.mxu0 %v466
      %512 = vmatpush.bf16.msra.mxu0 %v464
      %513 = vmatpush.bf16.msra.mxu0 %v462
      %514 = vmatmul.bf16.gmra.mxu0 %v482
      %v515 = vpop.f32.mrf.mxu0
      %v516 = vadd.f32 0.0, %v515
      %v517 = vpop.f32.mrf.mxu0
      %v518 = vadd.f32 0.0, %v517
      %519 = vmatmul.bf16.gmra.mxu0 %v485
      %v520 = vpop.f32.mrf.mxu0
      %v521 = vadd.f32 0.0, %v520
      %v522 = vpop.f32.mrf.mxu0
      %v523 = vadd.f32 0.0, %v522
      %524 = vdwg.mxu0
      %v529 = vunpack.c.l.b16 %v333
      %v530 = vunpack.c.l.b16 %v335
      %v531 = vunpack.c.l.b16 %v337
      %v532 = vunpack.c.l.b16 %v339
      %v533 = vpack.c.b16 %v530, %v529
      %v534 = vpack.c.b16 %v532, %v531
      %v545 = vunpack.c.l.b16 %v345
      %v546 = vunpack.c.h.b16 %v345
      %v547 = vunpack.c.l.b16 %v346
      %v548 = vunpack.c.h.b16 %v346
      %v549 = vunpack.c.l.b16 %v347
      %v550 = vunpack.c.h.b16 %v347
      %v551 = vunpack.c.l.b16 %v348
      %v552 = vunpack.c.h.b16 %v348
      %v553 = vunpack.c.l.b16 %v349
      %v554 = vunpack.c.h.b16 %v349
      %v555 = vunpack.c.l.b16 %v350
      %v556 = vunpack.c.h.b16 %v350
      %v557 = vunpack.c.l.b16 %v351
      %v558 = vunpack.c.h.b16 %v351
      %v559 = vunpack.c.l.b16 %v352
      %v560 = vunpack.c.h.b16 %v352
      %v561 = vunpack.c.l.b16 %v353
      %v562 = vunpack.c.h.b16 %v353
      %v563 = vunpack.c.l.b16 %v354
      %v564 = vunpack.c.h.b16 %v354
      %v565 = vpack.c.b16 %v547, %v545
      %v566 = vpack.c.b16 %v548, %v546
      %v567 = vpack.c.b16 %v551, %v549
      %v568 = vpack.c.b16 %v552, %v550
      %v569 = vpack.c.b16 %v555, %v553
      %v570 = vpack.c.b16 %v556, %v554
      %v571 = vpack.c.b16 %v559, %v557
      %v572 = vpack.c.b16 %v560, %v558
      %v573 = vpack.c.b16 %v563, %v561
      %v574 = vpack.c.b16 %v564, %v562
      %v586 = vsel %vm280, %v533, 0
      %v589 = vsel %vm280, %v534, 0
      %591 = vmatpush.bf16.msra.mxu0 0
      %592 = vmatpush.bf16.msra.mxu0 0
      %593 = vmatpush.bf16.msra.mxu0 0
      %594 = vmatpush.bf16.msra.mxu0 %v573
      %595 = vmatpush.bf16.msra.mxu0 %v571
      %596 = vmatpush.bf16.msra.mxu0 %v569
      %597 = vmatpush.bf16.msra.mxu0 %v567
      %598 = vmatpush.bf16.msra.mxu0 %v565
      %599 = vmatmul.bf16.gmra.mxu0 %v586
      %v600 = vpop.f32.mrf.mxu0
      %v601 = vadd.f32 %v497, %v600
      %v602 = vpop.f32.mrf.mxu0
      %v603 = vadd.f32 %v499, %v602
      %604 = vmatmul.bf16.gmra.mxu0 %v589
      %v605 = vpop.f32.mrf.mxu0
      %v606 = vadd.f32 %v502, %v605
      %v607 = vpop.f32.mrf.mxu0
      %v608 = vadd.f32 %v504, %v607
      %609 = vdwg.mxu0
      %610 = vmatpush.bf16.msra.mxu0 0
      %611 = vmatpush.bf16.msra.mxu0 0
      %612 = vmatpush.bf16.msra.mxu0 0
      %613 = vmatpush.bf16.msra.mxu0 %v574
      %614 = vmatpush.bf16.msra.mxu0 %v572
      %615 = vmatpush.bf16.msra.mxu0 %v570
      %616 = vmatpush.bf16.msra.mxu0 %v568
      %617 = vmatpush.bf16.msra.mxu0 %v566
      %618 = vmatmul.bf16.gmra.mxu0 %v586
      %v619 = vpop.f32.mrf.mxu0
      %v620 = vadd.f32 %v516, %v619
      %v621 = vpop.f32.mrf.mxu0
      %v622 = vadd.f32 %v518, %v621
      %623 = vmatmul.bf16.gmra.mxu0 %v589
      %v624 = vpop.f32.mrf.mxu0
      %v625 = vadd.f32 %v521, %v624
      %v626 = vpop.f32.mrf.mxu0
      %v627 = vadd.f32 %v523, %v626
      %628 = vdwg.mxu0
      %vm633 = vcmask 1042432
      %vm634 = vcmask 1046532
      %vm635 = vmor %vm633, %vm634
      %v636 = vrot.slane %v333, 5
      %v637 = vrot.slane %v636, 4
      %v638 = vrot.slane %v334, 5
      %v639 = vsel %vm635, %v637, %v638
      %v640 = vrot.slane %v335, 5
      %v641 = vrot.slane %v640, 4
      %v642 = vrot.slane %v336, 5
      %v643 = vsel %vm635, %v641, %v642
      %v644 = vrot.slane %v337, 5
      %v645 = vrot.slane %v644, 4
      %v646 = vrot.slane %v338, 5
      %v647 = vsel %vm635, %v645, %v646
      %v648 = vrot.slane %v339, 5
      %v649 = vrot.slane %v648, 4
      %v650 = vrot.slane %v340, 5
      %v651 = vsel %vm635, %v649, %v650
      %s652 = scalar_lea.vmem %s1, 160
      %v653 = vld [vmem:[%s652] sm:$0xff]
      %v654 = vld [vmem:[%s652 + $0x8] sm:$0xff]
      %v655 = vld [vmem:[%s652 + $0x10] sm:$0xff]
      %v656 = vld [vmem:[%s652 + $0x18] sm:$0xff]
      %v657 = vld [vmem:[%s652 + $0x20] sm:$0xff]
      %v658 = vld [vmem:[%s652 + $0x28] sm:$0xff]
      %v659 = vld [vmem:[%s652 + $0x30] sm:$0xff]
      %v660 = vld [vmem:[%s652 + $0x38] sm:$0xff]
      %v661 = vld [vmem:[%s652 + $0x40] sm:$0xff]
      %v662 = vld [vmem:[%s652 + $0x48] sm:$0xff]
      %v663 = vunpack.c.l.b16 %v639
      %v664 = vunpack.c.l.b16 %v643
      %v665 = vunpack.c.l.b16 %v647
      %v666 = vunpack.c.l.b16 %v651
      %v667 = vpack.c.b16 %v664, %v663
      %v668 = vpack.c.b16 %v666, %v665
      %v679 = vunpack.c.l.b16 %v653
      %v680 = vunpack.c.h.b16 %v653
      %v681 = vunpack.c.l.b16 %v654
      %v682 = vunpack.c.h.b16 %v654
      %v683 = vunpack.c.l.b16 %v655
      %v684 = vunpack.c.h.b16 %v655
      %v685 = vunpack.c.l.b16 %v656
      %v686 = vunpack.c.h.b16 %v656
      %v687 = vunpack.c.l.b16 %v657
      %v688 = vunpack.c.h.b16 %v657
      %v689 = vunpack.c.l.b16 %v658
      %v690 = vunpack.c.h.b16 %v658
      %v691 = vunpack.c.l.b16 %v659
      %v692 = vunpack.c.h.b16 %v659
      %v693 = vunpack.c.l.b16 %v660
      %v694 = vunpack.c.h.b16 %v660
      %v695 = vunpack.c.l.b16 %v661
      %v696 = vunpack.c.h.b16 %v661
      %v697 = vunpack.c.l.b16 %v662
      %v698 = vunpack.c.h.b16 %v662
      %v699 = vpack.c.b16 %v681, %v679
      %v700 = vpack.c.b16 %v682, %v680
      %v701 = vpack.c.b16 %v685, %v683
      %v702 = vpack.c.b16 %v686, %v684
      %v703 = vpack.c.b16 %v689, %v687
      %v704 = vpack.c.b16 %v690, %v688
      %v705 = vpack.c.b16 %v693, %v691
      %v706 = vpack.c.b16 %v694, %v692
      %v707 = vpack.c.b16 %v697, %v695
      %v708 = vpack.c.b16 %v698, %v696
      %v720 = vsel %vm280, %v667, 0
      %v723 = vsel %vm280, %v668, 0
      %725 = vmatpush.bf16.msra.mxu0 0
      %726 = vmatpush.bf16.msra.mxu0 0
      %727 = vmatpush.bf16.msra.mxu0 0
      %728 = vmatpush.bf16.msra.mxu0 %v707
      %729 = vmatpush.bf16.msra.mxu0 %v705
      %730 = vmatpush.bf16.msra.mxu0 %v703
      %731 = vmatpush.bf16.msra.mxu0 %v701
      %732 = vmatpush.bf16.msra.mxu0 %v699
      %733 = vmatmul.bf16.gmra.mxu0 %v720
      %v734 = vpop.f32.mrf.mxu0
      %v735 = vadd.f32 0.0, %v734
      %v736 = vpop.f32.mrf.mxu0
      %v737 = vadd.f32 0.0, %v736
      %738 = vmatmul.bf16.gmra.mxu0 %v723
      %v739 = vpop.f32.mrf.mxu0
      %v740 = vadd.f32 0.0, %v739
      %v741 = vpop.f32.mrf.mxu0
      %v742 = vadd.f32 0.0, %v741
      %743 = vdwg.mxu0
      %744 = vmatpush.bf16.msra.mxu0 0
      %745 = vmatpush.bf16.msra.mxu0 0
      %746 = vmatpush.bf16.msra.mxu0 0
      %747 = vmatpush.bf16.msra.mxu0 %v708
      %748 = vmatpush.bf16.msra.mxu0 %v706
      %749 = vmatpush.bf16.msra.mxu0 %v704
      %750 = vmatpush.bf16.msra.mxu0 %v702
      %751 = vmatpush.bf16.msra.mxu0 %v700
      %752 = vmatmul.bf16.gmra.mxu0 %v720
      %v753 = vpop.f32.mrf.mxu0
      %v754 = vadd.f32 0.0, %v753
      %v755 = vpop.f32.mrf.mxu0
      %v756 = vadd.f32 0.0, %v755
      %757 = vmatmul.bf16.gmra.mxu0 %v723
      %v758 = vpop.f32.mrf.mxu0
      %v759 = vadd.f32 0.0, %v758
      %v760 = vpop.f32.mrf.mxu0
      %v761 = vadd.f32 0.0, %v760
      %762 = vdwg.mxu0
      %v763 = vadd.f32 %v601, %v735
      %v764 = vadd.f32 %v620, %v754
      %v765 = vadd.f32 %v603, %v737
      %v766 = vadd.f32 %v622, %v756
      %v767 = vadd.f32 %v606, %v740
      %v768 = vadd.f32 %v625, %v759
      %v769 = vadd.f32 %v608, %v742
      %v770 = vadd.f32 %v627, %v761
      %s771 = scalar_lea.vmem %s1, 240
      %v772 = vld [vmem:[%s771] sm:$0xff]
      %v773 = vld [vmem:[%s771 + $0x8] sm:$0xff]
      %v774 = vld [vmem:[%s771 + $0x10] sm:$0xff]
      %v775 = vld [vmem:[%s771 + $0x18] sm:$0xff]
      %v776 = vld [vmem:[%s771 + $0x20] sm:$0xff]
      %v777 = vld [vmem:[%s771 + $0x28] sm:$0xff]
      %v778 = vld [vmem:[%s771 + $0x30] sm:$0xff]
      %v779 = vld [vmem:[%s771 + $0x38] sm:$0xff]
      %v780 = vld [vmem:[%s771 + $0x40] sm:$0xff]
      %v781 = vld [vmem:[%s771 + $0x48] sm:$0xff]
      %v783 = vunpack.c.l.b16 %v341
      %v784 = vpack.c.b16 %v531, %v530
      %v785 = vpack.c.b16 %v783, %v532
      %v796 = vunpack.c.l.b16 %v772
      %v797 = vunpack.c.h.b16 %v772
      %v798 = vunpack.c.l.b16 %v773
      %v799 = vunpack.c.h.b16 %v773
      %v800 = vunpack.c.l.b16 %v774
      %v801 = vunpack.c.h.b16 %v774
      %v802 = vunpack.c.l.b16 %v775
      %v803 = vunpack.c.h.b16 %v775
      %v804 = vunpack.c.l.b16 %v776
      %v805 = vunpack.c.h.b16 %v776
      %v806 = vunpack.c.l.b16 %v777
      %v807 = vunpack.c.h.b16 %v777
      %v808 = vunpack.c.l.b16 %v778
      %v809 = vunpack.c.h.b16 %v778
      %v810 = vunpack.c.l.b16 %v779
      %v811 = vunpack.c.h.b16 %v779
      %v812 = vunpack.c.l.b16 %v780
      %v813 = vunpack.c.h.b16 %v780
      %v814 = vunpack.c.l.b16 %v781
      %v815 = vunpack.c.h.b16 %v781
      %v816 = vpack.c.b16 %v798, %v796
      %v817 = vpack.c.b16 %v799, %v797
      %v818 = vpack.c.b16 %v802, %v800
      %v819 = vpack.c.b16 %v803, %v801
      %v820 = vpack.c.b16 %v806, %v804
      %v821 = vpack.c.b16 %v807, %v805
      %v822 = vpack.c.b16 %v810, %v808
      %v823 = vpack.c.b16 %v811, %v809
      %v824 = vpack.c.b16 %v814, %v812
      %v825 = vpack.c.b16 %v815, %v813
      %v837 = vsel %vm280, %v784, 0
      %v840 = vsel %vm280, %v785, 0
      %842 = vmatpush.bf16.msra.mxu0 0
      %843 = vmatpush.bf16.msra.mxu0 0
      %844 = vmatpush.bf16.msra.mxu0 0
      %845 = vmatpush.bf16.msra.mxu0 %v824
      %846 = vmatpush.bf16.msra.mxu0 %v822
      %847 = vmatpush.bf16.msra.mxu0 %v820
      %848 = vmatpush.bf16.msra.mxu0 %v818
      %849 = vmatpush.bf16.msra.mxu0 %v816
      %850 = vmatmul.bf16.gmra.mxu0 %v837
      %v851 = vpop.f32.mrf.mxu0
      %v852 = vadd.f32 0.0, %v851
      %v853 = vpop.f32.mrf.mxu0
      %v854 = vadd.f32 0.0, %v853
      %855 = vmatmul.bf16.gmra.mxu0 %v840
      %v856 = vpop.f32.mrf.mxu0
      %v857 = vadd.f32 0.0, %v856
      %v858 = vpop.f32.mrf.mxu0
      %v859 = vadd.f32 0.0, %v858
      %860 = vdwg.mxu0
      %861 = vmatpush.bf16.msra.mxu0 0
      %862 = vmatpush.bf16.msra.mxu0 0
      %863 = vmatpush.bf16.msra.mxu0 0
      %864 = vmatpush.bf16.msra.mxu0 %v825
      %865 = vmatpush.bf16.msra.mxu0 %v823
      %866 = vmatpush.bf16.msra.mxu0 %v821
      %867 = vmatpush.bf16.msra.mxu0 %v819
      %868 = vmatpush.bf16.msra.mxu0 %v817
      %869 = vmatmul.bf16.gmra.mxu0 %v837
      %v870 = vpop.f32.mrf.mxu0
      %v871 = vadd.f32 0.0, %v870
      %v872 = vpop.f32.mrf.mxu0
      %v873 = vadd.f32 0.0, %v872
      %874 = vmatmul.bf16.gmra.mxu0 %v840
      %v875 = vpop.f32.mrf.mxu0
      %v876 = vadd.f32 0.0, %v875
      %v877 = vpop.f32.mrf.mxu0
      %v878 = vadd.f32 0.0, %v877
      %879 = vdwg.mxu0
      %v880 = vadd.f32 %v763, %v852
      %v881 = vadd.f32 %v764, %v871
      %v882 = vadd.f32 %v765, %v854
      %v883 = vadd.f32 %v766, %v873
      %v884 = vadd.f32 %v767, %v857
      %v885 = vadd.f32 %v768, %v876
      %v886 = vadd.f32 %v769, %v859
      %v887 = vadd.f32 %v770, %v878
      %v889 = vshrl.u32 %v341, 16
      %v891 = vrot.slane %v889, 4
      %v892 = vshll.u32 %v341, 16
      %v894 = vrot.slane %v892, 5
      %v895 = vor.u32 %v891, %v894
      %v896 = vrot.slane %v895, 4
      %v898 = vshll.u32 %v342, 16
      %v900 = vrot.slane %v898, 5
      %v901 = vsel %vm357, %v896, %v900
      %s902 = scalar_lea.vmem %s1, 320
      %v903 = vld [vmem:[%s902] sm:$0xff]
      %v904 = vld [vmem:[%s902 + $0x8] sm:$0xff]
      %v905 = vld [vmem:[%s902 + $0x10] sm:$0xff]
      %v906 = vld [vmem:[%s902 + $0x18] sm:$0xff]
      %v907 = vld [vmem:[%s902 + $0x20] sm:$0xff]
      %v908 = vld [vmem:[%s902 + $0x28] sm:$0xff]
      %v909 = vld [vmem:[%s902 + $0x30] sm:$0xff]
      %v910 = vld [vmem:[%s902 + $0x38] sm:$0xff]
      %v911 = vld [vmem:[%s902 + $0x40] sm:$0xff]
      %v912 = vld [vmem:[%s902 + $0x48] sm:$0xff]
      %v913 = vunpack.c.l.b16 %v901
      %v914 = vpack.c.b16 %v427, %v426
      %v915 = vpack.c.b16 %v913, %v428
      %v926 = vunpack.c.l.b16 %v903
      %v927 = vunpack.c.h.b16 %v903
      %v928 = vunpack.c.l.b16 %v904
      %v929 = vunpack.c.h.b16 %v904
      %v930 = vunpack.c.l.b16 %v905
      %v931 = vunpack.c.h.b16 %v905
      %v932 = vunpack.c.l.b16 %v906
      %v933 = vunpack.c.h.b16 %v906
      %v934 = vunpack.c.l.b16 %v907
      %v935 = vunpack.c.h.b16 %v907
      %v936 = vunpack.c.l.b16 %v908
      %v937 = vunpack.c.h.b16 %v908
      %v938 = vunpack.c.l.b16 %v909
      %v939 = vunpack.c.h.b16 %v909
      %v940 = vunpack.c.l.b16 %v910
      %v941 = vunpack.c.h.b16 %v910
      %v942 = vunpack.c.l.b16 %v911
      %v943 = vunpack.c.h.b16 %v911
      %v944 = vunpack.c.l.b16 %v912
      %v945 = vunpack.c.h.b16 %v912
      %v946 = vpack.c.b16 %v928, %v926
      %v947 = vpack.c.b16 %v929, %v927
      %v948 = vpack.c.b16 %v932, %v930
      %v949 = vpack.c.b16 %v933, %v931
      %v950 = vpack.c.b16 %v936, %v934
      %v951 = vpack.c.b16 %v937, %v935
      %v952 = vpack.c.b16 %v940, %v938
      %v953 = vpack.c.b16 %v941, %v939
      %v954 = vpack.c.b16 %v944, %v942
      %v955 = vpack.c.b16 %v945, %v943
      %v967 = vsel %vm280, %v914, 0
      %v970 = vsel %vm280, %v915, 0
      %972 = vmatpush.bf16.msra.mxu0 0
      %973 = vmatpush.bf16.msra.mxu0 0
      %974 = vmatpush.bf16.msra.mxu0 0
      %975 = vmatpush.bf16.msra.mxu0 %v954
      %976 = vmatpush.bf16.msra.mxu0 %v952
      %977 = vmatpush.bf16.msra.mxu0 %v950
      %978 = vmatpush.bf16.msra.mxu0 %v948
      %979 = vmatpush.bf16.msra.mxu0 %v946
      %980 = vmatmul.bf16.gmra.mxu0 %v967
      %v981 = vpop.f32.mrf.mxu0
      %v982 = vadd.f32 0.0, %v981
      %v983 = vpop.f32.mrf.mxu0
      %v984 = vadd.f32 0.0, %v983
      %985 = vmatmul.bf16.gmra.mxu0 %v970
      %v986 = vpop.f32.mrf.mxu0
      %v987 = vadd.f32 0.0, %v986
      %v988 = vpop.f32.mrf.mxu0
      %v989 = vadd.f32 0.0, %v988
      %990 = vdwg.mxu0
      %991 = vmatpush.bf16.msra.mxu0 0
      %992 = vmatpush.bf16.msra.mxu0 0
      %993 = vmatpush.bf16.msra.mxu0 0
      %994 = vmatpush.bf16.msra.mxu0 %v955
      %995 = vmatpush.bf16.msra.mxu0 %v953
      %996 = vmatpush.bf16.msra.mxu0 %v951
      %997 = vmatpush.bf16.msra.mxu0 %v949
      %998 = vmatpush.bf16.msra.mxu0 %v947
      %999 = vmatmul.bf16.gmra.mxu0 %v967
      %v1000 = vpop.f32.mrf.mxu0
      %v1001 = vadd.f32 0.0, %v1000
      %v1002 = vpop.f32.mrf.mxu0
      %v1003 = vadd.f32 0.0, %v1002
      %1004 = vmatmul.bf16.gmra.mxu0 %v970
      %v1005 = vpop.f32.mrf.mxu0
      %v1006 = vadd.f32 0.0, %v1005
      %v1007 = vpop.f32.mrf.mxu0
      %v1008 = vadd.f32 0.0, %v1007
      %1009 = vdwg.mxu0
      %v1010 = vadd.f32 %v880, %v982
      %v1011 = vadd.f32 %v881, %v1001
      %v1012 = vadd.f32 %v882, %v984
      %v1013 = vadd.f32 %v883, %v1003
      %v1014 = vadd.f32 %v884, %v987
      %v1015 = vadd.f32 %v885, %v1006
      %v1016 = vadd.f32 %v886, %v989
      %v1017 = vadd.f32 %v887, %v1008
      %v1019 = vrot.slane %v341, 5
      %v1020 = vrot.slane %v1019, 4
      %v1021 = vrot.slane %v342, 5
      %v1022 = vsel %vm635, %v1020, %v1021
      %s1023 = scalar_lea.vmem %s1, 400
      %v1024 = vld [vmem:[%s1023] sm:$0xff]
      %v1025 = vld [vmem:[%s1023 + $0x8] sm:$0xff]
      %v1026 = vld [vmem:[%s1023 + $0x10] sm:$0xff]
      %v1027 = vld [vmem:[%s1023 + $0x18] sm:$0xff]
      %v1028 = vld [vmem:[%s1023 + $0x20] sm:$0xff]
      %v1029 = vld [vmem:[%s1023 + $0x28] sm:$0xff]
      %v1030 = vld [vmem:[%s1023 + $0x30] sm:$0xff]
      %v1031 = vld [vmem:[%s1023 + $0x38] sm:$0xff]
      %v1032 = vld [vmem:[%s1023 + $0x40] sm:$0xff]
      %v1033 = vld [vmem:[%s1023 + $0x48] sm:$0xff]
      %v1034 = vunpack.c.l.b16 %v1022
      %v1035 = vpack.c.b16 %v665, %v664
      %v1036 = vpack.c.b16 %v1034, %v666
      %v1047 = vunpack.c.l.b16 %v1024
      %v1048 = vunpack.c.h.b16 %v1024
      %v1049 = vunpack.c.l.b16 %v1025
      %v1050 = vunpack.c.h.b16 %v1025
      %v1051 = vunpack.c.l.b16 %v1026
      %v1052 = vunpack.c.h.b16 %v1026
      %v1053 = vunpack.c.l.b16 %v1027
      %v1054 = vunpack.c.h.b16 %v1027
      %v1055 = vunpack.c.l.b16 %v1028
      %v1056 = vunpack.c.h.b16 %v1028
      %v1057 = vunpack.c.l.b16 %v1029
      %v1058 = vunpack.c.h.b16 %v1029
      %v1059 = vunpack.c.l.b16 %v1030
      %v1060 = vunpack.c.h.b16 %v1030
      %v1061 = vunpack.c.l.b16 %v1031
      %v1062 = vunpack.c.h.b16 %v1031
      %v1063 = vunpack.c.l.b16 %v1032
      %v1064 = vunpack.c.h.b16 %v1032
      %v1065 = vunpack.c.l.b16 %v1033
      %v1066 = vunpack.c.h.b16 %v1033
      %v1067 = vpack.c.b16 %v1049, %v1047
      %v1068 = vpack.c.b16 %v1050, %v1048
      %v1069 = vpack.c.b16 %v1053, %v1051
      %v1070 = vpack.c.b16 %v1054, %v1052
      %v1071 = vpack.c.b16 %v1057, %v1055
      %v1072 = vpack.c.b16 %v1058, %v1056
      %v1073 = vpack.c.b16 %v1061, %v1059
      %v1074 = vpack.c.b16 %v1062, %v1060
      %v1075 = vpack.c.b16 %v1065, %v1063
      %v1076 = vpack.c.b16 %v1066, %v1064
      %v1088 = vsel %vm280, %v1035, 0
      %v1091 = vsel %vm280, %v1036, 0
      %1093 = vmatpush.bf16.msra.mxu0 0
      %1094 = vmatpush.bf16.msra.mxu0 0
      %1095 = vmatpush.bf16.msra.mxu0 0
      %1096 = vmatpush.bf16.msra.mxu0 %v1075
      %1097 = vmatpush.bf16.msra.mxu0 %v1073
      %1098 = vmatpush.bf16.msra.mxu0 %v1071
      %1099 = vmatpush.bf16.msra.mxu0 %v1069
      %1100 = vmatpush.bf16.msra.mxu0 %v1067
      %1101 = vmatmul.bf16.gmra.mxu0 %v1088
      %v1102 = vpop.f32.mrf.mxu0
      %v1103 = vadd.f32 0.0, %v1102
      %v1104 = vpop.f32.mrf.mxu0
      %v1105 = vadd.f32 0.0, %v1104
      %1106 = vmatmul.bf16.gmra.mxu0 %v1091
      %v1107 = vpop.f32.mrf.mxu0
      %v1108 = vadd.f32 0.0, %v1107
      %v1109 = vpop.f32.mrf.mxu0
      %v1110 = vadd.f32 0.0, %v1109
      %1111 = vdwg.mxu0
      %1112 = vmatpush.bf16.msra.mxu0 0
      %1113 = vmatpush.bf16.msra.mxu0 0
      %1114 = vmatpush.bf16.msra.mxu0 0
      %1115 = vmatpush.bf16.msra.mxu0 %v1076
      %1116 = vmatpush.bf16.msra.mxu0 %v1074
      %1117 = vmatpush.bf16.msra.mxu0 %v1072
      %1118 = vmatpush.bf16.msra.mxu0 %v1070
      %1119 = vmatpush.bf16.msra.mxu0 %v1068
      %1120 = vmatmul.bf16.gmra.mxu0 %v1088
      %v1121 = vpop.f32.mrf.mxu0
      %v1122 = vadd.f32 0.0, %v1121
      %v1123 = vpop.f32.mrf.mxu0
      %v1124 = vadd.f32 0.0, %v1123
      %1125 = vmatmul.bf16.gmra.mxu0 %v1091
      %v1126 = vpop.f32.mrf.mxu0
      %v1127 = vadd.f32 0.0, %v1126
      %v1128 = vpop.f32.mrf.mxu0
      %v1129 = vadd.f32 0.0, %v1128
      %1130 = vdwg.mxu0
      %v1131 = vadd.f32 %v1010, %v1103
      %v1132 = vadd.f32 %v1011, %v1122
      %v1133 = vadd.f32 %v1012, %v1105
      %v1134 = vadd.f32 %v1013, %v1124
      %v1135 = vadd.f32 %v1014, %v1108
      %v1136 = vadd.f32 %v1015, %v1127
      %v1137 = vadd.f32 %v1016, %v1110
      %v1138 = vadd.f32 %v1017, %v1129
      %s1139 = scalar_lea.vmem %s1, 480
      %v1140 = vld [vmem:[%s1139] sm:$0xff]
      %v1141 = vld [vmem:[%s1139 + $0x8] sm:$0xff]
      %v1142 = vld [vmem:[%s1139 + $0x10] sm:$0xff]
      %v1143 = vld [vmem:[%s1139 + $0x18] sm:$0xff]
      %v1144 = vld [vmem:[%s1139 + $0x20] sm:$0xff]
      %v1145 = vld [vmem:[%s1139 + $0x28] sm:$0xff]
      %v1146 = vld [vmem:[%s1139 + $0x30] sm:$0xff]
      %v1147 = vld [vmem:[%s1139 + $0x38] sm:$0xff]
      %v1148 = vld [vmem:[%s1139 + $0x40] sm:$0xff]
      %v1149 = vld [vmem:[%s1139 + $0x48] sm:$0xff]
      %v1151 = vunpack.c.l.b16 %v343
      %v1152 = vpack.c.b16 %v1151, %v783
      %v1163 = vunpack.c.l.b16 %v1140
      %v1164 = vunpack.c.h.b16 %v1140
      %v1165 = vunpack.c.l.b16 %v1141
      %v1166 = vunpack.c.h.b16 %v1141
      %v1167 = vunpack.c.l.b16 %v1142
      %v1168 = vunpack.c.h.b16 %v1142
      %v1169 = vunpack.c.l.b16 %v1143
      %v1170 = vunpack.c.h.b16 %v1143
      %v1171 = vunpack.c.l.b16 %v1144
      %v1172 = vunpack.c.h.b16 %v1144
      %v1173 = vunpack.c.l.b16 %v1145
      %v1174 = vunpack.c.h.b16 %v1145
      %v1175 = vunpack.c.l.b16 %v1146
      %v1176 = vunpack.c.h.b16 %v1146
      %v1177 = vunpack.c.l.b16 %v1147
      %v1178 = vunpack.c.h.b16 %v1147
      %v1179 = vunpack.c.l.b16 %v1148
      %v1180 = vunpack.c.h.b16 %v1148
      %v1181 = vunpack.c.l.b16 %v1149
      %v1182 = vunpack.c.h.b16 %v1149
      %v1183 = vpack.c.b16 %v1165, %v1163
      %v1184 = vpack.c.b16 %v1166, %v1164
      %v1185 = vpack.c.b16 %v1169, %v1167
      %v1186 = vpack.c.b16 %v1170, %v1168
      %v1187 = vpack.c.b16 %v1173, %v1171
      %v1188 = vpack.c.b16 %v1174, %v1172
      %v1189 = vpack.c.b16 %v1177, %v1175
      %v1190 = vpack.c.b16 %v1178, %v1176
      %v1191 = vpack.c.b16 %v1181, %v1179
      %v1192 = vpack.c.b16 %v1182, %v1180
      %v1204 = vsel %vm280, %v1152, 0
      %1206 = vmatpush.bf16.msra.mxu0 0
      %1207 = vmatpush.bf16.msra.mxu0 0
      %1208 = vmatpush.bf16.msra.mxu0 0
      %1209 = vmatpush.bf16.msra.mxu0 %v1191
      %1210 = vmatpush.bf16.msra.mxu0 %v1189
      %1211 = vmatpush.bf16.msra.mxu0 %v1187
      %1212 = vmatpush.bf16.msra.mxu0 %v1185
      %1213 = vmatpush.bf16.msra.mxu0 %v1183
      %1214 = vmatmul.bf16.gmra.mxu0 %v589
      %v1215 = vpop.f32.mrf.mxu0
      %v1216 = vadd.f32 0.0, %v1215
      %v1217 = vpop.f32.mrf.mxu0
      %v1218 = vadd.f32 0.0, %v1217
      %1219 = vmatmul.bf16.gmra.mxu0 %v1204
      %v1220 = vpop.f32.mrf.mxu0
      %v1221 = vadd.f32 0.0, %v1220
      %v1222 = vpop.f32.mrf.mxu0
      %v1223 = vadd.f32 0.0, %v1222
      %1224 = vdwg.mxu0
      %1225 = vmatpush.bf16.msra.mxu0 0
      %1226 = vmatpush.bf16.msra.mxu0 0
      %1227 = vmatpush.bf16.msra.mxu0 0
      %1228 = vmatpush.bf16.msra.mxu0 %v1192
      %1229 = vmatpush.bf16.msra.mxu0 %v1190
      %1230 = vmatpush.bf16.msra.mxu0 %v1188
      %1231 = vmatpush.bf16.msra.mxu0 %v1186
      %1232 = vmatpush.bf16.msra.mxu0 %v1184
      %1233 = vmatmul.bf16.gmra.mxu0 %v589
      %v1234 = vpop.f32.mrf.mxu0
      %v1235 = vadd.f32 0.0, %v1234
      %v1236 = vpop.f32.mrf.mxu0
      %v1237 = vadd.f32 0.0, %v1236
      %1238 = vmatmul.bf16.gmra.mxu0 %v1204
      %v1239 = vpop.f32.mrf.mxu0
      %v1240 = vadd.f32 0.0, %v1239
      %v1241 = vpop.f32.mrf.mxu0
      %v1242 = vadd.f32 0.0, %v1241
      %1243 = vdwg.mxu0
      %v1244 = vadd.f32 %v1131, %v1216
      %v1245 = vadd.f32 %v1132, %v1235
      %v1246 = vadd.f32 %v1133, %v1218
      %v1247 = vadd.f32 %v1134, %v1237
      %v1248 = vadd.f32 %v1135, %v1221
      %v1249 = vadd.f32 %v1136, %v1240
      %v1250 = vadd.f32 %v1137, %v1223
      %v1251 = vadd.f32 %v1138, %v1242
      %v1253 = vshrl.u32 %v343, 16
      %v1255 = vrot.slane %v1253, 4
      %v1256 = vshll.u32 %v343, 16
      %v1258 = vrot.slane %v1256, 5
      %v1259 = vor.u32 %v1255, %v1258
      %v1260 = vrot.slane %v1259, 4
      %v1262 = vshll.u32 %v344, 16
      %v1264 = vrot.slane %v1262, 5
      %v1265 = vsel %vm357, %v1260, %v1264
      %s1266 = scalar_lea.vmem %s1, 560
      %v1267 = vld [vmem:[%s1266] sm:$0xff]
      %v1268 = vld [vmem:[%s1266 + $0x8] sm:$0xff]
      %v1269 = vld [vmem:[%s1266 + $0x10] sm:$0xff]
      %v1270 = vld [vmem:[%s1266 + $0x18] sm:$0xff]
      %v1271 = vld [vmem:[%s1266 + $0x20] sm:$0xff]
      %v1272 = vld [vmem:[%s1266 + $0x28] sm:$0xff]
      %v1273 = vld [vmem:[%s1266 + $0x30] sm:$0xff]
      %v1274 = vld [vmem:[%s1266 + $0x38] sm:$0xff]
      %v1275 = vld [vmem:[%s1266 + $0x40] sm:$0xff]
      %v1276 = vld [vmem:[%s1266 + $0x48] sm:$0xff]
      %v1277 = vunpack.c.l.b16 %v1265
      %v1278 = vpack.c.b16 %v1277, %v913
      %v1289 = vunpack.c.l.b16 %v1267
      %v1290 = vunpack.c.h.b16 %v1267
      %v1291 = vunpack.c.l.b16 %v1268
      %v1292 = vunpack.c.h.b16 %v1268
      %v1293 = vunpack.c.l.b16 %v1269
      %v1294 = vunpack.c.h.b16 %v1269
      %v1295 = vunpack.c.l.b16 %v1270
      %v1296 = vunpack.c.h.b16 %v1270
      %v1297 = vunpack.c.l.b16 %v1271
      %v1298 = vunpack.c.h.b16 %v1271
      %v1299 = vunpack.c.l.b16 %v1272
      %v1300 = vunpack.c.h.b16 %v1272
      %v1301 = vunpack.c.l.b16 %v1273
      %v1302 = vunpack.c.h.b16 %v1273
      %v1303 = vunpack.c.l.b16 %v1274
      %v1304 = vunpack.c.h.b16 %v1274
      %v1305 = vunpack.c.l.b16 %v1275
      %v1306 = vunpack.c.h.b16 %v1275
      %v1307 = vunpack.c.l.b16 %v1276
      %v1308 = vunpack.c.h.b16 %v1276
      %v1309 = vpack.c.b16 %v1291, %v1289
      %v1310 = vpack.c.b16 %v1292, %v1290
      %v1311 = vpack.c.b16 %v1295, %v1293
      %v1312 = vpack.c.b16 %v1296, %v1294
      %v1313 = vpack.c.b16 %v1299, %v1297
      %v1314 = vpack.c.b16 %v1300, %v1298
      %v1315 = vpack.c.b16 %v1303, %v1301
      %v1316 = vpack.c.b16 %v1304, %v1302
      %v1317 = vpack.c.b16 %v1307, %v1305
      %v1318 = vpack.c.b16 %v1308, %v1306
      %v1330 = vsel %vm280, %v1278, 0
      %1332 = vmatpush.bf16.msra.mxu0 0
      %1333 = vmatpush.bf16.msra.mxu0 0
      %1334 = vmatpush.bf16.msra.mxu0 0
      %1335 = vmatpush.bf16.msra.mxu0 %v1317
      %1336 = vmatpush.bf16.msra.mxu0 %v1315
      %1337 = vmatpush.bf16.msra.mxu0 %v1313
      %1338 = vmatpush.bf16.msra.mxu0 %v1311
      %1339 = vmatpush.bf16.msra.mxu0 %v1309
      %1340 = vmatmul.bf16.gmra.mxu0 %v485
      %v1341 = vpop.f32.mrf.mxu0
      %v1342 = vadd.f32 0.0, %v1341
      %v1343 = vpop.f32.mrf.mxu0
      %v1344 = vadd.f32 0.0, %v1343
      %1345 = vmatmul.bf16.gmra.mxu0 %v1330
      %v1346 = vpop.f32.mrf.mxu0
      %v1347 = vadd.f32 0.0, %v1346
      %v1348 = vpop.f32.mrf.mxu0
      %v1349 = vadd.f32 0.0, %v1348
      %1350 = vdwg.mxu0
      %1351 = vmatpush.bf16.msra.mxu0 0
      %1352 = vmatpush.bf16.msra.mxu0 0
      %1353 = vmatpush.bf16.msra.mxu0 0
      %1354 = vmatpush.bf16.msra.mxu0 %v1318
      %1355 = vmatpush.bf16.msra.mxu0 %v1316
      %1356 = vmatpush.bf16.msra.mxu0 %v1314
      %1357 = vmatpush.bf16.msra.mxu0 %v1312
      %1358 = vmatpush.bf16.msra.mxu0 %v1310
      %1359 = vmatmul.bf16.gmra.mxu0 %v485
      %v1360 = vpop.f32.mrf.mxu0
      %v1361 = vadd.f32 0.0, %v1360
      %v1362 = vpop.f32.mrf.mxu0
      %v1363 = vadd.f32 0.0, %v1362
      %1364 = vmatmul.bf16.gmra.mxu0 %v1330
      %v1365 = vpop.f32.mrf.mxu0
      %v1366 = vadd.f32 0.0, %v1365
      %v1367 = vpop.f32.mrf.mxu0
      %v1368 = vadd.f32 0.0, %v1367
      %1369 = vdwg.mxu0
      %v1370 = vadd.f32 %v1244, %v1342
      %v1371 = vadd.f32 %v1245, %v1361
      %v1372 = vadd.f32 %v1246, %v1344
      %v1373 = vadd.f32 %v1247, %v1363
      %v1374 = vadd.f32 %v1248, %v1347
      %v1375 = vadd.f32 %v1249, %v1366
      %v1376 = vadd.f32 %v1250, %v1349
      %v1377 = vadd.f32 %v1251, %v1368
      %v1379 = vrot.slane %v343, 5
      %v1380 = vrot.slane %v1379, 4
      %v1381 = vrot.slane %v344, 5
      %v1382 = vsel %vm635, %v1380, %v1381
      %s1383 = scalar_lea.vmem %s1, 640
      %v1384 = vld [vmem:[%s1383] sm:$0xff]
      %v1385 = vld [vmem:[%s1383 + $0x8] sm:$0xff]
      %v1386 = vld [vmem:[%s1383 + $0x10] sm:$0xff]
      %v1387 = vld [vmem:[%s1383 + $0x18] sm:$0xff]
      %v1388 = vld [vmem:[%s1383 + $0x20] sm:$0xff]
      %v1389 = vld [vmem:[%s1383 + $0x28] sm:$0xff]
      %v1390 = vld [vmem:[%s1383 + $0x30] sm:$0xff]
      %v1391 = vld [vmem:[%s1383 + $0x38] sm:$0xff]
      %v1392 = vld [vmem:[%s1383 + $0x40] sm:$0xff]
      %v1393 = vld [vmem:[%s1383 + $0x48] sm:$0xff]
      %v1394 = vunpack.c.l.b16 %v1382
      %v1395 = vpack.c.b16 %v1394, %v1034
      %v1406 = vunpack.c.l.b16 %v1384
      %v1407 = vunpack.c.h.b16 %v1384
      %v1408 = vunpack.c.l.b16 %v1385
      %v1409 = vunpack.c.h.b16 %v1385
      %v1410 = vunpack.c.l.b16 %v1386
      %v1411 = vunpack.c.h.b16 %v1386
      %v1412 = vunpack.c.l.b16 %v1387
      %v1413 = vunpack.c.h.b16 %v1387
      %v1414 = vunpack.c.l.b16 %v1388
      %v1415 = vunpack.c.h.b16 %v1388
      %v1416 = vunpack.c.l.b16 %v1389
      %v1417 = vunpack.c.h.b16 %v1389
      %v1418 = vunpack.c.l.b16 %v1390
      %v1419 = vunpack.c.h.b16 %v1390
      %v1420 = vunpack.c.l.b16 %v1391
      %v1421 = vunpack.c.h.b16 %v1391
      %v1422 = vunpack.c.l.b16 %v1392
      %v1423 = vunpack.c.h.b16 %v1392
      %v1424 = vunpack.c.l.b16 %v1393
      %v1425 = vunpack.c.h.b16 %v1393
      %v1426 = vpack.c.b16 %v1408, %v1406
      %v1427 = vpack.c.b16 %v1409, %v1407
      %v1428 = vpack.c.b16 %v1412, %v1410
      %v1429 = vpack.c.b16 %v1413, %v1411
      %v1430 = vpack.c.b16 %v1416, %v1414
      %v1431 = vpack.c.b16 %v1417, %v1415
      %v1432 = vpack.c.b16 %v1420, %v1418
      %v1433 = vpack.c.b16 %v1421, %v1419
      %v1434 = vpack.c.b16 %v1424, %v1422
      %v1435 = vpack.c.b16 %v1425, %v1423
      %v1447 = vsel %vm280, %v1395, 0
      %1449 = vmatpush.bf16.msra.mxu0 0
      %1450 = vmatpush.bf16.msra.mxu0 0
      %1451 = vmatpush.bf16.msra.mxu0 0
      %1452 = vmatpush.bf16.msra.mxu0 %v1434
      %1453 = vmatpush.bf16.msra.mxu0 %v1432
      %1454 = vmatpush.bf16.msra.mxu0 %v1430
      %1455 = vmatpush.bf16.msra.mxu0 %v1428
      %1456 = vmatpush.bf16.msra.mxu0 %v1426
      %1457 = vmatmul.bf16.gmra.mxu0 %v723
      %v1458 = vpop.f32.mrf.mxu0
      %v1459 = vadd.f32 0.0, %v1458
      %v1460 = vpop.f32.mrf.mxu0
      %v1461 = vadd.f32 0.0, %v1460
      %1462 = vmatmul.bf16.gmra.mxu0 %v1447
      %v1463 = vpop.f32.mrf.mxu0
      %v1464 = vadd.f32 0.0, %v1463
      %v1465 = vpop.f32.mrf.mxu0
      %v1466 = vadd.f32 0.0, %v1465
      %1467 = vdwg.mxu0
      %1468 = vmatpush.bf16.msra.mxu0 0
      %1469 = vmatpush.bf16.msra.mxu0 0
      %1470 = vmatpush.bf16.msra.mxu0 0
      %1471 = vmatpush.bf16.msra.mxu0 %v1435
      %1472 = vmatpush.bf16.msra.mxu0 %v1433
      %1473 = vmatpush.bf16.msra.mxu0 %v1431
      %1474 = vmatpush.bf16.msra.mxu0 %v1429
      %1475 = vmatpush.bf16.msra.mxu0 %v1427
      %1476 = vmatmul.bf16.gmra.mxu0 %v723
      %v1477 = vpop.f32.mrf.mxu0
      %v1478 = vadd.f32 0.0, %v1477
      %v1479 = vpop.f32.mrf.mxu0
      %v1480 = vadd.f32 0.0, %v1479
      %1481 = vmatmul.bf16.gmra.mxu0 %v1447
      %v1482 = vpop.f32.mrf.mxu0
      %v1483 = vadd.f32 0.0, %v1482
      %v1484 = vpop.f32.mrf.mxu0
      %v1485 = vadd.f32 0.0, %v1484
      %1486 = vdwg.mxu0
      %v1487 = vadd.f32 %v1370, %v1459
      %v1488 = vadd.f32 %v1371, %v1478
      %v1489 = vadd.f32 %v1372, %v1461
      %v1490 = vadd.f32 %v1373, %v1480
      %v1491 = vadd.f32 %v1374, %v1464
      %v1492 = vadd.f32 %v1375, %v1483
      %v1493 = vadd.f32 %v1376, %v1466
      %v1494 = vadd.f32 %v1377, %v1485
      %v1495 = vld [vmem:[%s2] sm:$0x3]
      %v1497 = vperm.slane %v1495, 0
      %v1498 = vperm.slane %v1495, 1
      %v1501 = vadd.f32 %v1487, %v1497
      %v1502 = vadd.f32 %v1488, %v1498
      %v1503 = vadd.f32 %v1489, %v1497
      %v1504 = vadd.f32 %v1490, %v1498
      %v1505 = vadd.f32 %v1491, %v1497
      %v1506 = vadd.f32 %v1492, %v1498
      %v1507 = vadd.f32 %v1493, %v1497
      %v1508 = vadd.f32 %v1494, %v1498
      %s1509 = scalar_lea.vmem [#allocation2], 16
      %1510 = vst.msk [vmem:[%s1509 + $0x1] sm:$0xff] %vm280, %v1501
      %1513 = vrot.lane.b32.xlu0 %v1501, 48
      %v1514 = vpop.permute.xlu0 %1513
      %1515 = vrot.lane.b32.xlu0 %v1502, 48
      %v1516 = vpop.permute.xlu0 %1515
      %vm1517 = vcmask 392192
      %v1518 = vsel %vm1517, %v1514, %v1516
      %s1520 = scalar_lea.vmem [#allocation2], 32
      %1521 = vst.msk [vmem:[%s1520 + $0x1] sm:$0xff] %vm280, %v1518
      %s1522 = scalar_lea.vmem [#allocation2], 48
      %1523 = vst.msk [vmem:[%s1522 + $0x1] sm:$0xff] %vm280, %v1503
      %1526 = vrot.lane.b32.xlu0 %v1503, 48
      %v1527 = vpop.permute.xlu0 %1526
      %1528 = vrot.lane.b32.xlu0 %v1504, 48
      %v1529 = vpop.permute.xlu0 %1528
      %v1530 = vsel %vm1517, %v1527, %v1529
      %s1532 = scalar_lea.vmem [#allocation2], 64
      %1533 = vst.msk [vmem:[%s1532 + $0x1] sm:$0xff] %vm280, %v1530
      %s1534 = scalar_lea.vmem [#allocation2], 80
      %1535 = vst.msk [vmem:[%s1534 + $0x1] sm:$0xff] %vm280, %v1505
      %1538 = vrot.lane.b32.xlu0 %v1505, 48
      %v1539 = vpop.permute.xlu0 %1538
      %1540 = vrot.lane.b32.xlu0 %v1506, 48
      %v1541 = vpop.permute.xlu0 %1540
      %v1542 = vsel %vm1517, %v1539, %v1541
      %s1544 = scalar_lea.vmem [#allocation2], 96
      %1545 = vst.msk [vmem:[%s1544 + $0x1] sm:$0xff] %vm280, %v1542
      %s1546 = scalar_lea.vmem [#allocation2], 112
      %1547 = vst.msk [vmem:[%s1546 + $0x1] sm:$0xff] %vm280, %v1507
      %1550 = vrot.lane.b32.xlu0 %v1507, 48
      %v1551 = vpop.permute.xlu0 %1550
      %1552 = vrot.lane.b32.xlu0 %v1508, 48
      %v1553 = vpop.permute.xlu0 %1552
      %v1554 = vsel %vm1517, %v1551, %v1553
      %s1556 = scalar_lea.vmem [#allocation2], 128
      %1557 = vst.msk [vmem:[%s1556 + $0x1] sm:$0xff] %vm280, %v1554
      %v1558 = vld [vmem:[#allocation2] sm:$0xff]
      %v1559 = vld [vmem:[#allocation2 + $0x10] sm:$0xff]
      %v1560 = vld [vmem:[#allocation2 + $0x20] sm:$0xff]
      %v1561 = vld [vmem:[#allocation2 + $0x30] sm:$0xff]
      %v1562 = vld [vmem:[#allocation2 + $0x40] sm:$0xff]
      %v1563 = vld [vmem:[#allocation2 + $0x50] sm:$0xff]
      %v1564 = vld [vmem:[#allocation2 + $0x60] sm:$0xff]
      %v1565 = vld [vmem:[#allocation2 + $0x70] sm:$0xff]
      %v1566 = vpack.c.bf16 %v1559, %v1558
      %v1567 = vpack.c.bf16 %v1561, %v1560
      %v1568 = vpack.c.bf16 %v1563, %v1562
      %v1569 = vpack.c.bf16 %v1565, %v1564
      %v1570 = vld [vmem:[%s3] sm:$0xf]
      %v1571 = vld [vmem:[%s3 + $0x4] sm:$0xf]
      %v1572 = vld [vmem:[%s3 + $0x8] sm:$0xf]
      %v1573 = vld [vmem:[%s3 + $0xc] sm:$0xf]
      %v1574 = vld [vmem:[%s3 + $0x10] sm:$0xf]
      %v1575 = vld [vmem:[%s3 + $0x14] sm:$0xf]
      %v1576 = vld [vmem:[%s3 + $0x18] sm:$0xf]
      %v1577 = vld [vmem:[%s3 + $0x1c] sm:$0xf]
      %v1578 = vld [vmem:[%s3 + $0x20] sm:$0xf]
      %v1579 = vld [vmem:[%s3 + $0x24] sm:$0xf]
      %v1580 = vld [vmem:[#allocation2 + $0x1] sm:$0xff]
      %v1581 = vld [vmem:[#allocation2 + $0x11] sm:$0xff]
      %v1582 = vld [vmem:[#allocation2 + $0x21] sm:$0xff]
      %v1583 = vld [vmem:[#allocation2 + $0x31] sm:$0xff]
      %v1584 = vld [vmem:[#allocation2 + $0x41] sm:$0xff]
      %v1585 = vld [vmem:[#allocation2 + $0x51] sm:$0xff]
      %v1586 = vld [vmem:[#allocation2 + $0x61] sm:$0xff]
      %v1587 = vld [vmem:[#allocation2 + $0x71] sm:$0xff]
      %v1588 = vpack.c.bf16 %v1581, %v1580
      %v1589 = vpack.c.bf16 %v1583, %v1582
      %v1590 = vpack.c.bf16 %v1585, %v1584
      %v1591 = vpack.c.bf16 %v1587, %v1586
      %s1592 = scalar_lea.vmem %s3, 40
      %v1593 = vld [vmem:[%s1592] sm:$0xf]
      %v1594 = vld [vmem:[%s1592 + $0x4] sm:$0xf]
      %v1595 = vld [vmem:[%s1592 + $0x8] sm:$0xf]
      %v1596 = vld [vmem:[%s1592 + $0xc] sm:$0xf]
      %v1597 = vld [vmem:[%s1592 + $0x10] sm:$0xf]
      %v1598 = vld [vmem:[%s1592 + $0x14] sm:$0xf]
      %v1599 = vld [vmem:[%s1592 + $0x18] sm:$0xf]
      %v1600 = vld [vmem:[%s1592 + $0x1c] sm:$0xf]
      %v1601 = vld [vmem:[%s1592 + $0x20] sm:$0xf]
      %v1602 = vld [vmem:[%s1592 + $0x24] sm:$0xf]
      %v1613 = vunpack.c.l.b16 %v1593
      %v1614 = vunpack.c.l.b16 %v1594
      %v1615 = vunpack.c.l.b16 %v1595
      %v1616 = vunpack.c.l.b16 %v1596
      %v1617 = vunpack.c.l.b16 %v1597
      %v1618 = vunpack.c.l.b16 %v1598
      %v1619 = vunpack.c.l.b16 %v1599
      %v1620 = vunpack.c.l.b16 %v1600
      %v1621 = vunpack.c.l.b16 %v1601
      %v1622 = vunpack.c.l.b16 %v1602
      %v1623 = vpack.c.b16 %v1614, %v1613
      %v1624 = vpack.c.b16 %v1616, %v1615
      %v1625 = vpack.c.b16 %v1618, %v1617
      %v1626 = vpack.c.b16 %v1620, %v1619
      %v1627 = vpack.c.b16 %v1622, %v1621
      %v1634 = vsel %vm280, %v1588, 0
      %v1637 = vsel %vm280, %v1589, 0
      %v1640 = vsel %vm280, %v1590, 0
      %v1643 = vsel %vm280, %v1591, 0
      %1645 = vmatpush.bf16.msra.mxu0 0
      %1646 = vmatpush.bf16.msra.mxu0 0
      %1647 = vmatpush.bf16.msra.mxu0 0
      %1648 = vmatpush.bf16.msra.mxu0 %v1627
      %1649 = vmatpush.bf16.msra.mxu0 %v1626
      %1650 = vmatpush.bf16.msra.mxu0 %v1625
      %1651 = vmatpush.bf16.msra.mxu0 %v1624
      %1652 = vmatpush.bf16.msra.mxu0 %v1623
      %1653 = vmatmul.bf16.gmra.mxu0 %v1634
      %v1654 = vpop.f32.mrf.mxu0
      %v1655 = vadd.f32 0.0, %v1654
      %v1656 = vpop.f32.mrf.mxu0
      %v1657 = vadd.f32 0.0, %v1656
      %1658 = vmatmul.bf16.gmra.mxu0 %v1637
      %v1659 = vpop.f32.mrf.mxu0
      %v1660 = vadd.f32 0.0, %v1659
      %v1661 = vpop.f32.mrf.mxu0
      %v1662 = vadd.f32 0.0, %v1661
      %1663 = vmatmul.bf16.gmra.mxu0 %v1640
      %v1664 = vpop.f32.mrf.mxu0
      %v1665 = vadd.f32 0.0, %v1664
      %v1666 = vpop.f32.mrf.mxu0
      %v1667 = vadd.f32 0.0, %v1666
      %1668 = vmatmul.bf16.gmra.mxu0 %v1643
      %v1669 = vpop.f32.mrf.mxu0
      %v1670 = vadd.f32 0.0, %v1669
      %v1671 = vpop.f32.mrf.mxu0
      %v1672 = vadd.f32 0.0, %v1671
      %1673 = vdwg.mxu0
      %v1684 = vunpack.c.l.b16 %v1570
      %v1685 = vunpack.c.l.b16 %v1571
      %v1686 = vunpack.c.l.b16 %v1572
      %v1687 = vunpack.c.l.b16 %v1573
      %v1688 = vunpack.c.l.b16 %v1574
      %v1689 = vunpack.c.l.b16 %v1575
      %v1690 = vunpack.c.l.b16 %v1576
      %v1691 = vunpack.c.l.b16 %v1577
      %v1692 = vunpack.c.l.b16 %v1578
      %v1693 = vunpack.c.l.b16 %v1579
      %v1694 = vpack.c.b16 %v1685, %v1684
      %v1695 = vpack.c.b16 %v1687, %v1686
      %v1696 = vpack.c.b16 %v1689, %v1688
      %v1697 = vpack.c.b16 %v1691, %v1690
      %v1698 = vpack.c.b16 %v1693, %v1692
      %v1705 = vsel %vm280, %v1566, 0
      %v1708 = vsel %vm280, %v1567, 0
      %v1711 = vsel %vm280, %v1568, 0
      %v1714 = vsel %vm280, %v1569, 0
      %1716 = vmatpush.bf16.msra.mxu0 0
      %1717 = vmatpush.bf16.msra.mxu0 0
      %1718 = vmatpush.bf16.msra.mxu0 0
      %1719 = vmatpush.bf16.msra.mxu0 %v1698
      %1720 = vmatpush.bf16.msra.mxu0 %v1697
      %1721 = vmatpush.bf16.msra.mxu0 %v1696
      %1722 = vmatpush.bf16.msra.mxu0 %v1695
      %1723 = vmatpush.bf16.msra.mxu0 %v1694
      %1724 = vmatmul.bf16.gmra.mxu0 %v1705
      %v1725 = vpop.f32.mrf.mxu0
      %v1726 = vadd.f32 %v1655, %v1725
      %v1727 = vpop.f32.mrf.mxu0
      %v1728 = vadd.f32 %v1657, %v1727
      %1729 = vmatmul.bf16.gmra.mxu0 %v1708
      %v1730 = vpop.f32.mrf.mxu0
      %v1731 = vadd.f32 %v1660, %v1730
      %v1732 = vpop.f32.mrf.mxu0
      %v1733 = vadd.f32 %v1662, %v1732
      %1734 = vmatmul.bf16.gmra.mxu0 %v1711
      %v1735 = vpop.f32.mrf.mxu0
      %v1736 = vadd.f32 %v1665, %v1735
      %v1737 = vpop.f32.mrf.mxu0
      %v1738 = vadd.f32 %v1667, %v1737
      %1739 = vmatmul.bf16.gmra.mxu0 %v1714
      %v1740 = vpop.f32.mrf.mxu0
      %v1741 = vadd.f32 %v1670, %v1740
      %v1742 = vpop.f32.mrf.mxu0
      %v1743 = vadd.f32 %v1672, %v1742
      %1744 = vdwg.mxu0
      %v1745 = vld [vmem:[#allocation2 + $0x2] sm:$0xff]
      %v1746 = vld [vmem:[#allocation2 + $0x12] sm:$0xff]
      %v1747 = vld [vmem:[#allocation2 + $0x22] sm:$0xff]
      %v1748 = vld [vmem:[#allocation2 + $0x32] sm:$0xff]
      %v1749 = vld [vmem:[#allocation2 + $0x42] sm:$0xff]
      %v1750 = vld [vmem:[#allocation2 + $0x52] sm:$0xff]
      %v1751 = vld [vmem:[#allocation2 + $0x62] sm:$0xff]
      %v1752 = vld [vmem:[#allocation2 + $0x72] sm:$0xff]
      %v1753 = vpack.c.bf16 %v1746, %v1745
      %v1754 = vpack.c.bf16 %v1748, %v1747
      %v1755 = vpack.c.bf16 %v1750, %v1749
      %v1756 = vpack.c.bf16 %v1752, %v1751
      %s1757 = scalar_lea.vmem %s3, 80
      %v1758 = vld [vmem:[%s1757] sm:$0xf]
      %v1759 = vld [vmem:[%s1757 + $0x4] sm:$0xf]
      %v1760 = vld [vmem:[%s1757 + $0x8] sm:$0xf]
      %v1761 = vld [vmem:[%s1757 + $0xc] sm:$0xf]
      %v1762 = vld [vmem:[%s1757 + $0x10] sm:$0xf]
      %v1763 = vld [vmem:[%s1757 + $0x14] sm:$0xf]
      %v1764 = vld [vmem:[%s1757 + $0x18] sm:$0xf]
      %v1765 = vld [vmem:[%s1757 + $0x1c] sm:$0xf]
      %v1766 = vld [vmem:[%s1757 + $0x20] sm:$0xf]
      %v1767 = vld [vmem:[%s1757 + $0x24] sm:$0xf]
      %v1778 = vunpack.c.l.b16 %v1758
      %v1779 = vunpack.c.l.b16 %v1759
      %v1780 = vunpack.c.l.b16 %v1760
      %v1781 = vunpack.c.l.b16 %v1761
      %v1782 = vunpack.c.l.b16 %v1762
      %v1783 = vunpack.c.l.b16 %v1763
      %v1784 = vunpack.c.l.b16 %v1764
      %v1785 = vunpack.c.l.b16 %v1765
      %v1786 = vunpack.c.l.b16 %v1766
      %v1787 = vunpack.c.l.b16 %v1767
      %v1788 = vpack.c.b16 %v1779, %v1778
      %v1789 = vpack.c.b16 %v1781, %v1780
      %v1790 = vpack.c.b16 %v1783, %v1782
      %v1791 = vpack.c.b16 %v1785, %v1784
      %v1792 = vpack.c.b16 %v1787, %v1786
      %v1799 = vsel %vm280, %v1753, 0
      %v1802 = vsel %vm280, %v1754, 0
      %v1805 = vsel %vm280, %v1755, 0
      %v1808 = vsel %vm280, %v1756, 0
      %1810 = vmatpush.bf16.msra.mxu0 0
      %1811 = vmatpush.bf16.msra.mxu0 0
      %1812 = vmatpush.bf16.msra.mxu0 0
      %1813 = vmatpush.bf16.msra.mxu0 %v1792
      %1814 = vmatpush.bf16.msra.mxu0 %v1791
      %1815 = vmatpush.bf16.msra.mxu0 %v1790
      %1816 = vmatpush.bf16.msra.mxu0 %v1789
      %1817 = vmatpush.bf16.msra.mxu0 %v1788
      %1818 = vmatmul.bf16.gmra.mxu0 %v1799
      %v1819 = vpop.f32.mrf.mxu0
      %v1820 = vadd.f32 0.0, %v1819
      %v1821 = vpop.f32.mrf.mxu0
      %v1822 = vadd.f32 0.0, %v1821
      %1823 = vmatmul.bf16.gmra.mxu0 %v1802
      %v1824 = vpop.f32.mrf.mxu0
      %v1825 = vadd.f32 0.0, %v1824
      %v1826 = vpop.f32.mrf.mxu0
      %v1827 = vadd.f32 0.0, %v1826
      %1828 = vmatmul.bf16.gmra.mxu0 %v1805
      %v1829 = vpop.f32.mrf.mxu0
      %v1830 = vadd.f32 0.0, %v1829
      %v1831 = vpop.f32.mrf.mxu0
      %v1832 = vadd.f32 0.0, %v1831
      %1833 = vmatmul.bf16.gmra.mxu0 %v1808
      %v1834 = vpop.f32.mrf.mxu0
      %v1835 = vadd.f32 0.0, %v1834
      %v1836 = vpop.f32.mrf.mxu0
      %v1837 = vadd.f32 0.0, %v1836
      %1838 = vdwg.mxu0
      %v1839 = vadd.f32 %v1726, %v1820
      %v1840 = vadd.f32 %v1728, %v1822
      %v1841 = vadd.f32 %v1731, %v1825
      %v1842 = vadd.f32 %v1733, %v1827
      %v1843 = vadd.f32 %v1736, %v1830
      %v1844 = vadd.f32 %v1738, %v1832
      %v1845 = vadd.f32 %v1741, %v1835
      %v1846 = vadd.f32 %v1743, %v1837
      %v1847 = vld [vmem:[%s1509] sm:$0xff]
      %v1848 = vld [vmem:[%s1509 + $0x10] sm:$0xff]
      %v1849 = vld [vmem:[%s1509 + $0x20] sm:$0xff]
      %v1850 = vld [vmem:[%s1509 + $0x30] sm:$0xff]
      %v1851 = vld [vmem:[%s1509 + $0x40] sm:$0xff]
      %v1852 = vld [vmem:[%s1509 + $0x50] sm:$0xff]
      %v1853 = vld [vmem:[%s1509 + $0x60] sm:$0xff]
      %v1854 = vld [vmem:[%s1509 + $0x70] sm:$0xff]
      %v1855 = vpack.c.bf16 %v1848, %v1847
      %v1856 = vpack.c.bf16 %v1850, %v1849
      %v1857 = vpack.c.bf16 %v1852, %v1851
      %v1858 = vpack.c.bf16 %v1854, %v1853
      %s1859 = scalar_lea.vmem %s3, 120
      %v1860 = vld [vmem:[%s1859] sm:$0xf]
      %v1861 = vld [vmem:[%s1859 + $0x4] sm:$0xf]
      %v1862 = vld [vmem:[%s1859 + $0x8] sm:$0xf]
      %v1863 = vld [vmem:[%s1859 + $0xc] sm:$0xf]
      %v1864 = vld [vmem:[%s1859 + $0x10] sm:$0xf]
      %v1865 = vld [vmem:[%s1859 + $0x14] sm:$0xf]
      %v1866 = vld [vmem:[%s1859 + $0x18] sm:$0xf]
      %v1867 = vld [vmem:[%s1859 + $0x1c] sm:$0xf]
      %v1868 = vld [vmem:[%s1859 + $0x20] sm:$0xf]
      %v1869 = vld [vmem:[%s1859 + $0x24] sm:$0xf]
      %v1880 = vunpack.c.l.b16 %v1860
      %v1881 = vunpack.c.l.b16 %v1861
      %v1882 = vunpack.c.l.b16 %v1862
      %v1883 = vunpack.c.l.b16 %v1863
      %v1884 = vunpack.c.l.b16 %v1864
      %v1885 = vunpack.c.l.b16 %v1865
      %v1886 = vunpack.c.l.b16 %v1866
      %v1887 = vunpack.c.l.b16 %v1867
      %v1888 = vunpack.c.l.b16 %v1868
      %v1889 = vunpack.c.l.b16 %v1869
      %v1890 = vpack.c.b16 %v1881, %v1880
      %v1891 = vpack.c.b16 %v1883, %v1882
      %v1892 = vpack.c.b16 %v1885, %v1884
      %v1893 = vpack.c.b16 %v1887, %v1886
      %v1894 = vpack.c.b16 %v1889, %v1888
      %v1901 = vsel %vm280, %v1855, 0
      %v1904 = vsel %vm280, %v1856, 0
      %v1907 = vsel %vm280, %v1857, 0
      %v1910 = vsel %vm280, %v1858, 0
      %1912 = vmatpush.bf16.msra.mxu0 0
      %1913 = vmatpush.bf16.msra.mxu0 0
      %1914 = vmatpush.bf16.msra.mxu0 0
      %1915 = vmatpush.bf16.msra.mxu0 %v1894
      %1916 = vmatpush.bf16.msra.mxu0 %v1893
      %1917 = vmatpush.bf16.msra.mxu0 %v1892
      %1918 = vmatpush.bf16.msra.mxu0 %v1891
      %1919 = vmatpush.bf16.msra.mxu0 %v1890
      %1920 = vmatmul.bf16.gmra.mxu0 %v1901
      %v1921 = vpop.f32.mrf.mxu0
      %v1922 = vadd.f32 0.0, %v1921
      %v1923 = vpop.f32.mrf.mxu0
      %v1924 = vadd.f32 0.0, %v1923
      %1925 = vmatmul.bf16.gmra.mxu0 %v1904
      %v1926 = vpop.f32.mrf.mxu0
      %v1927 = vadd.f32 0.0, %v1926
      %v1928 = vpop.f32.mrf.mxu0
      %v1929 = vadd.f32 0.0, %v1928
      %1930 = vmatmul.bf16.gmra.mxu0 %v1907
      %v1931 = vpop.f32.mrf.mxu0
      %v1932 = vadd.f32 0.0, %v1931
      %v1933 = vpop.f32.mrf.mxu0
      %v1934 = vadd.f32 0.0, %v1933
      %1935 = vmatmul.bf16.gmra.mxu0 %v1910
      %v1936 = vpop.f32.mrf.mxu0
      %v1937 = vadd.f32 0.0, %v1936
      %v1938 = vpop.f32.mrf.mxu0
      %v1939 = vadd.f32 0.0, %v1938
      %1940 = vdwg.mxu0
      %v1941 = vadd.f32 %v1839, %v1922
      %v1942 = vadd.f32 %v1840, %v1924
      %v1943 = vadd.f32 %v1841, %v1927
      %v1944 = vadd.f32 %v1842, %v1929
      %v1945 = vadd.f32 %v1843, %v1932
      %v1946 = vadd.f32 %v1844, %v1934
      %v1947 = vadd.f32 %v1845, %v1937
      %v1948 = vadd.f32 %v1846, %v1939
      %v1949 = vld [vmem:[%s1509 + $0x1] sm:$0xff]
      %v1950 = vld [vmem:[%s1509 + $0x11] sm:$0xff]
      %v1951 = vld [vmem:[%s1509 + $0x21] sm:$0xff]
      %v1952 = vld [vmem:[%s1509 + $0x31] sm:$0xff]
      %v1953 = vld [vmem:[%s1509 + $0x41] sm:$0xff]
      %v1954 = vld [vmem:[%s1509 + $0x51] sm:$0xff]
      %v1955 = vld [vmem:[%s1509 + $0x61] sm:$0xff]
      %v1956 = vld [vmem:[%s1509 + $0x71] sm:$0xff]
      %v1957 = vpack.c.bf16 %v1950, %v1949
      %v1958 = vpack.c.bf16 %v1952, %v1951
      %v1959 = vpack.c.bf16 %v1954, %v1953
      %v1960 = vpack.c.bf16 %v1956, %v1955
      %s1961 = scalar_lea.vmem %s3, 160
      %v1962 = vld [vmem:[%s1961] sm:$0xf]
      %v1963 = vld [vmem:[%s1961 + $0x4] sm:$0xf]
      %v1964 = vld [vmem:[%s1961 + $0x8] sm:$0xf]
      %v1965 = vld [vmem:[%s1961 + $0xc] sm:$0xf]
      %v1966 = vld [vmem:[%s1961 + $0x10] sm:$0xf]
      %v1967 = vld [vmem:[%s1961 + $0x14] sm:$0xf]
      %v1968 = vld [vmem:[%s1961 + $0x18] sm:$0xf]
      %v1969 = vld [vmem:[%s1961 + $0x1c] sm:$0xf]
      %v1970 = vld [vmem:[%s1961 + $0x20] sm:$0xf]
      %v1971 = vld [vmem:[%s1961 + $0x24] sm:$0xf]
      %v1982 = vunpack.c.l.b16 %v1962
      %v1983 = vunpack.c.l.b16 %v1963
      %v1984 = vunpack.c.l.b16 %v1964
      %v1985 = vunpack.c.l.b16 %v1965
      %v1986 = vunpack.c.l.b16 %v1966
      %v1987 = vunpack.c.l.b16 %v1967
      %v1988 = vunpack.c.l.b16 %v1968
      %v1989 = vunpack.c.l.b16 %v1969
      %v1990 = vunpack.c.l.b16 %v1970
      %v1991 = vunpack.c.l.b16 %v1971
      %v1992 = vpack.c.b16 %v1983, %v1982
      %v1993 = vpack.c.b16 %v1985, %v1984
      %v1994 = vpack.c.b16 %v1987, %v1986
      %v1995 = vpack.c.b16 %v1989, %v1988
      %v1996 = vpack.c.b16 %v1991, %v1990
      %v2003 = vsel %vm280, %v1957, 0
      %v2006 = vsel %vm280, %v1958, 0
      %v2009 = vsel %vm280, %v1959, 0
      %v2012 = vsel %vm280, %v1960, 0
      %2014 = vmatpush.bf16.msra.mxu0 0
      %2015 = vmatpush.bf16.msra.mxu0 0
      %2016 = vmatpush.bf16.msra.mxu0 0
      %2017 = vmatpush.bf16.msra.mxu0 %v1996
      %2018 = vmatpush.bf16.msra.mxu0 %v1995
      %2019 = vmatpush.bf16.msra.mxu0 %v1994
      %2020 = vmatpush.bf16.msra.mxu0 %v1993
      %2021 = vmatpush.bf16.msra.mxu0 %v1992
      %2022 = vmatmul.bf16.gmra.mxu0 %v2003
      %v2023 = vpop.f32.mrf.mxu0
      %v2024 = vadd.f32 0.0, %v2023
      %v2025 = vpop.f32.mrf.mxu0
      %v2026 = vadd.f32 0.0, %v2025
      %2027 = vmatmul.bf16.gmra.mxu0 %v2006
      %v2028 = vpop.f32.mrf.mxu0
      %v2029 = vadd.f32 0.0, %v2028
      %v2030 = vpop.f32.mrf.mxu0
      %v2031 = vadd.f32 0.0, %v2030
      %2032 = vmatmul.bf16.gmra.mxu0 %v2009
      %v2033 = vpop.f32.mrf.mxu0
      %v2034 = vadd.f32 0.0, %v2033
      %v2035 = vpop.f32.mrf.mxu0
      %v2036 = vadd.f32 0.0, %v2035
      %2037 = vmatmul.bf16.gmra.mxu0 %v2012
      %v2038 = vpop.f32.mrf.mxu0
      %v2039 = vadd.f32 0.0, %v2038
      %v2040 = vpop.f32.mrf.mxu0
      %v2041 = vadd.f32 0.0, %v2040
      %2042 = vdwg.mxu0
      %v2043 = vadd.f32 %v1941, %v2024
      %v2044 = vadd.f32 %v1942, %v2026
      %v2045 = vadd.f32 %v1943, %v2029
      %v2046 = vadd.f32 %v1944, %v2031
      %v2047 = vadd.f32 %v1945, %v2034
      %v2048 = vadd.f32 %v1946, %v2036
      %v2049 = vadd.f32 %v1947, %v2039
      %v2050 = vadd.f32 %v1948, %v2041
      %v2051 = vld [vmem:[%s1509 + $0x2] sm:$0xff]
      %v2052 = vld [vmem:[%s1509 + $0x12] sm:$0xff]
      %v2053 = vld [vmem:[%s1509 + $0x22] sm:$0xff]
      %v2054 = vld [vmem:[%s1509 + $0x32] sm:$0xff]
      %v2055 = vld [vmem:[%s1509 + $0x42] sm:$0xff]
      %v2056 = vld [vmem:[%s1509 + $0x52] sm:$0xff]
      %v2057 = vld [vmem:[%s1509 + $0x62] sm:$0xff]
      %v2058 = vld [vmem:[%s1509 + $0x72] sm:$0xff]
      %v2059 = vpack.c.bf16 %v2052, %v2051
      %v2060 = vpack.c.bf16 %v2054, %v2053
      %v2061 = vpack.c.bf16 %v2056, %v2055
      %v2062 = vpack.c.bf16 %v2058, %v2057
      %s2063 = scalar_lea.vmem %s3, 200
      %v2064 = vld [vmem:[%s2063] sm:$0xf]
      %v2065 = vld [vmem:[%s2063 + $0x4] sm:$0xf]
      %v2066 = vld [vmem:[%s2063 + $0x8] sm:$0xf]
      %v2067 = vld [vmem:[%s2063 + $0xc] sm:$0xf]
      %v2068 = vld [vmem:[%s2063 + $0x10] sm:$0xf]
      %v2069 = vld [vmem:[%s2063 + $0x14] sm:$0xf]
      %v2070 = vld [vmem:[%s2063 + $0x18] sm:$0xf]
      %v2071 = vld [vmem:[%s2063 + $0x1c] sm:$0xf]
      %v2072 = vld [vmem:[%s2063 + $0x20] sm:$0xf]
      %v2073 = vld [vmem:[%s2063 + $0x24] sm:$0xf]
      %v2084 = vunpack.c.l.b16 %v2064
      %v2085 = vunpack.c.l.b16 %v2065
      %v2086 = vunpack.c.l.b16 %v2066
      %v2087 = vunpack.c.l.b16 %v2067
      %v2088 = vunpack.c.l.b16 %v2068
      %v2089 = vunpack.c.l.b16 %v2069
      %v2090 = vunpack.c.l.b16 %v2070
      %v2091 = vunpack.c.l.b16 %v2071
      %v2092 = vunpack.c.l.b16 %v2072
      %v2093 = vunpack.c.l.b16 %v2073
      %v2094 = vpack.c.b16 %v2085, %v2084
      %v2095 = vpack.c.b16 %v2087, %v2086
      %v2096 = vpack.c.b16 %v2089, %v2088
      %v2097 = vpack.c.b16 %v2091, %v2090
      %v2098 = vpack.c.b16 %v2093, %v2092
      %v2105 = vsel %vm280, %v2059, 0
      %v2108 = vsel %vm280, %v2060, 0
      %v2111 = vsel %vm280, %v2061, 0
      %v2114 = vsel %vm280, %v2062, 0
      %2116 = vmatpush.bf16.msra.mxu0 0
      %2117 = vmatpush.bf16.msra.mxu0 0
      %2118 = vmatpush.bf16.msra.mxu0 0
      %2119 = vmatpush.bf16.msra.mxu0 %v2098
      %2120 = vmatpush.bf16.msra.mxu0 %v2097
      %2121 = vmatpush.bf16.msra.mxu0 %v2096
      %2122 = vmatpush.bf16.msra.mxu0 %v2095
      %2123 = vmatpush.bf16.msra.mxu0 %v2094
      %2124 = vmatmul.bf16.gmra.mxu0 %v2105
      %v2125 = vpop.f32.mrf.mxu0
      %v2126 = vadd.f32 0.0, %v2125
      %v2127 = vpop.f32.mrf.mxu0
      %v2128 = vadd.f32 0.0, %v2127
      %2129 = vmatmul.bf16.gmra.mxu0 %v2108
      %v2130 = vpop.f32.mrf.mxu0
      %v2131 = vadd.f32 0.0, %v2130
      %v2132 = vpop.f32.mrf.mxu0
      %v2133 = vadd.f32 0.0, %v2132
      %2134 = vmatmul.bf16.gmra.mxu0 %v2111
      %v2135 = vpop.f32.mrf.mxu0
      %v2136 = vadd.f32 0.0, %v2135
      %v2137 = vpop.f32.mrf.mxu0
      %v2138 = vadd.f32 0.0, %v2137
      %2139 = vmatmul.bf16.gmra.mxu0 %v2114
      %v2140 = vpop.f32.mrf.mxu0
      %v2141 = vadd.f32 0.0, %v2140
      %v2142 = vpop.f32.mrf.mxu0
      %v2143 = vadd.f32 0.0, %v2142
      %2144 = vdwg.mxu0
      %v2145 = vadd.f32 %v2043, %v2126
      %v2146 = vadd.f32 %v2044, %v2128
      %v2147 = vadd.f32 %v2045, %v2131
      %v2148 = vadd.f32 %v2046, %v2133
      %v2149 = vadd.f32 %v2047, %v2136
      %v2150 = vadd.f32 %v2048, %v2138
      %v2151 = vadd.f32 %v2049, %v2141
      %v2152 = vadd.f32 %v2050, %v2143
      %v2153 = vld [vmem:[%s1520] sm:$0xff]
      %v2154 = vld [vmem:[%s1520 + $0x10] sm:$0xff]
      %v2155 = vld [vmem:[%s1520 + $0x20] sm:$0xff]
      %v2156 = vld [vmem:[%s1520 + $0x30] sm:$0xff]
      %v2157 = vld [vmem:[%s1520 + $0x40] sm:$0xff]
      %v2158 = vld [vmem:[%s1520 + $0x50] sm:$0xff]
      %v2159 = vld [vmem:[%s1520 + $0x60] sm:$0xff]
      %v2160 = vld [vmem:[%s1520 + $0x70] sm:$0xff]
      %v2161 = vpack.c.bf16 %v2154, %v2153
      %v2162 = vpack.c.bf16 %v2156, %v2155
      %v2163 = vpack.c.bf16 %v2158, %v2157
      %v2164 = vpack.c.bf16 %v2160, %v2159
      %s2165 = scalar_lea.vmem %s3, 240
      %v2166 = vld [vmem:[%s2165] sm:$0xf]
      %v2167 = vld [vmem:[%s2165 + $0x4] sm:$0xf]
      %v2168 = vld [vmem:[%s2165 + $0x8] sm:$0xf]
      %v2169 = vld [vmem:[%s2165 + $0xc] sm:$0xf]
      %v2170 = vld [vmem:[%s2165 + $0x10] sm:$0xf]
      %v2171 = vld [vmem:[%s2165 + $0x14] sm:$0xf]
      %v2172 = vld [vmem:[%s2165 + $0x18] sm:$0xf]
      %v2173 = vld [vmem:[%s2165 + $0x1c] sm:$0xf]
      %v2174 = vld [vmem:[%s2165 + $0x20] sm:$0xf]
      %v2175 = vld [vmem:[%s2165 + $0x24] sm:$0xf]
      %v2186 = vunpack.c.l.b16 %v2166
      %v2187 = vunpack.c.l.b16 %v2167
      %v2188 = vunpack.c.l.b16 %v2168
      %v2189 = vunpack.c.l.b16 %v2169
      %v2190 = vunpack.c.l.b16 %v2170
      %v2191 = vunpack.c.l.b16 %v2171
      %v2192 = vunpack.c.l.b16 %v2172
      %v2193 = vunpack.c.l.b16 %v2173
      %v2194 = vunpack.c.l.b16 %v2174
      %v2195 = vunpack.c.l.b16 %v2175
      %v2196 = vpack.c.b16 %v2187, %v2186
      %v2197 = vpack.c.b16 %v2189, %v2188
      %v2198 = vpack.c.b16 %v2191, %v2190
      %v2199 = vpack.c.b16 %v2193, %v2192
      %v2200 = vpack.c.b16 %v2195, %v2194
      %v2207 = vsel %vm280, %v2161, 0
      %v2210 = vsel %vm280, %v2162, 0
      %v2213 = vsel %vm280, %v2163, 0
      %v2216 = vsel %vm280, %v2164, 0
      %2218 = vmatpush.bf16.msra.mxu0 0
      %2219 = vmatpush.bf16.msra.mxu0 0
      %2220 = vmatpush.bf16.msra.mxu0 0
      %2221 = vmatpush.bf16.msra.mxu0 %v2200
      %2222 = vmatpush.bf16.msra.mxu0 %v2199
      %2223 = vmatpush.bf16.msra.mxu0 %v2198
      %2224 = vmatpush.bf16.msra.mxu0 %v2197
      %2225 = vmatpush.bf16.msra.mxu0 %v2196
      %2226 = vmatmul.bf16.gmra.mxu0 %v2207
      %v2227 = vpop.f32.mrf.mxu0
      %v2228 = vadd.f32 0.0, %v2227
      %v2229 = vpop.f32.mrf.mxu0
      %v2230 = vadd.f32 0.0, %v2229
      %2231 = vmatmul.bf16.gmra.mxu0 %v2210
      %v2232 = vpop.f32.mrf.mxu0
      %v2233 = vadd.f32 0.0, %v2232
      %v2234 = vpop.f32.mrf.mxu0
      %v2235 = vadd.f32 0.0, %v2234
      %2236 = vmatmul.bf16.gmra.mxu0 %v2213
      %v2237 = vpop.f32.mrf.mxu0
      %v2238 = vadd.f32 0.0, %v2237
      %v2239 = vpop.f32.mrf.mxu0
      %v2240 = vadd.f32 0.0, %v2239
      %2241 = vmatmul.bf16.gmra.mxu0 %v2216
      %v2242 = vpop.f32.mrf.mxu0
      %v2243 = vadd.f32 0.0, %v2242
      %v2244 = vpop.f32.mrf.mxu0
      %v2245 = vadd.f32 0.0, %v2244
      %2246 = vdwg.mxu0
      %v2247 = vadd.f32 %v2145, %v2228
      %v2248 = vadd.f32 %v2146, %v2230
      %v2249 = vadd.f32 %v2147, %v2233
      %v2250 = vadd.f32 %v2148, %v2235
      %v2251 = vadd.f32 %v2149, %v2238
      %v2252 = vadd.f32 %v2150, %v2240
      %v2253 = vadd.f32 %v2151, %v2243
      %v2254 = vadd.f32 %v2152, %v2245
      %v2255 = vld [vmem:[%s1520 + $0x1] sm:$0xff]
      %v2256 = vld [vmem:[%s1520 + $0x11] sm:$0xff]
      %v2257 = vld [vmem:[%s1520 + $0x21] sm:$0xff]
      %v2258 = vld [vmem:[%s1520 + $0x31] sm:$0xff]
      %v2259 = vld [vmem:[%s1520 + $0x41] sm:$0xff]
      %v2260 = vld [vmem:[%s1520 + $0x51] sm:$0xff]
      %v2261 = vld [vmem:[%s1520 + $0x61] sm:$0xff]
      %v2262 = vld [vmem:[%s1520 + $0x71] sm:$0xff]
      %v2263 = vpack.c.bf16 %v2256, %v2255
      %v2264 = vpack.c.bf16 %v2258, %v2257
      %v2265 = vpack.c.bf16 %v2260, %v2259
      %v2266 = vpack.c.bf16 %v2262, %v2261
      %s2267 = scalar_lea.vmem %s3, 280
      %v2268 = vld [vmem:[%s2267] sm:$0xf]
      %v2269 = vld [vmem:[%s2267 + $0x4] sm:$0xf]
      %v2270 = vld [vmem:[%s2267 + $0x8] sm:$0xf]
      %v2271 = vld [vmem:[%s2267 + $0xc] sm:$0xf]
      %v2272 = vld [vmem:[%s2267 + $0x10] sm:$0xf]
      %v2273 = vld [vmem:[%s2267 + $0x14] sm:$0xf]
      %v2274 = vld [vmem:[%s2267 + $0x18] sm:$0xf]
      %v2275 = vld [vmem:[%s2267 + $0x1c] sm:$0xf]
      %v2276 = vld [vmem:[%s2267 + $0x20] sm:$0xf]
      %v2277 = vld [vmem:[%s2267 + $0x24] sm:$0xf]
      %v2288 = vunpack.c.l.b16 %v2268
      %v2289 = vunpack.c.l.b16 %v2269
      %v2290 = vunpack.c.l.b16 %v2270
      %v2291 = vunpack.c.l.b16 %v2271
      %v2292 = vunpack.c.l.b16 %v2272
      %v2293 = vunpack.c.l.b16 %v2273
      %v2294 = vunpack.c.l.b16 %v2274
      %v2295 = vunpack.c.l.b16 %v2275
      %v2296 = vunpack.c.l.b16 %v2276
      %v2297 = vunpack.c.l.b16 %v2277
      %v2298 = vpack.c.b16 %v2289, %v2288
      %v2299 = vpack.c.b16 %v2291, %v2290
      %v2300 = vpack.c.b16 %v2293, %v2292
      %v2301 = vpack.c.b16 %v2295, %v2294
      %v2302 = vpack.c.b16 %v2297, %v2296
      %v2309 = vsel %vm280, %v2263, 0
      %v2312 = vsel %vm280, %v2264, 0
      %v2315 = vsel %vm280, %v2265, 0
      %v2318 = vsel %vm280, %v2266, 0
      %2320 = vmatpush.bf16.msra.mxu0 0
      %2321 = vmatpush.bf16.msra.mxu0 0
      %2322 = vmatpush.bf16.msra.mxu0 0
      %2323 = vmatpush.bf16.msra.mxu0 %v2302
      %2324 = vmatpush.bf16.msra.mxu0 %v2301
      %2325 = vmatpush.bf16.msra.mxu0 %v2300
      %2326 = vmatpush.bf16.msra.mxu0 %v2299
      %2327 = vmatpush.bf16.msra.mxu0 %v2298
      %2328 = vmatmul.bf16.gmra.mxu0 %v2309
      %v2329 = vpop.f32.mrf.mxu0
      %v2330 = vadd.f32 0.0, %v2329
      %v2331 = vpop.f32.mrf.mxu0
      %v2332 = vadd.f32 0.0, %v2331
      %2333 = vmatmul.bf16.gmra.mxu0 %v2312
      %v2334 = vpop.f32.mrf.mxu0
      %v2335 = vadd.f32 0.0, %v2334
      %v2336 = vpop.f32.mrf.mxu0
      %v2337 = vadd.f32 0.0, %v2336
      %2338 = vmatmul.bf16.gmra.mxu0 %v2315
      %v2339 = vpop.f32.mrf.mxu0
      %v2340 = vadd.f32 0.0, %v2339
      %v2341 = vpop.f32.mrf.mxu0
      %v2342 = vadd.f32 0.0, %v2341
      %2343 = vmatmul.bf16.gmra.mxu0 %v2318
      %v2344 = vpop.f32.mrf.mxu0
      %v2345 = vadd.f32 0.0, %v2344
      %v2346 = vpop.f32.mrf.mxu0
      %v2347 = vadd.f32 0.0, %v2346
      %2348 = vdwg.mxu0
      %v2349 = vadd.f32 %v2247, %v2330
      %v2350 = vadd.f32 %v2248, %v2332
      %v2351 = vadd.f32 %v2249, %v2335
      %v2352 = vadd.f32 %v2250, %v2337
      %v2353 = vadd.f32 %v2251, %v2340
      %v2354 = vadd.f32 %v2252, %v2342
      %v2355 = vadd.f32 %v2253, %v2345
      %v2356 = vadd.f32 %v2254, %v2347
      %v2357 = vld [vmem:[%s1520 + $0x2] sm:$0xff]
      %v2358 = vld [vmem:[%s1520 + $0x12] sm:$0xff]
      %v2359 = vld [vmem:[%s1520 + $0x22] sm:$0xff]
      %v2360 = vld [vmem:[%s1520 + $0x32] sm:$0xff]
      %v2361 = vld [vmem:[%s1520 + $0x42] sm:$0xff]
      %v2362 = vld [vmem:[%s1520 + $0x52] sm:$0xff]
      %v2363 = vld [vmem:[%s1520 + $0x62] sm:$0xff]
      %v2364 = vld [vmem:[%s1520 + $0x72] sm:$0xff]
      %v2365 = vpack.c.bf16 %v2358, %v2357
      %v2366 = vpack.c.bf16 %v2360, %v2359
      %v2367 = vpack.c.bf16 %v2362, %v2361
      %v2368 = vpack.c.bf16 %v2364, %v2363
      %s2369 = scalar_lea.vmem %s3, 320
      %v2370 = vld [vmem:[%s2369] sm:$0xf]
      %v2371 = vld [vmem:[%s2369 + $0x4] sm:$0xf]
      %v2372 = vld [vmem:[%s2369 + $0x8] sm:$0xf]
      %v2373 = vld [vmem:[%s2369 + $0xc] sm:$0xf]
      %v2374 = vld [vmem:[%s2369 + $0x10] sm:$0xf]
      %v2375 = vld [vmem:[%s2369 + $0x14] sm:$0xf]
      %v2376 = vld [vmem:[%s2369 + $0x18] sm:$0xf]
      %v2377 = vld [vmem:[%s2369 + $0x1c] sm:$0xf]
      %v2378 = vld [vmem:[%s2369 + $0x20] sm:$0xf]
      %v2379 = vld [vmem:[%s2369 + $0x24] sm:$0xf]
      %v2390 = vunpack.c.l.b16 %v2370
      %v2391 = vunpack.c.l.b16 %v2371
      %v2392 = vunpack.c.l.b16 %v2372
      %v2393 = vunpack.c.l.b16 %v2373
      %v2394 = vunpack.c.l.b16 %v2374
      %v2395 = vunpack.c.l.b16 %v2375
      %v2396 = vunpack.c.l.b16 %v2376
      %v2397 = vunpack.c.l.b16 %v2377
      %v2398 = vunpack.c.l.b16 %v2378
      %v2399 = vunpack.c.l.b16 %v2379
      %v2400 = vpack.c.b16 %v2391, %v2390
      %v2401 = vpack.c.b16 %v2393, %v2392
      %v2402 = vpack.c.b16 %v2395, %v2394
      %v2403 = vpack.c.b16 %v2397, %v2396
      %v2404 = vpack.c.b16 %v2399, %v2398
      %v2411 = vsel %vm280, %v2365, 0
      %v2414 = vsel %vm280, %v2366, 0
      %v2417 = vsel %vm280, %v2367, 0
      %v2420 = vsel %vm280, %v2368, 0
      %2422 = vmatpush.bf16.msra.mxu0 0
      %2423 = vmatpush.bf16.msra.mxu0 0
      %2424 = vmatpush.bf16.msra.mxu0 0
      %2425 = vmatpush.bf16.msra.mxu0 %v2404
      %2426 = vmatpush.bf16.msra.mxu0 %v2403
      %2427 = vmatpush.bf16.msra.mxu0 %v2402
      %2428 = vmatpush.bf16.msra.mxu0 %v2401
      %2429 = vmatpush.bf16.msra.mxu0 %v2400
      %2430 = vmatmul.bf16.gmra.mxu0 %v2411
      %v2431 = vpop.f32.mrf.mxu0
      %v2432 = vadd.f32 0.0, %v2431
      %v2433 = vpop.f32.mrf.mxu0
      %v2434 = vadd.f32 0.0, %v2433
      %2435 = vmatmul.bf16.gmra.mxu0 %v2414
      %v2436 = vpop.f32.mrf.mxu0
      %v2437 = vadd.f32 0.0, %v2436
      %v2438 = vpop.f32.mrf.mxu0
      %v2439 = vadd.f32 0.0, %v2438
      %2440 = vmatmul.bf16.gmra.mxu0 %v2417
      %v2441 = vpop.f32.mrf.mxu0
      %v2442 = vadd.f32 0.0, %v2441
      %v2443 = vpop.f32.mrf.mxu0
      %v2444 = vadd.f32 0.0, %v2443
      %2445 = vmatmul.bf16.gmra.mxu0 %v2420
      %v2446 = vpop.f32.mrf.mxu0
      %v2447 = vadd.f32 0.0, %v2446
      %v2448 = vpop.f32.mrf.mxu0
      %v2449 = vadd.f32 0.0, %v2448
      %2450 = vdwg.mxu0
      %v2451 = vadd.f32 %v2349, %v2432
      %v2452 = vadd.f32 %v2350, %v2434
      %v2453 = vadd.f32 %v2351, %v2437
      %v2454 = vadd.f32 %v2352, %v2439
      %v2455 = vadd.f32 %v2353, %v2442
      %v2456 = vadd.f32 %v2354, %v2444
      %v2457 = vadd.f32 %v2355, %v2447
      %v2458 = vadd.f32 %v2356, %v2449
      %v2459 = vld [vmem:[%s4] sm:$0x1]
      %v2461 = vperm.slane %v2459, 0
      %v2463 = vadd.f32 %v2451, %v2461
      %v2464 = vadd.f32 %v2452, %v2461
      %v2465 = vadd.f32 %v2453, %v2461
      %v2466 = vadd.f32 %v2454, %v2461
      %v2467 = vadd.f32 %v2455, %v2461
      %v2468 = vadd.f32 %v2456, %v2461
      %v2469 = vadd.f32 %v2457, %v2461
      %v2470 = vadd.f32 %v2458, %v2461
      %v2471 = vmax.f32 %v2463, 0.0
      %v2472 = vmax.f32 %v2464, 0.0
      %v2473 = vmax.f32 %v2465, 0.0
      %v2474 = vmax.f32 %v2466, 0.0
      %v2475 = vmax.f32 %v2467, 0.0
      %v2476 = vmax.f32 %v2468, 0.0
      %v2477 = vmax.f32 %v2469, 0.0
      %v2478 = vmax.f32 %v2470, 0.0
      %s2479 = scalar_lea.vmem [#allocation3], 16
      %2480 = vst.msk [vmem:[%s2479 + $0x1] sm:$0xff] %vm280, %v2471
      %2481 = vst.msk [vmem:[%s2479 + $0x11] sm:$0xff] %vm280, %v2472
      %2482 = vst.msk [vmem:[%s2479 + $0x21] sm:$0xff] %vm280, %v2473
      %2483 = vst.msk [vmem:[%s2479 + $0x31] sm:$0xff] %vm280, %v2474
      %2484 = vst.msk [vmem:[%s2479 + $0x41] sm:$0xff] %vm280, %v2475
      %2485 = vst.msk [vmem:[%s2479 + $0x51] sm:$0xff] %vm280, %v2476
      %2486 = vst.msk [vmem:[%s2479 + $0x61] sm:$0xff] %vm280, %v2477
      %2487 = vst.msk [vmem:[%s2479 + $0x71] sm:$0xff] %vm280, %v2478
      %v2488 = vld [vmem:[#allocation3] sm:$0xff]
      %v2489 = vld [vmem:[#allocation3 + $0x10] sm:$0xff]
      %v2490 = vld [vmem:[#allocation3 + $0x20] sm:$0xff]
      %v2491 = vld [vmem:[#allocation3 + $0x30] sm:$0xff]
      %v2492 = vld [vmem:[#allocation3 + $0x40] sm:$0xff]
      %v2493 = vld [vmem:[#allocation3 + $0x50] sm:$0xff]
      %v2494 = vld [vmem:[#allocation3 + $0x60] sm:$0xff]
      %v2495 = vld [vmem:[#allocation3 + $0x70] sm:$0xff]
      %v2496 = vpack.c.bf16 %v2489, %v2488
      %v2497 = vpack.c.bf16 %v2491, %v2490
      %v2498 = vpack.c.bf16 %v2493, %v2492
      %v2499 = vpack.c.bf16 %v2495, %v2494
      %v2500 = vld [vmem:[%s5] sm:$0xf]
      %v2501 = vld [vmem:[%s5 + $0x4] sm:$0xf]
      %v2502 = vld [vmem:[%s5 + $0x8] sm:$0xf]
      %v2503 = vld [vmem:[%s5 + $0xc] sm:$0xf]
      %v2504 = vld [vmem:[%s5 + $0x10] sm:$0xf]
      %v2505 = vld [vmem:[%s5 + $0x14] sm:$0xf]
      %v2506 = vld [vmem:[%s5 + $0x18] sm:$0xf]
      %v2507 = vld [vmem:[%s5 + $0x1c] sm:$0xf]
      %v2508 = vld [vmem:[%s5 + $0x20] sm:$0xf]
      %v2509 = vld [vmem:[%s5 + $0x24] sm:$0xf]
      %v2510 = vld [vmem:[#allocation3 + $0x1] sm:$0xff]
      %v2511 = vld [vmem:[#allocation3 + $0x11] sm:$0xff]
      %v2512 = vld [vmem:[#allocation3 + $0x21] sm:$0xff]
      %v2513 = vld [vmem:[#allocation3 + $0x31] sm:$0xff]
      %v2514 = vld [vmem:[#allocation3 + $0x41] sm:$0xff]
      %v2515 = vld [vmem:[#allocation3 + $0x51] sm:$0xff]
      %v2516 = vld [vmem:[#allocation3 + $0x61] sm:$0xff]
      %v2517 = vld [vmem:[#allocation3 + $0x71] sm:$0xff]
      %v2518 = vpack.c.bf16 %v2511, %v2510
      %v2519 = vpack.c.bf16 %v2513, %v2512
      %v2520 = vpack.c.bf16 %v2515, %v2514
      %v2521 = vpack.c.bf16 %v2517, %v2516
      %s2522 = scalar_lea.vmem %s5, 40
      %v2523 = vld [vmem:[%s2522] sm:$0xf]
      %v2524 = vld [vmem:[%s2522 + $0x4] sm:$0xf]
      %v2525 = vld [vmem:[%s2522 + $0x8] sm:$0xf]
      %v2526 = vld [vmem:[%s2522 + $0xc] sm:$0xf]
      %v2527 = vld [vmem:[%s2522 + $0x10] sm:$0xf]
      %v2528 = vld [vmem:[%s2522 + $0x14] sm:$0xf]
      %v2529 = vld [vmem:[%s2522 + $0x18] sm:$0xf]
      %v2530 = vld [vmem:[%s2522 + $0x1c] sm:$0xf]
      %v2531 = vld [vmem:[%s2522 + $0x20] sm:$0xf]
      %v2532 = vld [vmem:[%s2522 + $0x24] sm:$0xf]
      %v2543 = vunpack.c.l.b16 %v2523
      %v2544 = vunpack.c.l.b16 %v2524
      %v2545 = vunpack.c.l.b16 %v2525
      %v2546 = vunpack.c.l.b16 %v2526
      %v2547 = vunpack.c.l.b16 %v2527
      %v2548 = vunpack.c.l.b16 %v2528
      %v2549 = vunpack.c.l.b16 %v2529
      %v2550 = vunpack.c.l.b16 %v2530
      %v2551 = vunpack.c.l.b16 %v2531
      %v2552 = vunpack.c.l.b16 %v2532
      %v2553 = vpack.c.b16 %v2544, %v2543
      %v2554 = vpack.c.b16 %v2546, %v2545
      %v2555 = vpack.c.b16 %v2548, %v2547
      %v2556 = vpack.c.b16 %v2550, %v2549
      %v2557 = vpack.c.b16 %v2552, %v2551
      %v2564 = vsel %vm280, %v2518, 0
      %v2567 = vsel %vm280, %v2519, 0
      %v2570 = vsel %vm280, %v2520, 0
      %v2573 = vsel %vm280, %v2521, 0
      %2575 = vmatpush.bf16.msra.mxu0 0
      %2576 = vmatpush.bf16.msra.mxu0 0
      %2577 = vmatpush.bf16.msra.mxu0 0
      %2578 = vmatpush.bf16.msra.mxu0 %v2557
      %2579 = vmatpush.bf16.msra.mxu0 %v2556
      %2580 = vmatpush.bf16.msra.mxu0 %v2555
      %2581 = vmatpush.bf16.msra.mxu0 %v2554
      %2582 = vmatpush.bf16.msra.mxu0 %v2553
      %2583 = vmatmul.bf16.gmra.mxu0 %v2564
      %v2584 = vpop.f32.mrf.mxu0
      %v2585 = vadd.f32 0.0, %v2584
      %v2586 = vpop.f32.mrf.mxu0
      %v2587 = vadd.f32 0.0, %v2586
      %2588 = vmatmul.bf16.gmra.mxu0 %v2567
      %v2589 = vpop.f32.mrf.mxu0
      %v2590 = vadd.f32 0.0, %v2589
      %v2591 = vpop.f32.mrf.mxu0
      %v2592 = vadd.f32 0.0, %v2591
      %2593 = vmatmul.bf16.gmra.mxu0 %v2570
      %v2594 = vpop.f32.mrf.mxu0
      %v2595 = vadd.f32 0.0, %v2594
      %v2596 = vpop.f32.mrf.mxu0
      %v2597 = vadd.f32 0.0, %v2596
      %2598 = vmatmul.bf16.gmra.mxu0 %v2573
      %v2599 = vpop.f32.mrf.mxu0
      %v2600 = vadd.f32 0.0, %v2599
      %v2601 = vpop.f32.mrf.mxu0
      %v2602 = vadd.f32 0.0, %v2601
      %2603 = vdwg.mxu0
      %v2614 = vunpack.c.l.b16 %v2500
      %v2615 = vunpack.c.l.b16 %v2501
      %v2616 = vunpack.c.l.b16 %v2502
      %v2617 = vunpack.c.l.b16 %v2503
      %v2618 = vunpack.c.l.b16 %v2504
      %v2619 = vunpack.c.l.b16 %v2505
      %v2620 = vunpack.c.l.b16 %v2506
      %v2621 = vunpack.c.l.b16 %v2507
      %v2622 = vunpack.c.l.b16 %v2508
      %v2623 = vunpack.c.l.b16 %v2509
      %v2624 = vpack.c.b16 %v2615, %v2614
      %v2625 = vpack.c.b16 %v2617, %v2616
      %v2626 = vpack.c.b16 %v2619, %v2618
      %v2627 = vpack.c.b16 %v2621, %v2620
      %v2628 = vpack.c.b16 %v2623, %v2622
      %v2635 = vsel %vm280, %v2496, 0
      %v2638 = vsel %vm280, %v2497, 0
      %v2641 = vsel %vm280, %v2498, 0
      %v2644 = vsel %vm280, %v2499, 0
      %2646 = vmatpush.bf16.msra.mxu0 0
      %2647 = vmatpush.bf16.msra.mxu0 0
      %2648 = vmatpush.bf16.msra.mxu0 0
      %2649 = vmatpush.bf16.msra.mxu0 %v2628
      %2650 = vmatpush.bf16.msra.mxu0 %v2627
      %2651 = vmatpush.bf16.msra.mxu0 %v2626
      %2652 = vmatpush.bf16.msra.mxu0 %v2625
      %2653 = vmatpush.bf16.msra.mxu0 %v2624
      %2654 = vmatmul.bf16.gmra.mxu0 %v2635
      %v2655 = vpop.f32.mrf.mxu0
      %v2656 = vadd.f32 %v2585, %v2655
      %v2657 = vpop.f32.mrf.mxu0
      %v2658 = vadd.f32 %v2587, %v2657
      %2659 = vmatmul.bf16.gmra.mxu0 %v2638
      %v2660 = vpop.f32.mrf.mxu0
      %v2661 = vadd.f32 %v2590, %v2660
      %v2662 = vpop.f32.mrf.mxu0
      %v2663 = vadd.f32 %v2592, %v2662
      %2664 = vmatmul.bf16.gmra.mxu0 %v2641
      %v2665 = vpop.f32.mrf.mxu0
      %v2666 = vadd.f32 %v2595, %v2665
      %v2667 = vpop.f32.mrf.mxu0
      %v2668 = vadd.f32 %v2597, %v2667
      %2669 = vmatmul.bf16.gmra.mxu0 %v2644
      %v2670 = vpop.f32.mrf.mxu0
      %v2671 = vadd.f32 %v2600, %v2670
      %v2672 = vpop.f32.mrf.mxu0
      %v2673 = vadd.f32 %v2602, %v2672
      %2674 = vdwg.mxu0
      %v2675 = vld [vmem:[#allocation3 + $0x2] sm:$0xff]
      %v2676 = vld [vmem:[#allocation3 + $0x12] sm:$0xff]
      %v2677 = vld [vmem:[#allocation3 + $0x22] sm:$0xff]
      %v2678 = vld [vmem:[#allocation3 + $0x32] sm:$0xff]
      %v2679 = vld [vmem:[#allocation3 + $0x42] sm:$0xff]
      %v2680 = vld [vmem:[#allocation3 + $0x52] sm:$0xff]
      %v2681 = vld [vmem:[#allocation3 + $0x62] sm:$0xff]
      %v2682 = vld [vmem:[#allocation3 + $0x72] sm:$0xff]
      %v2683 = vpack.c.bf16 %v2676, %v2675
      %v2684 = vpack.c.bf16 %v2678, %v2677
      %v2685 = vpack.c.bf16 %v2680, %v2679
      %v2686 = vpack.c.bf16 %v2682, %v2681
      %s2687 = scalar_lea.vmem %s5, 80
      %v2688 = vld [vmem:[%s2687] sm:$0xf]
      %v2689 = vld [vmem:[%s2687 + $0x4] sm:$0xf]
      %v2690 = vld [vmem:[%s2687 + $0x8] sm:$0xf]
      %v2691 = vld [vmem:[%s2687 + $0xc] sm:$0xf]
      %v2692 = vld [vmem:[%s2687 + $0x10] sm:$0xf]
      %v2693 = vld [vmem:[%s2687 + $0x14] sm:$0xf]
      %v2694 = vld [vmem:[%s2687 + $0x18] sm:$0xf]
      %v2695 = vld [vmem:[%s2687 + $0x1c] sm:$0xf]
      %v2696 = vld [vmem:[%s2687 + $0x20] sm:$0xf]
      %v2697 = vld [vmem:[%s2687 + $0x24] sm:$0xf]
      %v2708 = vunpack.c.l.b16 %v2688
      %v2709 = vunpack.c.l.b16 %v2689
      %v2710 = vunpack.c.l.b16 %v2690
      %v2711 = vunpack.c.l.b16 %v2691
      %v2712 = vunpack.c.l.b16 %v2692
      %v2713 = vunpack.c.l.b16 %v2693
      %v2714 = vunpack.c.l.b16 %v2694
      %v2715 = vunpack.c.l.b16 %v2695
      %v2716 = vunpack.c.l.b16 %v2696
      %v2717 = vunpack.c.l.b16 %v2697
      %v2718 = vpack.c.b16 %v2709, %v2708
      %v2719 = vpack.c.b16 %v2711, %v2710
      %v2720 = vpack.c.b16 %v2713, %v2712
      %v2721 = vpack.c.b16 %v2715, %v2714
      %v2722 = vpack.c.b16 %v2717, %v2716
      %v2729 = vsel %vm280, %v2683, 0
      %v2732 = vsel %vm280, %v2684, 0
      %v2735 = vsel %vm280, %v2685, 0
      %v2738 = vsel %vm280, %v2686, 0
      %2740 = vmatpush.bf16.msra.mxu0 0
      %2741 = vmatpush.bf16.msra.mxu0 0
      %2742 = vmatpush.bf16.msra.mxu0 0
      %2743 = vmatpush.bf16.msra.mxu0 %v2722
      %2744 = vmatpush.bf16.msra.mxu0 %v2721
      %2745 = vmatpush.bf16.msra.mxu0 %v2720
      %2746 = vmatpush.bf16.msra.mxu0 %v2719
      %2747 = vmatpush.bf16.msra.mxu0 %v2718
      %2748 = vmatmul.bf16.gmra.mxu0 %v2729
      %v2749 = vpop.f32.mrf.mxu0
      %v2750 = vadd.f32 0.0, %v2749
      %v2751 = vpop.f32.mrf.mxu0
      %v2752 = vadd.f32 0.0, %v2751
      %2753 = vmatmul.bf16.gmra.mxu0 %v2732
      %v2754 = vpop.f32.mrf.mxu0
      %v2755 = vadd.f32 0.0, %v2754
      %v2756 = vpop.f32.mrf.mxu0
      %v2757 = vadd.f32 0.0, %v2756
      %2758 = vmatmul.bf16.gmra.mxu0 %v2735
      %v2759 = vpop.f32.mrf.mxu0
      %v2760 = vadd.f32 0.0, %v2759
      %v2761 = vpop.f32.mrf.mxu0
      %v2762 = vadd.f32 0.0, %v2761
      %2763 = vmatmul.bf16.gmra.mxu0 %v2738
      %v2764 = vpop.f32.mrf.mxu0
      %v2765 = vadd.f32 0.0, %v2764
      %v2766 = vpop.f32.mrf.mxu0
      %v2767 = vadd.f32 0.0, %v2766
      %2768 = vdwg.mxu0
      %v2769 = vadd.f32 %v2656, %v2750
      %v2770 = vadd.f32 %v2658, %v2752
      %v2771 = vadd.f32 %v2661, %v2755
      %v2772 = vadd.f32 %v2663, %v2757
      %v2773 = vadd.f32 %v2666, %v2760
      %v2774 = vadd.f32 %v2668, %v2762
      %v2775 = vadd.f32 %v2671, %v2765
      %v2776 = vadd.f32 %v2673, %v2767
      %v2777 = vld [vmem:[%s2479] sm:$0xff]
      %v2778 = vld [vmem:[%s2479 + $0x10] sm:$0xff]
      %v2779 = vld [vmem:[%s2479 + $0x20] sm:$0xff]
      %v2780 = vld [vmem:[%s2479 + $0x30] sm:$0xff]
      %v2781 = vld [vmem:[%s2479 + $0x40] sm:$0xff]
      %v2782 = vld [vmem:[%s2479 + $0x50] sm:$0xff]
      %v2783 = vld [vmem:[%s2479 + $0x60] sm:$0xff]
      %v2784 = vld [vmem:[%s2479 + $0x70] sm:$0xff]
      %v2785 = vpack.c.bf16 %v2778, %v2777
      %v2786 = vpack.c.bf16 %v2780, %v2779
      %v2787 = vpack.c.bf16 %v2782, %v2781
      %v2788 = vpack.c.bf16 %v2784, %v2783
      %s2789 = scalar_lea.vmem %s5, 120
      %v2790 = vld [vmem:[%s2789] sm:$0xf]
      %v2791 = vld [vmem:[%s2789 + $0x4] sm:$0xf]
      %v2792 = vld [vmem:[%s2789 + $0x8] sm:$0xf]
      %v2793 = vld [vmem:[%s2789 + $0xc] sm:$0xf]
      %v2794 = vld [vmem:[%s2789 + $0x10] sm:$0xf]
      %v2795 = vld [vmem:[%s2789 + $0x14] sm:$0xf]
      %v2796 = vld [vmem:[%s2789 + $0x18] sm:$0xf]
      %v2797 = vld [vmem:[%s2789 + $0x1c] sm:$0xf]
      %v2798 = vld [vmem:[%s2789 + $0x20] sm:$0xf]
      %v2799 = vld [vmem:[%s2789 + $0x24] sm:$0xf]
      %v2810 = vunpack.c.l.b16 %v2790
      %v2811 = vunpack.c.l.b16 %v2791
      %v2812 = vunpack.c.l.b16 %v2792
      %v2813 = vunpack.c.l.b16 %v2793
      %v2814 = vunpack.c.l.b16 %v2794
      %v2815 = vunpack.c.l.b16 %v2795
      %v2816 = vunpack.c.l.b16 %v2796
      %v2817 = vunpack.c.l.b16 %v2797
      %v2818 = vunpack.c.l.b16 %v2798
      %v2819 = vunpack.c.l.b16 %v2799
      %v2820 = vpack.c.b16 %v2811, %v2810
      %v2821 = vpack.c.b16 %v2813, %v2812
      %v2822 = vpack.c.b16 %v2815, %v2814
      %v2823 = vpack.c.b16 %v2817, %v2816
      %v2824 = vpack.c.b16 %v2819, %v2818
      %v2831 = vsel %vm280, %v2785, 0
      %v2834 = vsel %vm280, %v2786, 0
      %v2837 = vsel %vm280, %v2787, 0
      %v2840 = vsel %vm280, %v2788, 0
      %2842 = vmatpush.bf16.msra.mxu0 0
      %2843 = vmatpush.bf16.msra.mxu0 0
      %2844 = vmatpush.bf16.msra.mxu0 0
      %2845 = vmatpush.bf16.msra.mxu0 %v2824
      %2846 = vmatpush.bf16.msra.mxu0 %v2823
      %2847 = vmatpush.bf16.msra.mxu0 %v2822
      %2848 = vmatpush.bf16.msra.mxu0 %v2821
      %2849 = vmatpush.bf16.msra.mxu0 %v2820
      %2850 = vmatmul.bf16.gmra.mxu0 %v2831
      %v2851 = vpop.f32.mrf.mxu0
      %v2852 = vadd.f32 0.0, %v2851
      %v2853 = vpop.f32.mrf.mxu0
      %v2854 = vadd.f32 0.0, %v2853
      %2855 = vmatmul.bf16.gmra.mxu0 %v2834
      %v2856 = vpop.f32.mrf.mxu0
      %v2857 = vadd.f32 0.0, %v2856
      %v2858 = vpop.f32.mrf.mxu0
      %v2859 = vadd.f32 0.0, %v2858
      %2860 = vmatmul.bf16.gmra.mxu0 %v2837
      %v2861 = vpop.f32.mrf.mxu0
      %v2862 = vadd.f32 0.0, %v2861
      %v2863 = vpop.f32.mrf.mxu0
      %v2864 = vadd.f32 0.0, %v2863
      %2865 = vmatmul.bf16.gmra.mxu0 %v2840
      %v2866 = vpop.f32.mrf.mxu0
      %v2867 = vadd.f32 0.0, %v2866
      %v2868 = vpop.f32.mrf.mxu0
      %v2869 = vadd.f32 0.0, %v2868
      %2870 = vdwg.mxu0
      %v2871 = vadd.f32 %v2769, %v2852
      %v2872 = vadd.f32 %v2770, %v2854
      %v2873 = vadd.f32 %v2771, %v2857
      %v2874 = vadd.f32 %v2772, %v2859
      %v2875 = vadd.f32 %v2773, %v2862
      %v2876 = vadd.f32 %v2774, %v2864
      %v2877 = vadd.f32 %v2775, %v2867
      %v2878 = vadd.f32 %v2776, %v2869
      %v2879 = vld [vmem:[%s2479 + $0x1] sm:$0xff]
      %v2880 = vld [vmem:[%s2479 + $0x11] sm:$0xff]
      %v2881 = vld [vmem:[%s2479 + $0x21] sm:$0xff]
      %v2882 = vld [vmem:[%s2479 + $0x31] sm:$0xff]
      %v2883 = vld [vmem:[%s2479 + $0x41] sm:$0xff]
      %v2884 = vld [vmem:[%s2479 + $0x51] sm:$0xff]
      %v2885 = vld [vmem:[%s2479 + $0x61] sm:$0xff]
      %v2886 = vld [vmem:[%s2479 + $0x71] sm:$0xff]
      %v2887 = vpack.c.bf16 %v2880, %v2879
      %v2888 = vpack.c.bf16 %v2882, %v2881
      %v2889 = vpack.c.bf16 %v2884, %v2883
      %v2890 = vpack.c.bf16 %v2886, %v2885
      %s2891 = scalar_lea.vmem %s5, 160
      %v2892 = vld [vmem:[%s2891] sm:$0xf]
      %v2893 = vld [vmem:[%s2891 + $0x4] sm:$0xf]
      %v2894 = vld [vmem:[%s2891 + $0x8] sm:$0xf]
      %v2895 = vld [vmem:[%s2891 + $0xc] sm:$0xf]
      %v2896 = vld [vmem:[%s2891 + $0x10] sm:$0xf]
      %v2897 = vld [vmem:[%s2891 + $0x14] sm:$0xf]
      %v2898 = vld [vmem:[%s2891 + $0x18] sm:$0xf]
      %v2899 = vld [vmem:[%s2891 + $0x1c] sm:$0xf]
      %v2900 = vld [vmem:[%s2891 + $0x20] sm:$0xf]
      %v2901 = vld [vmem:[%s2891 + $0x24] sm:$0xf]
      %v2912 = vunpack.c.l.b16 %v2892
      %v2913 = vunpack.c.l.b16 %v2893
      %v2914 = vunpack.c.l.b16 %v2894
      %v2915 = vunpack.c.l.b16 %v2895
      %v2916 = vunpack.c.l.b16 %v2896
      %v2917 = vunpack.c.l.b16 %v2897
      %v2918 = vunpack.c.l.b16 %v2898
      %v2919 = vunpack.c.l.b16 %v2899
      %v2920 = vunpack.c.l.b16 %v2900
      %v2921 = vunpack.c.l.b16 %v2901
      %v2922 = vpack.c.b16 %v2913, %v2912
      %v2923 = vpack.c.b16 %v2915, %v2914
      %v2924 = vpack.c.b16 %v2917, %v2916
      %v2925 = vpack.c.b16 %v2919, %v2918
      %v2926 = vpack.c.b16 %v2921, %v2920
      %v2933 = vsel %vm280, %v2887, 0
      %v2936 = vsel %vm280, %v2888, 0
      %v2939 = vsel %vm280, %v2889, 0
      %v2942 = vsel %vm280, %v2890, 0
      %2944 = vmatpush.bf16.msra.mxu0 0
      %2945 = vmatpush.bf16.msra.mxu0 0
      %2946 = vmatpush.bf16.msra.mxu0 0
      %2947 = vmatpush.bf16.msra.mxu0 %v2926
      %2948 = vmatpush.bf16.msra.mxu0 %v2925
      %2949 = vmatpush.bf16.msra.mxu0 %v2924
      %2950 = vmatpush.bf16.msra.mxu0 %v2923
      %2951 = vmatpush.bf16.msra.mxu0 %v2922
      %2952 = vmatmul.bf16.gmra.mxu0 %v2933
      %v2953 = vpop.f32.mrf.mxu0
      %v2954 = vadd.f32 0.0, %v2953
      %v2955 = vpop.f32.mrf.mxu0
      %v2956 = vadd.f32 0.0, %v2955
      %2957 = vmatmul.bf16.gmra.mxu0 %v2936
      %v2958 = vpop.f32.mrf.mxu0
      %v2959 = vadd.f32 0.0, %v2958
      %v2960 = vpop.f32.mrf.mxu0
      %v2961 = vadd.f32 0.0, %v2960
      %2962 = vmatmul.bf16.gmra.mxu0 %v2939
      %v2963 = vpop.f32.mrf.mxu0
      %v2964 = vadd.f32 0.0, %v2963
      %v2965 = vpop.f32.mrf.mxu0
      %v2966 = vadd.f32 0.0, %v2965
      %2967 = vmatmul.bf16.gmra.mxu0 %v2942
      %v2968 = vpop.f32.mrf.mxu0
      %v2969 = vadd.f32 0.0, %v2968
      %v2970 = vpop.f32.mrf.mxu0
      %v2971 = vadd.f32 0.0, %v2970
      %2972 = vdwg.mxu0
      %v2973 = vadd.f32 %v2871, %v2954
      %v2974 = vadd.f32 %v2872, %v2956
      %v2975 = vadd.f32 %v2873, %v2959
      %v2976 = vadd.f32 %v2874, %v2961
      %v2977 = vadd.f32 %v2875, %v2964
      %v2978 = vadd.f32 %v2876, %v2966
      %v2979 = vadd.f32 %v2877, %v2969
      %v2980 = vadd.f32 %v2878, %v2971
      %v2981 = vld [vmem:[%s2479 + $0x2] sm:$0xff]
      %v2982 = vld [vmem:[%s2479 + $0x12] sm:$0xff]
      %v2983 = vld [vmem:[%s2479 + $0x22] sm:$0xff]
      %v2984 = vld [vmem:[%s2479 + $0x32] sm:$0xff]
      %v2985 = vld [vmem:[%s2479 + $0x42] sm:$0xff]
      %v2986 = vld [vmem:[%s2479 + $0x52] sm:$0xff]
      %v2987 = vld [vmem:[%s2479 + $0x62] sm:$0xff]
      %v2988 = vld [vmem:[%s2479 + $0x72] sm:$0xff]
      %v2989 = vpack.c.bf16 %v2982, %v2981
      %v2990 = vpack.c.bf16 %v2984, %v2983
      %v2991 = vpack.c.bf16 %v2986, %v2985
      %v2992 = vpack.c.bf16 %v2988, %v2987
      %s2993 = scalar_lea.vmem %s5, 200
      %v2994 = vld [vmem:[%s2993] sm:$0xf]
      %v2995 = vld [vmem:[%s2993 + $0x4] sm:$0xf]
      %v2996 = vld [vmem:[%s2993 + $0x8] sm:$0xf]
      %v2997 = vld [vmem:[%s2993 + $0xc] sm:$0xf]
      %v2998 = vld [vmem:[%s2993 + $0x10] sm:$0xf]
      %v2999 = vld [vmem:[%s2993 + $0x14] sm:$0xf]
      %v3000 = vld [vmem:[%s2993 + $0x18] sm:$0xf]
      %v3001 = vld [vmem:[%s2993 + $0x1c] sm:$0xf]
      %v3002 = vld [vmem:[%s2993 + $0x20] sm:$0xf]
      %v3003 = vld [vmem:[%s2993 + $0x24] sm:$0xf]
      %v3014 = vunpack.c.l.b16 %v2994
      %v3015 = vunpack.c.l.b16 %v2995
      %v3016 = vunpack.c.l.b16 %v2996
      %v3017 = vunpack.c.l.b16 %v2997
      %v3018 = vunpack.c.l.b16 %v2998
      %v3019 = vunpack.c.l.b16 %v2999
      %v3020 = vunpack.c.l.b16 %v3000
      %v3021 = vunpack.c.l.b16 %v3001
      %v3022 = vunpack.c.l.b16 %v3002
      %v3023 = vunpack.c.l.b16 %v3003
      %v3024 = vpack.c.b16 %v3015, %v3014
      %v3025 = vpack.c.b16 %v3017, %v3016
      %v3026 = vpack.c.b16 %v3019, %v3018
      %v3027 = vpack.c.b16 %v3021, %v3020
      %v3028 = vpack.c.b16 %v3023, %v3022
      %v3035 = vsel %vm280, %v2989, 0
      %v3038 = vsel %vm280, %v2990, 0
      %v3041 = vsel %vm280, %v2991, 0
      %v3044 = vsel %vm280, %v2992, 0
      %3046 = vmatpush.bf16.msra.mxu0 0
      %3047 = vmatpush.bf16.msra.mxu0 0
      %3048 = vmatpush.bf16.msra.mxu0 0
      %3049 = vmatpush.bf16.msra.mxu0 %v3028
      %3050 = vmatpush.bf16.msra.mxu0 %v3027
      %3051 = vmatpush.bf16.msra.mxu0 %v3026
      %3052 = vmatpush.bf16.msra.mxu0 %v3025
      %3053 = vmatpush.bf16.msra.mxu0 %v3024
      %3054 = vmatmul.bf16.gmra.mxu0 %v3035
      %v3055 = vpop.f32.mrf.mxu0
      %v3056 = vadd.f32 0.0, %v3055
      %v3057 = vpop.f32.mrf.mxu0
      %v3058 = vadd.f32 0.0, %v3057
      %3059 = vmatmul.bf16.gmra.mxu0 %v3038
      %v3060 = vpop.f32.mrf.mxu0
      %v3061 = vadd.f32 0.0, %v3060
      %v3062 = vpop.f32.mrf.mxu0
      %v3063 = vadd.f32 0.0, %v3062
      %3064 = vmatmul.bf16.gmra.mxu0 %v3041
      %v3065 = vpop.f32.mrf.mxu0
      %v3066 = vadd.f32 0.0, %v3065
      %v3067 = vpop.f32.mrf.mxu0
      %v3068 = vadd.f32 0.0, %v3067
      %3069 = vmatmul.bf16.gmra.mxu0 %v3044
      %v3070 = vpop.f32.mrf.mxu0
      %v3071 = vadd.f32 0.0, %v3070
      %v3072 = vpop.f32.mrf.mxu0
      %v3073 = vadd.f32 0.0, %v3072
      %3074 = vdwg.mxu0
      %v3075 = vadd.f32 %v2973, %v3056
      %v3076 = vadd.f32 %v2974, %v3058
      %v3077 = vadd.f32 %v2975, %v3061
      %v3078 = vadd.f32 %v2976, %v3063
      %v3079 = vadd.f32 %v2977, %v3066
      %v3080 = vadd.f32 %v2978, %v3068
      %v3081 = vadd.f32 %v2979, %v3071
      %v3082 = vadd.f32 %v2980, %v3073
      %s3083 = scalar_lea.vmem [#allocation3], 32
      %v3084 = vld [vmem:[%s3083] sm:$0xff]
      %v3085 = vld [vmem:[%s3083 + $0x10] sm:$0xff]
      %v3086 = vld [vmem:[%s3083 + $0x20] sm:$0xff]
      %v3087 = vld [vmem:[%s3083 + $0x30] sm:$0xff]
      %v3088 = vld [vmem:[%s3083 + $0x40] sm:$0xff]
      %v3089 = vld [vmem:[%s3083 + $0x50] sm:$0xff]
      %v3090 = vld [vmem:[%s3083 + $0x60] sm:$0xff]
      %v3091 = vld [vmem:[%s3083 + $0x70] sm:$0xff]
      %v3092 = vpack.c.bf16 %v3085, %v3084
      %v3093 = vpack.c.bf16 %v3087, %v3086
      %v3094 = vpack.c.bf16 %v3089, %v3088
      %v3095 = vpack.c.bf16 %v3091, %v3090
      %s3096 = scalar_lea.vmem %s5, 240
      %v3097 = vld [vmem:[%s3096] sm:$0xf]
      %v3098 = vld [vmem:[%s3096 + $0x4] sm:$0xf]
      %v3099 = vld [vmem:[%s3096 + $0x8] sm:$0xf]
      %v3100 = vld [vmem:[%s3096 + $0xc] sm:$0xf]
      %v3101 = vld [vmem:[%s3096 + $0x10] sm:$0xf]
      %v3102 = vld [vmem:[%s3096 + $0x14] sm:$0xf]
      %v3103 = vld [vmem:[%s3096 + $0x18] sm:$0xf]
      %v3104 = vld [vmem:[%s3096 + $0x1c] sm:$0xf]
      %v3105 = vld [vmem:[%s3096 + $0x20] sm:$0xf]
      %v3106 = vld [vmem:[%s3096 + $0x24] sm:$0xf]
      %v3117 = vunpack.c.l.b16 %v3097
      %v3118 = vunpack.c.l.b16 %v3098
      %v3119 = vunpack.c.l.b16 %v3099
      %v3120 = vunpack.c.l.b16 %v3100
      %v3121 = vunpack.c.l.b16 %v3101
      %v3122 = vunpack.c.l.b16 %v3102
      %v3123 = vunpack.c.l.b16 %v3103
      %v3124 = vunpack.c.l.b16 %v3104
      %v3125 = vunpack.c.l.b16 %v3105
      %v3126 = vunpack.c.l.b16 %v3106
      %v3127 = vpack.c.b16 %v3118, %v3117
      %v3128 = vpack.c.b16 %v3120, %v3119
      %v3129 = vpack.c.b16 %v3122, %v3121
      %v3130 = vpack.c.b16 %v3124, %v3123
      %v3131 = vpack.c.b16 %v3126, %v3125
      %v3138 = vsel %vm280, %v3092, 0
      %v3141 = vsel %vm280, %v3093, 0
      %v3144 = vsel %vm280, %v3094, 0
      %v3147 = vsel %vm280, %v3095, 0
      %3149 = vmatpush.bf16.msra.mxu0 0
      %3150 = vmatpush.bf16.msra.mxu0 0
      %3151 = vmatpush.bf16.msra.mxu0 0
      %3152 = vmatpush.bf16.msra.mxu0 %v3131
      %3153 = vmatpush.bf16.msra.mxu0 %v3130
      %3154 = vmatpush.bf16.msra.mxu0 %v3129
      %3155 = vmatpush.bf16.msra.mxu0 %v3128
      %3156 = vmatpush.bf16.msra.mxu0 %v3127
      %3157 = vmatmul.bf16.gmra.mxu0 %v3138
      %v3158 = vpop.f32.mrf.mxu0
      %v3159 = vadd.f32 0.0, %v3158
      %v3160 = vpop.f32.mrf.mxu0
      %v3161 = vadd.f32 0.0, %v3160
      %3162 = vmatmul.bf16.gmra.mxu0 %v3141
      %v3163 = vpop.f32.mrf.mxu0
      %v3164 = vadd.f32 0.0, %v3163
      %v3165 = vpop.f32.mrf.mxu0
      %v3166 = vadd.f32 0.0, %v3165
      %3167 = vmatmul.bf16.gmra.mxu0 %v3144
      %v3168 = vpop.f32.mrf.mxu0
      %v3169 = vadd.f32 0.0, %v3168
      %v3170 = vpop.f32.mrf.mxu0
      %v3171 = vadd.f32 0.0, %v3170
      %3172 = vmatmul.bf16.gmra.mxu0 %v3147
      %v3173 = vpop.f32.mrf.mxu0
      %v3174 = vadd.f32 0.0, %v3173
      %v3175 = vpop.f32.mrf.mxu0
      %v3176 = vadd.f32 0.0, %v3175
      %3177 = vdwg.mxu0
      %v3178 = vadd.f32 %v3075, %v3159
      %v3179 = vadd.f32 %v3076, %v3161
      %v3180 = vadd.f32 %v3077, %v3164
      %v3181 = vadd.f32 %v3078, %v3166
      %v3182 = vadd.f32 %v3079, %v3169
      %v3183 = vadd.f32 %v3080, %v3171
      %v3184 = vadd.f32 %v3081, %v3174
      %v3185 = vadd.f32 %v3082, %v3176
      %v3186 = vld [vmem:[%s3083 + $0x1] sm:$0xff]
      %v3187 = vld [vmem:[%s3083 + $0x11] sm:$0xff]
      %v3188 = vld [vmem:[%s3083 + $0x21] sm:$0xff]
      %v3189 = vld [vmem:[%s3083 + $0x31] sm:$0xff]
      %v3190 = vld [vmem:[%s3083 + $0x41] sm:$0xff]
      %v3191 = vld [vmem:[%s3083 + $0x51] sm:$0xff]
      %v3192 = vld [vmem:[%s3083 + $0x61] sm:$0xff]
      %v3193 = vld [vmem:[%s3083 + $0x71] sm:$0xff]
      %v3194 = vpack.c.bf16 %v3187, %v3186
      %v3195 = vpack.c.bf16 %v3189, %v3188
      %v3196 = vpack.c.bf16 %v3191, %v3190
      %v3197 = vpack.c.bf16 %v3193, %v3192
      %s3198 = scalar_lea.vmem %s5, 280
      %v3199 = vld [vmem:[%s3198] sm:$0xf]
      %v3200 = vld [vmem:[%s3198 + $0x4] sm:$0xf]
      %v3201 = vld [vmem:[%s3198 + $0x8] sm:$0xf]
      %v3202 = vld [vmem:[%s3198 + $0xc] sm:$0xf]
      %v3203 = vld [vmem:[%s3198 + $0x10] sm:$0xf]
      %v3204 = vld [vmem:[%s3198 + $0x14] sm:$0xf]
      %v3205 = vld [vmem:[%s3198 + $0x18] sm:$0xf]
      %v3206 = vld [vmem:[%s3198 + $0x1c] sm:$0xf]
      %v3207 = vld [vmem:[%s3198 + $0x20] sm:$0xf]
      %v3208 = vld [vmem:[%s3198 + $0x24] sm:$0xf]
      %v3219 = vunpack.c.l.b16 %v3199
      %v3220 = vunpack.c.l.b16 %v3200
      %v3221 = vunpack.c.l.b16 %v3201
      %v3222 = vunpack.c.l.b16 %v3202
      %v3223 = vunpack.c.l.b16 %v3203
      %v3224 = vunpack.c.l.b16 %v3204
      %v3225 = vunpack.c.l.b16 %v3205
      %v3226 = vunpack.c.l.b16 %v3206
      %v3227 = vunpack.c.l.b16 %v3207
      %v3228 = vunpack.c.l.b16 %v3208
      %v3229 = vpack.c.b16 %v3220, %v3219
      %v3230 = vpack.c.b16 %v3222, %v3221
      %v3231 = vpack.c.b16 %v3224, %v3223
      %v3232 = vpack.c.b16 %v3226, %v3225
      %v3233 = vpack.c.b16 %v3228, %v3227
      %v3240 = vsel %vm280, %v3194, 0
      %v3243 = vsel %vm280, %v3195, 0
      %v3246 = vsel %vm280, %v3196, 0
      %v3249 = vsel %vm280, %v3197, 0
      %3251 = vmatpush.bf16.msra.mxu0 0
      %3252 = vmatpush.bf16.msra.mxu0 0
      %3253 = vmatpush.bf16.msra.mxu0 0
      %3254 = vmatpush.bf16.msra.mxu0 %v3233
      %3255 = vmatpush.bf16.msra.mxu0 %v3232
      %3256 = vmatpush.bf16.msra.mxu0 %v3231
      %3257 = vmatpush.bf16.msra.mxu0 %v3230
      %3258 = vmatpush.bf16.msra.mxu0 %v3229
      %3259 = vmatmul.bf16.gmra.mxu0 %v3240
      %v3260 = vpop.f32.mrf.mxu0
      %v3261 = vadd.f32 0.0, %v3260
      %v3262 = vpop.f32.mrf.mxu0
      %v3263 = vadd.f32 0.0, %v3262
      %3264 = vmatmul.bf16.gmra.mxu0 %v3243
      %v3265 = vpop.f32.mrf.mxu0
      %v3266 = vadd.f32 0.0, %v3265
      %v3267 = vpop.f32.mrf.mxu0
      %v3268 = vadd.f32 0.0, %v3267
      %3269 = vmatmul.bf16.gmra.mxu0 %v3246
      %v3270 = vpop.f32.mrf.mxu0
      %v3271 = vadd.f32 0.0, %v3270
      %v3272 = vpop.f32.mrf.mxu0
      %v3273 = vadd.f32 0.0, %v3272
      %3274 = vmatmul.bf16.gmra.mxu0 %v3249
      %v3275 = vpop.f32.mrf.mxu0
      %v3276 = vadd.f32 0.0, %v3275
      %v3277 = vpop.f32.mrf.mxu0
      %v3278 = vadd.f32 0.0, %v3277
      %3279 = vdwg.mxu0
      %v3280 = vadd.f32 %v3178, %v3261
      %v3281 = vadd.f32 %v3179, %v3263
      %v3282 = vadd.f32 %v3180, %v3266
      %v3283 = vadd.f32 %v3181, %v3268
      %v3284 = vadd.f32 %v3182, %v3271
      %v3285 = vadd.f32 %v3183, %v3273
      %v3286 = vadd.f32 %v3184, %v3276
      %v3287 = vadd.f32 %v3185, %v3278
      %v3288 = vld [vmem:[%s3083 + $0x2] sm:$0xff]
      %v3289 = vld [vmem:[%s3083 + $0x12] sm:$0xff]
      %v3290 = vld [vmem:[%s3083 + $0x22] sm:$0xff]
      %v3291 = vld [vmem:[%s3083 + $0x32] sm:$0xff]
      %v3292 = vld [vmem:[%s3083 + $0x42] sm:$0xff]
      %v3293 = vld [vmem:[%s3083 + $0x52] sm:$0xff]
      %v3294 = vld [vmem:[%s3083 + $0x62] sm:$0xff]
      %v3295 = vld [vmem:[%s3083 + $0x72] sm:$0xff]
      %v3296 = vpack.c.bf16 %v3289, %v3288
      %v3297 = vpack.c.bf16 %v3291, %v3290
      %v3298 = vpack.c.bf16 %v3293, %v3292
      %v3299 = vpack.c.bf16 %v3295, %v3294
      %s3300 = scalar_lea.vmem %s5, 320
      %v3301 = vld [vmem:[%s3300] sm:$0xf]
      %v3302 = vld [vmem:[%s3300 + $0x4] sm:$0xf]
      %v3303 = vld [vmem:[%s3300 + $0x8] sm:$0xf]
      %v3304 = vld [vmem:[%s3300 + $0xc] sm:$0xf]
      %v3305 = vld [vmem:[%s3300 + $0x10] sm:$0xf]
      %v3306 = vld [vmem:[%s3300 + $0x14] sm:$0xf]
      %v3307 = vld [vmem:[%s3300 + $0x18] sm:$0xf]
      %v3308 = vld [vmem:[%s3300 + $0x1c] sm:$0xf]
      %v3309 = vld [vmem:[%s3300 + $0x20] sm:$0xf]
      %v3310 = vld [vmem:[%s3300 + $0x24] sm:$0xf]
      %v3321 = vunpack.c.l.b16 %v3301
      %v3322 = vunpack.c.l.b16 %v3302
      %v3323 = vunpack.c.l.b16 %v3303
      %v3324 = vunpack.c.l.b16 %v3304
      %v3325 = vunpack.c.l.b16 %v3305
      %v3326 = vunpack.c.l.b16 %v3306
      %v3327 = vunpack.c.l.b16 %v3307
      %v3328 = vunpack.c.l.b16 %v3308
      %v3329 = vunpack.c.l.b16 %v3309
      %v3330 = vunpack.c.l.b16 %v3310
      %v3331 = vpack.c.b16 %v3322, %v3321
      %v3332 = vpack.c.b16 %v3324, %v3323
      %v3333 = vpack.c.b16 %v3326, %v3325
      %v3334 = vpack.c.b16 %v3328, %v3327
      %v3335 = vpack.c.b16 %v3330, %v3329
      %v3342 = vsel %vm280, %v3296, 0
      %v3345 = vsel %vm280, %v3297, 0
      %v3348 = vsel %vm280, %v3298, 0
      %v3351 = vsel %vm280, %v3299, 0
      %3353 = vmatpush.bf16.msra.mxu0 0
      %3354 = vmatpush.bf16.msra.mxu0 0
      %3355 = vmatpush.bf16.msra.mxu0 0
      %3356 = vmatpush.bf16.msra.mxu0 %v3335
      %3357 = vmatpush.bf16.msra.mxu0 %v3334
      %3358 = vmatpush.bf16.msra.mxu0 %v3333
      %3359 = vmatpush.bf16.msra.mxu0 %v3332
      %3360 = vmatpush.bf16.msra.mxu0 %v3331
      %3361 = vmatmul.bf16.gmra.mxu0 %v3342
      %v3362 = vpop.f32.mrf.mxu0
      %v3363 = vadd.f32 0.0, %v3362
      %v3364 = vpop.f32.mrf.mxu0
      %v3365 = vadd.f32 0.0, %v3364
      %3366 = vmatmul.bf16.gmra.mxu0 %v3345
      %v3367 = vpop.f32.mrf.mxu0
      %v3368 = vadd.f32 0.0, %v3367
      %v3369 = vpop.f32.mrf.mxu0
      %v3370 = vadd.f32 0.0, %v3369
      %3371 = vmatmul.bf16.gmra.mxu0 %v3348
      %v3372 = vpop.f32.mrf.mxu0
      %v3373 = vadd.f32 0.0, %v3372
      %v3374 = vpop.f32.mrf.mxu0
      %v3375 = vadd.f32 0.0, %v3374
      %3376 = vmatmul.bf16.gmra.mxu0 %v3351
      %v3377 = vpop.f32.mrf.mxu0
      %v3378 = vadd.f32 0.0, %v3377
      %v3379 = vpop.f32.mrf.mxu0
      %v3380 = vadd.f32 0.0, %v3379
      %3381 = vdwg.mxu0
      %v3382 = vadd.f32 %v3280, %v3363
      %v3383 = vadd.f32 %v3281, %v3365
      %v3384 = vadd.f32 %v3282, %v3368
      %v3385 = vadd.f32 %v3283, %v3370
      %v3386 = vadd.f32 %v3284, %v3373
      %v3387 = vadd.f32 %v3285, %v3375
      %v3388 = vadd.f32 %v3286, %v3378
      %v3389 = vadd.f32 %v3287, %v3380
      %v3390 = vld [vmem:[%s6] sm:$0x1]
      %v3392 = vperm.slane %v3390, 0
      %v3394 = vadd.f32 %v3382, %v3392
      %v3395 = vadd.f32 %v3383, %v3392
      %v3396 = vadd.f32 %v3384, %v3392
      %v3397 = vadd.f32 %v3385, %v3392
      %v3398 = vadd.f32 %v3386, %v3392
      %v3399 = vadd.f32 %v3387, %v3392
      %v3400 = vadd.f32 %v3388, %v3392
      %v3401 = vadd.f32 %v3389, %v3392
      %v3402 = vmax.f32 %v3394, 0.0
      %v3403 = vmax.f32 %v3395, 0.0
      %v3404 = vmax.f32 %v3396, 0.0
      %v3405 = vmax.f32 %v3397, 0.0
      %v3406 = vmax.f32 %v3398, 0.0
      %v3407 = vmax.f32 %v3399, 0.0
      %v3408 = vmax.f32 %v3400, 0.0
      %v3409 = vmax.f32 %v3401, 0.0
      %vm3410 = vcmask 523264
      %3411 = vst.msk [vmem:[%s278] sm:$0xff] %vm3410, %v3402
      %3412 = vst.msk [vmem:[%s278 + $0x8] sm:$0xff] %vm3410, %v3403
      %3413 = vst.msk [vmem:[%s278 + $0x10] sm:$0xff] %vm3410, %v3404
      %3414 = vst.msk [vmem:[%s278 + $0x18] sm:$0xff] %vm3410, %v3405
      %3415 = vst.msk [vmem:[%s278 + $0x20] sm:$0xff] %vm3410, %v3406
      %3416 = vst.msk [vmem:[%s278 + $0x28] sm:$0xff] %vm3410, %v3407
      %3417 = vst.msk [vmem:[%s278 + $0x30] sm:$0xff] %vm3410, %v3408
      %3418 = vst.msk [vmem:[%s278 + $0x38] sm:$0xff] %vm3410, %v3409
      %p3419 = scmp.lt.s32.totalorder %s18, 1
      %s3420 = scalar_select %p3419, %s18, 1
      %s3421 = smul.addr %s3420, 8
      %s3422 = smul.addr %s3421, 8
      %s3423 = scalar_lea.vmem %s7, %s3422
      // Predicated region
      $region49: #{decoder_layer_forward.1} parent=47 // pred_check
        %p3424 = pneg %p188
      $region50: #{decoder_layer_forward.1} parent=47 // pred_check_branch
        %3426 = sbr.rel (%p3424) target = $region52
      $region51: #{decoder_layer_forward.1} parent=47 // pred_region
        _
      $region52: #{decoder_layer_forward.1} parent=47 // pred_fallthru
        _
    $region48: #{decoder_layer_forward.1} parent=5 // pred_fallthru
      _
    %p3427 = scmp.le.s32.totalorder 2, %s13
    // Predicated region
    $region53: #{decoder_layer_forward.1} parent=5 // pred_check
      %p3428 = pneg %p3427
    $region54: #{decoder_layer_forward.1} parent=5 // pred_check_branch
      %3430 = sbr.rel (%p3428) target = $region56
    $region55: #{decoder_layer_forward.1} parent=5 // pred_region
      %s3431 = ssub.s32 %s13, 2
      // Predicated region
      $region57: #{decoder_layer_forward.1} parent=55 // pred_check
        %p3432 = pneg %p194
      $region58: #{decoder_layer_forward.1} parent=55 // pred_check_branch
        %3434 = sbr.rel (%p3432) target = $region60
      $region59: #{decoder_layer_forward.1} parent=55 // pred_region
        %p3435 = scmp.lt.s32.totalorder %s19, 1
        %s3436 = scalar_select %p3435, %s19, 1
        %s3437 = smul.addr %s3436, 8
        %s3438 = smul.addr %s3437, 8
        %s3439 = scalar_lea.vmem %s7, %s3438
      $region60: #{decoder_layer_forward.1} parent=55 // pred_fallthru
        _
    $region56: #{decoder_layer_forward.1} parent=5 // pred_fallthru
      _
  $region6: #{decoder_layer_forward.1} parent=0 // loop_footer
    %s17 = sadd.s32 1, %s13
  $region7: #{decoder_layer_forward.1} parent=0 // loop_footer_branch
    %12 = sbr.rel target = $region3
  $region8: #{decoder_layer_forward.1} parent=0 // loop_exit
    _

</llo_original>
